<compile_context>
chip_gen: v7x
topology: tpu7x:2x2x1
jax: 0.10.0
libtpu: 0.0.40
codegen_flags: <defaults>
</compile_context>

<pallas_src>
import jax
import jax.numpy as jnp
from jax.experimental import pallas as pl
from jax.experimental.pallas import tpu as pltpu

# ----------------------------- model constants ------------------------------
N_BATCH = 2
C_IN, C1, C2 = 4, 8, 16
KSIZE = 3
H0 = 16                 # input spatial size
H1 = H0 // 2            # 8  (after conv1, stride 2, pad 1)
H2 = H1 // 2            # 4  (after conv2)
HB = H1 // 2            # 4  parity-block side of conv1's output
PG = HB + 1             # 5  padded phase-grid side used as conv2's input
S2 = H2 * H2            # 16 spatial positions after conv2
HIDDEN = 32
ACT_DIM = 6
ACTION_BOUND = 2.0
SCRATCH_ROWS = 2 * 2 * PG * PG * N_BATCH   # 200: (row-phase, col-phase, i, j, n)


# ------------------------------- Pallas kernel ------------------------------
def _gaussian_actor_kernel(a1_ref, w1_ref, b1_ref, w2_ref, b2_ref,
                           wl_ref, bl_ref, wmu_ref, bmu_ref,
                           wsig_ref, bsig_ref, eps_ref,
                           act_ref, y1s_ref):
    f32 = jnp.float32

    # Zero the padded phase-decomposed scratch (provides conv2's zero padding).
    # Layout: row = ((a*2 + b)*PG*PG + i*PG + j)*N + n  holds  Y1[n, 2i+a-1, 2j+b-1].
    y1s_ref[...] = jnp.zeros_like(y1s_ref)

    w1 = w1_ref[...]                      # (9*C_IN, C1)
    b1 = b1_ref[...]                      # (1, C1)

    # ---- conv1 + ReLU: one matmul per output-parity block (p, q) --------------
    # a1_ref[p*2+q] is the (HB*HB*N, 9*C_IN) patch block, rows ordered (m, t, n),
    # holding conv1 output positions (h, w) = (2m+p, 2t+q).
    for p in range(2):
        for q in range(2):
            blk = jnp.dot(a1_ref[p * 2 + q], w1, preferred_element_type=f32) + b1
            blk = jnp.maximum(blk, 0.0)                       # (HB*HB*N, C1)
            a = 1 - p                                         # scratch row-phase
            b = 1 - q                                         # scratch col-phase
            for m in range(HB):
                i = m + p
                dst = ((a * 2 + b) * PG * PG + i * PG + q) * N_BATCH
                y1s_ref[dst:dst + HB * N_BATCH, :] = \
                    blk[m * HB * N_BATCH:(m + 1) * HB * N_BATCH, :]

    b2 = b2_ref[...]                      # (1, C2)
    bl = bl_ref[...]                      # (1, HIDDEN)

    # ---- conv2 + ReLU + (flatten) + Linear + ReLU, chunked by output row ho2 --
    hidden = jnp.zeros((N_BATCH, HIDDEN), f32)
    for ho2 in range(H2):
        acc = jnp.zeros((H2 * N_BATCH, C2), f32)              # rows (wo2, n)
        for kh in range(KSIZE):
            a = 1 if kh == 1 else 0
            ih = 1 if kh == 2 else 0
            for kw in range(KSIZE):
                b = 1 if kw == 1 else 0
                jw = 1 if kw == 2 else 0
                src = ((a * 2 + b) * PG * PG + (ho2 + ih) * PG + jw) * N_BATCH
                tap = y1s_ref[src:src + H2 * N_BATCH, :]      # (H2*N, C1), unit stride
                acc = acc + jnp.dot(tap, w2_ref[kh * KSIZE + kw],
                                    preferred_element_type=f32)
        y2 = jnp.maximum(acc + b2, 0.0)                       # (H2*N, C2)
        # torch NCHW Flatten is folded into wl: hidden += y2[rows of s] @ wl[s]
        for wo2 in range(H2):
            s = ho2 * H2 + wo2
            hidden = hidden + jnp.dot(
                y2[wo2 * N_BATCH:(wo2 + 1) * N_BATCH, :], wl_ref[s],
                preferred_element_type=f32)
    hidden = jnp.maximum(hidden + bl, 0.0)                    # (N, HIDDEN)

    # ---- Gaussian actor head: mu, state-dependent log_sigma, rsample, tanh bound
    mus = jnp.dot(hidden, wmu_ref[...], preferred_element_type=f32) + bmu_ref[...]
    log_sig = jnp.dot(hidden, wsig_ref[...], preferred_element_type=f32) + bsig_ref[...]
    sig = jnp.exp(jnp.clip(log_sig, -20.0, 2.0))
    actions = mus + sig * eps_ref[...]                        # eps == 0 -> deterministic
    act_ref[...] = ACTION_BOUND * jnp.tanh(actions)


# ------------------------------ wrapper (jitted) -----------------------------
def _conv1_patch_blocks(x_nchw):
    """(N, C_IN, H0, H0) -> (4, HB*HB*N, 9*C_IN) parity-ordered im2col of the raw input."""
    n = x_nchw.shape[0]
    x = jnp.transpose(x_nchw, (0, 2, 3, 1)).astype(jnp.float32)       # NHWC
    xp = jnp.pad(x, ((0, 0), (1, 3), (1, 3), (0, 0)))                 # (N, 20, 20, C_IN)
    blocks = []
    for p in range(2):
        for q in range(2):
            taps = []
            for kh in range(KSIZE):
                for kw in range(KSIZE):
                    r0 = 2 * p + kh                                   # rows 4m + 2p + kh
                    c0 = 2 * q + kw                                   # cols 4t + 2q + kw
                    sub = xp[:, r0:r0 + 4 * (HB - 1) + 1:4,
                                c0:c0 + 4 * (HB - 1) + 1:4, :]        # (N, HB, HB, C_IN)
                    taps.append(sub)
            t = jnp.stack(taps, axis=0)                               # (9, N, HB, HB, C_IN)
            blk = t.transpose(2, 3, 1, 0, 4).reshape(HB * HB * n, 9 * C_IN)
            blocks.append(blk)
    return jnp.stack(blocks, axis=0)                                  # (4, HB*HB*N, 9*C_IN)


@jax.jit
def gaussian_actor_forward(x_nchw, pp, eps):
    n = x_nchw.shape[0]
    a1 = _conv1_patch_blocks(x_nchw)
    return pl.pallas_call(
        _gaussian_actor_kernel,
        out_shape=jax.ShapeDtypeStruct((n, ACT_DIM), jnp.float32),
        in_specs=[pl.BlockSpec(memory_space=pltpu.MemorySpace.VMEM)] * 12,
        out_specs=pl.BlockSpec(memory_space=pltpu.MemorySpace.VMEM),
        scratch_shapes=[pltpu.VMEM((SCRATCH_ROWS, C1), jnp.float32)],
    )(a1, pp["w1c"], pp["b1"], pp["w2t"], pp["b2"], pp["wl2"], pp["bl"],
      pp["wmu"], pp["bmu"], pp["wsig"], pp["bsig"], eps)


# --------------------------- parameters (torch layout) -----------------------
def init_raw_params(key):
    ks = jax.random.split(key, 9)
    w1 = jax.random.normal(ks[0], (C1, C_IN, KSIZE, KSIZE), jnp.float32) * 0.1
    b1 = jax.random.normal(ks[1], (C1,), jnp.float32) * 0.1
    w2 = jax.random.normal(ks[2], (C2, C1, KSIZE, KSIZE), jnp.float32) * 0.1
    b2 = jax.random.normal(ks[3], (C2,), jnp.float32) * 0.1
    wl = jax.random.normal(ks[4], (HIDDEN, C2 * S2), jnp.float32) * 0.05
    bl = jax.random.normal(ks[5], (HIDDEN,), jnp.float32) * 0.05
    wmu = jax.random.normal(ks[6], (ACT_DIM, HIDDEN), jnp.float32) * 0.01
    bmu = jnp.zeros((ACT_DIM,), jnp.float32)
    wsig = jax.random.normal(ks[7], (ACT_DIM, HIDDEN), jnp.float32) * 0.05
    bsig = jax.random.normal(ks[8], (ACT_DIM,), jnp.float32) * 0.05
    return dict(w1=w1, b1=b1, w2=w2, b2=b2, wl=wl, bl=bl,
                wmu=wmu, bmu=bmu, wsig=wsig, bsig=bsig)


def preprocess_params(raw):
    """One-time weight permutations (hoisted out of the per-step path)."""
    w1c = raw["w1"].transpose(2, 3, 1, 0).reshape(KSIZE * KSIZE * C_IN, C1)
    w2t = raw["w2"].transpose(2, 3, 1, 0).reshape(KSIZE * KSIZE, C1, C2)
    wl2 = raw["wl"].reshape(HIDDEN, C2, S2).transpose(2, 1, 0)   # torch flatten f = c*S2+s
    return dict(
        w1c=w1c, b1=raw["b1"].reshape(1, C1),
        w2t=w2t, b2=raw["b2"].reshape(1, C2),
        wl2=wl2, bl=raw["bl"].reshape(1, HIDDEN),
        wmu=raw["wmu"].T, bmu=raw["bmu"].reshape(1, ACT_DIM),
        wsig=raw["wsig"].T, bsig=raw["bsig"].reshape(1, ACT_DIM),
    )


# ------------------------------ pure-JAX reference ---------------------------
def reference_forward(x, raw, eps):
    hp = jax.lax.Precision.HIGHEST
    h = x
    for w, b in ((raw["w1"], raw["b1"]), (raw["w2"], raw["b2"])):
        h = jax.lax.conv_general_dilated(
            h, w, (2, 2), [(1, 1), (1, 1)],
            dimension_numbers=("NCHW", "OIHW", "NCHW"), precision=hp)
        h = jnp.maximum(h + b.reshape(1, -1, 1, 1), 0.0)
    flat = h.reshape(h.shape[0], -1)
    hidden = jnp.maximum(jnp.dot(flat, raw["wl"].T, precision=hp) + raw["bl"], 0.0)
    mus = jnp.dot(hidden, raw["wmu"].T, precision=hp) + raw["bmu"]
    log_sig = jnp.dot(hidden, raw["wsig"].T, precision=hp) + raw["bsig"]
    sig = jnp.exp(jnp.clip(log_sig, -20.0, 2.0))
    return ACTION_BOUND * jnp.tanh(mus + sig * eps)


# ------------------------------------ main ------------------------------------
if __name__ == "__main__":
    key = jax.random.PRNGKey(0)
    kx, kp, ke = jax.random.split(key, 3)
    x = jax.random.normal(kx, (N_BATCH, C_IN, H0, H0), jnp.float32)
    raw = init_raw_params(kp)
    pp = preprocess_params(raw)
    eps = jax.random.normal(ke, (N_BATCH, ACT_DIM), jnp.float32)   # rsample noise

    actions = jax.block_until_ready(gaussian_actor_forward(x, pp, eps))
    assert actions.shape == (N_BATCH, ACT_DIM), actions.shape

    ref = jax.block_until_ready(reference_forward(x, raw, eps))
    max_err = float(jnp.max(jnp.abs(actions - ref)))
    assert jnp.allclose(actions, ref, atol=1e-3, rtol=1e-3), max_err

    print("KERNEL_OK")
</pallas_src>

<mosaic_0001>
module attributes {stable_mosaic.version = 11 : i64} {
  func.func @_gaussian_actor_kernel(%arg0: memref<4x32x36xf32, #tpu.memory_space<vmem>>, %arg1: memref<36x8xf32, #tpu.memory_space<vmem>>, %arg2: memref<1x8xf32, #tpu.memory_space<vmem>>, %arg3: memref<9x8x16xf32, #tpu.memory_space<vmem>>, %arg4: memref<1x16xf32, #tpu.memory_space<vmem>>, %arg5: memref<16x16x32xf32, #tpu.memory_space<vmem>>, %arg6: memref<1x32xf32, #tpu.memory_space<vmem>>, %arg7: memref<32x6xf32, #tpu.memory_space<vmem>>, %arg8: memref<1x6xf32, #tpu.memory_space<vmem>>, %arg9: memref<32x6xf32, #tpu.memory_space<vmem>>, %arg10: memref<1x6xf32, #tpu.memory_space<vmem>>, %arg11: memref<2x6xf32, #tpu.memory_space<vmem>>, %arg12: memref<2x6xf32, #tpu.memory_space<vmem>>, %arg13: memref<200x8xf32, #tpu.memory_space<vmem>>) attributes {dimension_semantics = [], scalar_prefetch = 0 : i64, scratch_operands = 1 : i64, tpu.core_type = #tpu.core_type<tc>} {
    %cst = arith.constant 0.000000e+00 : f32
    %0 = vector.broadcast %cst : f32 to vector<200x8xf32>
    %c0 = arith.constant 0 : index
    %c0_0 = arith.constant 0 : index
    %1 = vector.load %arg13[%c0, %c0_0] : memref<200x8xf32, #tpu.memory_space<vmem>>, vector<200x8xf32>
    tpu.vector_store %arg13[%c0, %c0_0], %0 {strides = array<i32>} : memref<200x8xf32, #tpu.memory_space<vmem>>, vector<200x8xf32>,
    %c0_1 = arith.constant 0 : index
    %c0_2 = arith.constant 0 : index
    %2 = vector.load %arg1[%c0_1, %c0_2] : memref<36x8xf32, #tpu.memory_space<vmem>>, vector<36x8xf32>
    %c0_3 = arith.constant 0 : index
    %c0_4 = arith.constant 0 : index
    %3 = vector.load %arg2[%c0_3, %c0_4] : memref<1x8xf32, #tpu.memory_space<vmem>>, vector<1x8xf32>
    %c0_5 = arith.constant 0 : index
    %c0_6 = arith.constant 0 : index
    %c0_7 = arith.constant 0 : index
    %4 = vector.load %arg0[%c0_5, %c0_6, %c0_7] : memref<4x32x36xf32, #tpu.memory_space<vmem>>, vector<1x32x36xf32>
    %5 = vector.shape_cast %4 : vector<1x32x36xf32> to vector<32x36xf32>
    %cst_8 = arith.constant dense<0.000000e+00> : vector<32x8xf32>
    %6 = tpu.matmul %5, %2, %cst_8 {dimension_numbers = #tpu.dot_dimension_numbers<[1], [0], [0], [1], [0, 0, 1, 1], [], []>} : vector<32x36xf32>, vector<36x8xf32>, vector<32x8xf32> -> vector<32x8xf32>
    %7 = vector.broadcast %3 : vector<1x8xf32> to vector<32x8xf32>
    %8 = arith.addf %6, %7 : vector<32x8xf32>
    %cst_9 = arith.constant 0.000000e+00 : f32
    %9 = vector.broadcast %cst_9 : f32 to vector<32x8xf32>
    %10 = arith.maximumf %8, %9 : vector<32x8xf32>
    %11 = vector.extract_strided_slice %10 {offsets = [0, 0], sizes = [8, 8], strides = [1, 1]} : vector<32x8xf32> to vector<8x8xf32>
    %c150 = arith.constant 150 : index
    %c0_10 = arith.constant 0 : index
    %12 = vector.load %arg13[%c150, %c0_10] : memref<200x8xf32, #tpu.memory_space<vmem>>, vector<8x8xf32>
    tpu.vector_store %arg13[%c150, %c0_10], %11 {strides = array<i32>} : memref<200x8xf32, #tpu.memory_space<vmem>>, vector<8x8xf32>,
    %13 = vector.extract_strided_slice %10 {offsets = [8, 0], sizes = [8, 8], strides = [1, 1]} : vector<32x8xf32> to vector<8x8xf32>
    %c160 = arith.constant 160 : index
    %c0_11 = arith.constant 0 : index
    %14 = vector.load %arg13[%c160, %c0_11] : memref<200x8xf32, #tpu.memory_space<vmem>>, vector<8x8xf32>
    tpu.vector_store %arg13[%c160, %c0_11], %13 {strides = array<i32>} : memref<200x8xf32, #tpu.memory_space<vmem>>, vector<8x8xf32>,
    %15 = vector.extract_strided_slice %10 {offsets = [16, 0], sizes = [8, 8], strides = [1, 1]} : vector<32x8xf32> to vector<8x8xf32>
    %c170 = arith.constant 170 : index
    %c0_12 = arith.constant 0 : index
    %16 = vector.load %arg13[%c170, %c0_12] : memref<200x8xf32, #tpu.memory_space<vmem>>, vector<8x8xf32>
    tpu.vector_store %arg13[%c170, %c0_12], %15 {strides = array<i32>} : memref<200x8xf32, #tpu.memory_space<vmem>>, vector<8x8xf32>,
    %17 = vector.extract_strided_slice %10 {offsets = [24, 0], sizes = [8, 8], strides = [1, 1]} : vector<32x8xf32> to vector<8x8xf32>
    %c180 = arith.constant 180 : index
    %c0_13 = arith.constant 0 : index
    %18 = vector.load %arg13[%c180, %c0_13] : memref<200x8xf32, #tpu.memory_space<vmem>>, vector<8x8xf32>
    tpu.vector_store %arg13[%c180, %c0_13], %17 {strides = array<i32>} : memref<200x8xf32, #tpu.memory_space<vmem>>, vector<8x8xf32>,
    %c1 = arith.constant 1 : index
    %c0_14 = arith.constant 0 : index
    %c0_15 = arith.constant 0 : index
    %19 = vector.load %arg0[%c1, %c0_14, %c0_15] : memref<4x32x36xf32, #tpu.memory_space<vmem>>, vector<1x32x36xf32>
    %20 = vector.shape_cast %19 : vector<1x32x36xf32> to vector<32x36xf32>
    %cst_16 = arith.constant dense<0.000000e+00> : vector<32x8xf32>
    %21 = tpu.matmul %20, %2, %cst_16 {dimension_numbers = #tpu.dot_dimension_numbers<[1], [0], [0], [1], [0, 0, 1, 1], [], []>} : vector<32x36xf32>, vector<36x8xf32>, vector<32x8xf32> -> vector<32x8xf32>
    %22 = vector.broadcast %3 : vector<1x8xf32> to vector<32x8xf32>
    %23 = arith.addf %21, %22 : vector<32x8xf32>
    %cst_17 = arith.constant 0.000000e+00 : f32
    %24 = vector.broadcast %cst_17 : f32 to vector<32x8xf32>
    %25 = arith.maximumf %23, %24 : vector<32x8xf32>
    %26 = vector.extract_strided_slice %25 {offsets = [0, 0], sizes = [8, 8], strides = [1, 1]} : vector<32x8xf32> to vector<8x8xf32>
    %c102 = arith.constant 102 : index
    %c0_18 = arith.constant 0 : index
    %27 = vector.load %arg13[%c102, %c0_18] : memref<200x8xf32, #tpu.memory_space<vmem>>, vector<8x8xf32>
    tpu.vector_store %arg13[%c102, %c0_18], %26 {strides = array<i32>} : memref<200x8xf32, #tpu.memory_space<vmem>>, vector<8x8xf32>,
    %28 = vector.extract_strided_slice %25 {offsets = [8, 0], sizes = [8, 8], strides = [1, 1]} : vector<32x8xf32> to vector<8x8xf32>
    %c112 = arith.constant 112 : index
    %c0_19 = arith.constant 0 : index
    %29 = vector.load %arg13[%c112, %c0_19] : memref<200x8xf32, #tpu.memory_space<vmem>>, vector<8x8xf32>
    tpu.vector_store %arg13[%c112, %c0_19], %28 {strides = array<i32>} : memref<200x8xf32, #tpu.memory_space<vmem>>, vector<8x8xf32>,
    %30 = vector.extract_strided_slice %25 {offsets = [16, 0], sizes = [8, 8], strides = [1, 1]} : vector<32x8xf32> to vector<8x8xf32>
    %c122 = arith.constant 122 : index
    %c0_20 = arith.constant 0 : index
    %31 = vector.load %arg13[%c122, %c0_20] : memref<200x8xf32, #tpu.memory_space<vmem>>, vector<8x8xf32>
    tpu.vector_store %arg13[%c122, %c0_20], %30 {strides = array<i32>} : memref<200x8xf32, #tpu.memory_space<vmem>>, vector<8x8xf32>,
    %32 = vector.extract_strided_slice %25 {offsets = [24, 0], sizes = [8, 8], strides = [1, 1]} : vector<32x8xf32> to vector<8x8xf32>
    %c132 = arith.constant 132 : index
    %c0_21 = arith.constant 0 : index
    %33 = vector.load %arg13[%c132, %c0_21] : memref<200x8xf32, #tpu.memory_space<vmem>>, vector<8x8xf32>
    tpu.vector_store %arg13[%c132, %c0_21], %32 {strides = array<i32>} : memref<200x8xf32, #tpu.memory_space<vmem>>, vector<8x8xf32>,
    %c2 = arith.constant 2 : index
    %c0_22 = arith.constant 0 : index
    %c0_23 = arith.constant 0 : index
    %34 = vector.load %arg0[%c2, %c0_22, %c0_23] : memref<4x32x36xf32, #tpu.memory_space<vmem>>, vector<1x32x36xf32>
    %35 = vector.shape_cast %34 : vector<1x32x36xf32> to vector<32x36xf32>
    %cst_24 = arith.constant dense<0.000000e+00> : vector<32x8xf32>
    %36 = tpu.matmul %35, %2, %cst_24 {dimension_numbers = #tpu.dot_dimension_numbers<[1], [0], [0], [1], [0, 0, 1, 1], [], []>} : vector<32x36xf32>, vector<36x8xf32>, vector<32x8xf32> -> vector<32x8xf32>
    %37 = vector.broadcast %3 : vector<1x8xf32> to vector<32x8xf32>
    %38 = arith.addf %36, %37 : vector<32x8xf32>
    %cst_25 = arith.constant 0.000000e+00 : f32
    %39 = vector.broadcast %cst_25 : f32 to vector<32x8xf32>
    %40 = arith.maximumf %38, %39 : vector<32x8xf32>
    %41 = vector.extract_strided_slice %40 {offsets = [0, 0], sizes = [8, 8], strides = [1, 1]} : vector<32x8xf32> to vector<8x8xf32>
    %c60 = arith.constant 60 : index
    %c0_26 = arith.constant 0 : index
    %42 = vector.load %arg13[%c60, %c0_26] : memref<200x8xf32, #tpu.memory_space<vmem>>, vector<8x8xf32>
    tpu.vector_store %arg13[%c60, %c0_26], %41 {strides = array<i32>} : memref<200x8xf32, #tpu.memory_space<vmem>>, vector<8x8xf32>,
    %43 = vector.extract_strided_slice %40 {offsets = [8, 0], sizes = [8, 8], strides = [1, 1]} : vector<32x8xf32> to vector<8x8xf32>
    %c70 = arith.constant 70 : index
    %c0_27 = arith.constant 0 : index
    %44 = vector.load %arg13[%c70, %c0_27] : memref<200x8xf32, #tpu.memory_space<vmem>>, vector<8x8xf32>
    tpu.vector_store %arg13[%c70, %c0_27], %43 {strides = array<i32>} : memref<200x8xf32, #tpu.memory_space<vmem>>, vector<8x8xf32>,
    %45 = vector.extract_strided_slice %40 {offsets = [16, 0], sizes = [8, 8], strides = [1, 1]} : vector<32x8xf32> to vector<8x8xf32>
    %c80 = arith.constant 80 : index
    %c0_28 = arith.constant 0 : index
    %46 = vector.load %arg13[%c80, %c0_28] : memref<200x8xf32, #tpu.memory_space<vmem>>, vector<8x8xf32>
    tpu.vector_store %arg13[%c80, %c0_28], %45 {strides = array<i32>} : memref<200x8xf32, #tpu.memory_space<vmem>>, vector<8x8xf32>,
    %47 = vector.extract_strided_slice %40 {offsets = [24, 0], sizes = [8, 8], strides = [1, 1]} : vector<32x8xf32> to vector<8x8xf32>
    %c90 = arith.constant 90 : index
    %c0_29 = arith.constant 0 : index
    %48 = vector.load %arg13[%c90, %c0_29] : memref<200x8xf32, #tpu.memory_space<vmem>>, vector<8x8xf32>
    tpu.vector_store %arg13[%c90, %c0_29], %47 {strides = array<i32>} : memref<200x8xf32, #tpu.memory_space<vmem>>, vector<8x8xf32>,
    %c3 = arith.constant 3 : index
    %c0_30 = arith.constant 0 : index
    %c0_31 = arith.constant 0 : index
    %49 = vector.load %arg0[%c3, %c0_30, %c0_31] : memref<4x32x36xf32, #tpu.memory_space<vmem>>, vector<1x32x36xf32>
    %50 = vector.shape_cast %49 : vector<1x32x36xf32> to vector<32x36xf32>
    %cst_32 = arith.constant dense<0.000000e+00> : vector<32x8xf32>
    %51 = tpu.matmul %50, %2, %cst_32 {dimension_numbers = #tpu.dot_dimension_numbers<[1], [0], [0], [1], [0, 0, 1, 1], [], []>} : vector<32x36xf32>, vector<36x8xf32>, vector<32x8xf32> -> vector<32x8xf32>
    %52 = vector.broadcast %3 : vector<1x8xf32> to vector<32x8xf32>
    %53 = arith.addf %51, %52 : vector<32x8xf32>
    %cst_33 = arith.constant 0.000000e+00 : f32
    %54 = vector.broadcast %cst_33 : f32 to vector<32x8xf32>
    %55 = arith.maximumf %53, %54 : vector<32x8xf32>
    %56 = vector.extract_strided_slice %55 {offsets = [0, 0], sizes = [8, 8], strides = [1, 1]} : vector<32x8xf32> to vector<8x8xf32>
    %c12 = arith.constant 12 : index
    %c0_34 = arith.constant 0 : index
    %57 = vector.load %arg13[%c12, %c0_34] : memref<200x8xf32, #tpu.memory_space<vmem>>, vector<8x8xf32>
    tpu.vector_store %arg13[%c12, %c0_34], %56 {strides = array<i32>} : memref<200x8xf32, #tpu.memory_space<vmem>>, vector<8x8xf32>,
    %58 = vector.extract_strided_slice %55 {offsets = [8, 0], sizes = [8, 8], strides = [1, 1]} : vector<32x8xf32> to vector<8x8xf32>
    %c22 = arith.constant 22 : index
    %c0_35 = arith.constant 0 : index
    %59 = vector.load %arg13[%c22, %c0_35] : memref<200x8xf32, #tpu.memory_space<vmem>>, vector<8x8xf32>
    tpu.vector_store %arg13[%c22, %c0_35], %58 {strides = array<i32>} : memref<200x8xf32, #tpu.memory_space<vmem>>, vector<8x8xf32>,
    %60 = vector.extract_strided_slice %55 {offsets = [16, 0], sizes = [8, 8], strides = [1, 1]} : vector<32x8xf32> to vector<8x8xf32>
    %c32 = arith.constant 32 : index
    %c0_36 = arith.constant 0 : index
    %61 = vector.load %arg13[%c32, %c0_36] : memref<200x8xf32, #tpu.memory_space<vmem>>, vector<8x8xf32>
    tpu.vector_store %arg13[%c32, %c0_36], %60 {strides = array<i32>} : memref<200x8xf32, #tpu.memory_space<vmem>>, vector<8x8xf32>,
    %62 = vector.extract_strided_slice %55 {offsets = [24, 0], sizes = [8, 8], strides = [1, 1]} : vector<32x8xf32> to vector<8x8xf32>
    %c42 = arith.constant 42 : index
    %c0_37 = arith.constant 0 : index
    %63 = vector.load %arg13[%c42, %c0_37] : memref<200x8xf32, #tpu.memory_space<vmem>>, vector<8x8xf32>
    tpu.vector_store %arg13[%c42, %c0_37], %62 {strides = array<i32>} : memref<200x8xf32, #tpu.memory_space<vmem>>, vector<8x8xf32>,
    %c0_38 = arith.constant 0 : index
    %c0_39 = arith.constant 0 : index
    %64 = vector.load %arg4[%c0_38, %c0_39] : memref<1x16xf32, #tpu.memory_space<vmem>>, vector<1x16xf32>
    %c0_40 = arith.constant 0 : index
    %c0_41 = arith.constant 0 : index
    %65 = vector.load %arg6[%c0_40, %c0_41] : memref<1x32xf32, #tpu.memory_space<vmem>>, vector<1x32xf32>
    %cst_42 = arith.constant 0.000000e+00 : f32
    %66 = vector.broadcast %cst_42 : f32 to vector<2x32xf32>
    %cst_43 = arith.constant 0.000000e+00 : f32
    %67 = vector.broadcast %cst_43 : f32 to vector<8x16xf32>
    %c0_44 = arith.constant 0 : index
    %c0_45 = arith.constant 0 : index
    %68 = vector.load %arg13[%c0_44, %c0_45] : memref<200x8xf32, #tpu.memory_space<vmem>>, vector<8x8xf32>
    %c0_46 = arith.constant 0 : index
    %c0_47 = arith.constant 0 : index
    %c0_48 = arith.constant 0 : index
    %69 = vector.load %arg3[%c0_46, %c0_47, %c0_48] : memref<9x8x16xf32, #tpu.memory_space<vmem>>, vector<1x8x16xf32>
    %70 = vector.shape_cast %69 : vector<1x8x16xf32> to vector<8x16xf32>
    %cst_49 = arith.constant dense<0.000000e+00> : vector<8x16xf32>
    %71 = tpu.matmul %68, %70, %cst_49 {dimension_numbers = #tpu.dot_dimension_numbers<[1], [0], [0], [1], [0, 0, 1, 1], [], []>} : vector<8x8xf32>, vector<8x16xf32>, vector<8x16xf32> -> vector<8x16xf32>
    %72 = arith.addf %67, %71 : vector<8x16xf32>
    %c50 = arith.constant 50 : index
    %c0_50 = arith.constant 0 : index
    %73 = vector.load %arg13[%c50, %c0_50] : memref<200x8xf32, #tpu.memory_space<vmem>>, vector<8x8xf32>
    %c1_51 = arith.constant 1 : index
    %c0_52 = arith.constant 0 : index
    %c0_53 = arith.constant 0 : index
    %74 = vector.load %arg3[%c1_51, %c0_52, %c0_53] : memref<9x8x16xf32, #tpu.memory_space<vmem>>, vector<1x8x16xf32>
    %75 = vector.shape_cast %74 : vector<1x8x16xf32> to vector<8x16xf32>
    %cst_54 = arith.constant dense<0.000000e+00> : vector<8x16xf32>
    %76 = tpu.matmul %73, %75, %cst_54 {dimension_numbers = #tpu.dot_dimension_numbers<[1], [0], [0], [1], [0, 0, 1, 1], [], []>} : vector<8x8xf32>, vector<8x16xf32>, vector<8x16xf32> -> vector<8x16xf32>
    %77 = arith.addf %72, %76 : vector<8x16xf32>
    %c2_55 = arith.constant 2 : index
    %c0_56 = arith.constant 0 : index
    %78 = vector.load %arg13[%c2_55, %c0_56] : memref<200x8xf32, #tpu.memory_space<vmem>>, vector<8x8xf32>
    %c2_57 = arith.constant 2 : index
    %c0_58 = arith.constant 0 : index
    %c0_59 = arith.constant 0 : index
    %79 = vector.load %arg3[%c2_57, %c0_58, %c0_59] : memref<9x8x16xf32, #tpu.memory_space<vmem>>, vector<1x8x16xf32>
    %80 = vector.shape_cast %79 : vector<1x8x16xf32> to vector<8x16xf32>
    %cst_60 = arith.constant dense<0.000000e+00> : vector<8x16xf32>
    %81 = tpu.matmul %78, %80, %cst_60 {dimension_numbers = #tpu.dot_dimension_numbers<[1], [0], [0], [1], [0, 0, 1, 1], [], []>} : vector<8x8xf32>, vector<8x16xf32>, vector<8x16xf32> -> vector<8x16xf32>
    %82 = arith.addf %77, %81 : vector<8x16xf32>
    %c100 = arith.constant 100 : index
    %c0_61 = arith.constant 0 : index
    %83 = vector.load %arg13[%c100, %c0_61] : memref<200x8xf32, #tpu.memory_space<vmem>>, vector<8x8xf32>
    %c3_62 = arith.constant 3 : index
    %c0_63 = arith.constant 0 : index
    %c0_64 = arith.constant 0 : index
    %84 = vector.load %arg3[%c3_62, %c0_63, %c0_64] : memref<9x8x16xf32, #tpu.memory_space<vmem>>, vector<1x8x16xf32>
    %85 = vector.shape_cast %84 : vector<1x8x16xf32> to vector<8x16xf32>
    %cst_65 = arith.constant dense<0.000000e+00> : vector<8x16xf32>
    %86 = tpu.matmul %83, %85, %cst_65 {dimension_numbers = #tpu.dot_dimension_numbers<[1], [0], [0], [1], [0, 0, 1, 1], [], []>} : vector<8x8xf32>, vector<8x16xf32>, vector<8x16xf32> -> vector<8x16xf32>
    %87 = arith.addf %82, %86 : vector<8x16xf32>
    %c150_66 = arith.constant 150 : index
    %c0_67 = arith.constant 0 : index
    %88 = vector.load %arg13[%c150_66, %c0_67] : memref<200x8xf32, #tpu.memory_space<vmem>>, vector<8x8xf32>
    %c4 = arith.constant 4 : index
    %c0_68 = arith.constant 0 : index
    %c0_69 = arith.constant 0 : index
    %89 = vector.load %arg3[%c4, %c0_68, %c0_69] : memref<9x8x16xf32, #tpu.memory_space<vmem>>, vector<1x8x16xf32>
    %90 = vector.shape_cast %89 : vector<1x8x16xf32> to vector<8x16xf32>
    %cst_70 = arith.constant dense<0.000000e+00> : vector<8x16xf32>
    %91 = tpu.matmul %88, %90, %cst_70 {dimension_numbers = #tpu.dot_dimension_numbers<[1], [0], [0], [1], [0, 0, 1, 1], [], []>} : vector<8x8xf32>, vector<8x16xf32>, vector<8x16xf32> -> vector<8x16xf32>
    %92 = arith.addf %87, %91 : vector<8x16xf32>
    %c102_71 = arith.constant 102 : index
    %c0_72 = arith.constant 0 : index
    %93 = vector.load %arg13[%c102_71, %c0_72] : memref<200x8xf32, #tpu.memory_space<vmem>>, vector<8x8xf32>
    %c5 = arith.constant 5 : index
    %c0_73 = arith.constant 0 : index
    %c0_74 = arith.constant 0 : index
    %94 = vector.load %arg3[%c5, %c0_73, %c0_74] : memref<9x8x16xf32, #tpu.memory_space<vmem>>, vector<1x8x16xf32>
    %95 = vector.shape_cast %94 : vector<1x8x16xf32> to vector<8x16xf32>
    %cst_75 = arith.constant dense<0.000000e+00> : vector<8x16xf32>
    %96 = tpu.matmul %93, %95, %cst_75 {dimension_numbers = #tpu.dot_dimension_numbers<[1], [0], [0], [1], [0, 0, 1, 1], [], []>} : vector<8x8xf32>, vector<8x16xf32>, vector<8x16xf32> -> vector<8x16xf32>
    %97 = arith.addf %92, %96 : vector<8x16xf32>
    %c10 = arith.constant 10 : index
    %c0_76 = arith.constant 0 : index
    %98 = vector.load %arg13[%c10, %c0_76] : memref<200x8xf32, #tpu.memory_space<vmem>>, vector<8x8xf32>
    %c6 = arith.constant 6 : index
    %c0_77 = arith.constant 0 : index
    %c0_78 = arith.constant 0 : index
    %99 = vector.load %arg3[%c6, %c0_77, %c0_78] : memref<9x8x16xf32, #tpu.memory_space<vmem>>, vector<1x8x16xf32>
    %100 = vector.shape_cast %99 : vector<1x8x16xf32> to vector<8x16xf32>
    %cst_79 = arith.constant dense<0.000000e+00> : vector<8x16xf32>
    %101 = tpu.matmul %98, %100, %cst_79 {dimension_numbers = #tpu.dot_dimension_numbers<[1], [0], [0], [1], [0, 0, 1, 1], [], []>} : vector<8x8xf32>, vector<8x16xf32>, vector<8x16xf32> -> vector<8x16xf32>
    %102 = arith.addf %97, %101 : vector<8x16xf32>
    %c60_80 = arith.constant 60 : index
    %c0_81 = arith.constant 0 : index
    %103 = vector.load %arg13[%c60_80, %c0_81] : memref<200x8xf32, #tpu.memory_space<vmem>>, vector<8x8xf32>
    %c7 = arith.constant 7 : index
    %c0_82 = arith.constant 0 : index
    %c0_83 = arith.constant 0 : index
    %104 = vector.load %arg3[%c7, %c0_82, %c0_83] : memref<9x8x16xf32, #tpu.memory_space<vmem>>, vector<1x8x16xf32>
    %105 = vector.shape_cast %104 : vector<1x8x16xf32> to vector<8x16xf32>
    %cst_84 = arith.constant dense<0.000000e+00> : vector<8x16xf32>
    %106 = tpu.matmul %103, %105, %cst_84 {dimension_numbers = #tpu.dot_dimension_numbers<[1], [0], [0], [1], [0, 0, 1, 1], [], []>} : vector<8x8xf32>, vector<8x16xf32>, vector<8x16xf32> -> vector<8x16xf32>
    %107 = arith.addf %102, %106 : vector<8x16xf32>
    %c12_85 = arith.constant 12 : index
    %c0_86 = arith.constant 0 : index
    %108 = vector.load %arg13[%c12_85, %c0_86] : memref<200x8xf32, #tpu.memory_space<vmem>>, vector<8x8xf32>
    %c8 = arith.constant 8 : index
    %c0_87 = arith.constant 0 : index
    %c0_88 = arith.constant 0 : index
    %109 = vector.load %arg3[%c8, %c0_87, %c0_88] : memref<9x8x16xf32, #tpu.memory_space<vmem>>, vector<1x8x16xf32>
    %110 = vector.shape_cast %109 : vector<1x8x16xf32> to vector<8x16xf32>
    %cst_89 = arith.constant dense<0.000000e+00> : vector<8x16xf32>
    %111 = tpu.matmul %108, %110, %cst_89 {dimension_numbers = #tpu.dot_dimension_numbers<[1], [0], [0], [1], [0, 0, 1, 1], [], []>} : vector<8x8xf32>, vector<8x16xf32>, vector<8x16xf32> -> vector<8x16xf32>
    %112 = arith.addf %107, %111 : vector<8x16xf32>
    %113 = vector.broadcast %64 : vector<1x16xf32> to vector<8x16xf32>
    %114 = arith.addf %112, %113 : vector<8x16xf32>
    %cst_90 = arith.constant 0.000000e+00 : f32
    %115 = vector.broadcast %cst_90 : f32 to vector<8x16xf32>
    %116 = arith.maximumf %114, %115 : vector<8x16xf32>
    %117 = vector.extract_strided_slice %116 {offsets = [0, 0], sizes = [2, 16], strides = [1, 1]} : vector<8x16xf32> to vector<2x16xf32>
    %c0_91 = arith.constant 0 : index
    %c0_92 = arith.constant 0 : index
    %c0_93 = arith.constant 0 : index
    %118 = vector.load %arg5[%c0_91, %c0_92, %c0_93] : memref<16x16x32xf32, #tpu.memory_space<vmem>>, vector<1x16x32xf32>
    %119 = vector.shape_cast %118 : vector<1x16x32xf32> to vector<16x32xf32>
    %cst_94 = arith.constant dense<0.000000e+00> : vector<2x32xf32>
    %120 = tpu.matmul %117, %119, %cst_94 {dimension_numbers = #tpu.dot_dimension_numbers<[1], [0], [0], [1], [0, 0, 1, 1], [], []>} : vector<2x16xf32>, vector<16x32xf32>, vector<2x32xf32> -> vector<2x32xf32>
    %121 = arith.addf %66, %120 : vector<2x32xf32>
    %122 = vector.extract_strided_slice %116 {offsets = [2, 0], sizes = [2, 16], strides = [1, 1]} : vector<8x16xf32> to vector<2x16xf32>
    %c1_95 = arith.constant 1 : index
    %c0_96 = arith.constant 0 : index
    %c0_97 = arith.constant 0 : index
    %123 = vector.load %arg5[%c1_95, %c0_96, %c0_97] : memref<16x16x32xf32, #tpu.memory_space<vmem>>, vector<1x16x32xf32>
    %124 = vector.shape_cast %123 : vector<1x16x32xf32> to vector<16x32xf32>
    %cst_98 = arith.constant dense<0.000000e+00> : vector<2x32xf32>
    %125 = tpu.matmul %122, %124, %cst_98 {dimension_numbers = #tpu.dot_dimension_numbers<[1], [0], [0], [1], [0, 0, 1, 1], [], []>} : vector<2x16xf32>, vector<16x32xf32>, vector<2x32xf32> -> vector<2x32xf32>
    %126 = arith.addf %121, %125 : vector<2x32xf32>
    %127 = vector.extract_strided_slice %116 {offsets = [4, 0], sizes = [2, 16], strides = [1, 1]} : vector<8x16xf32> to vector<2x16xf32>
    %c2_99 = arith.constant 2 : index
    %c0_100 = arith.constant 0 : index
    %c0_101 = arith.constant 0 : index
    %128 = vector.load %arg5[%c2_99, %c0_100, %c0_101] : memref<16x16x32xf32, #tpu.memory_space<vmem>>, vector<1x16x32xf32>
    %129 = vector.shape_cast %128 : vector<1x16x32xf32> to vector<16x32xf32>
    %cst_102 = arith.constant dense<0.000000e+00> : vector<2x32xf32>
    %130 = tpu.matmul %127, %129, %cst_102 {dimension_numbers = #tpu.dot_dimension_numbers<[1], [0], [0], [1], [0, 0, 1, 1], [], []>} : vector<2x16xf32>, vector<16x32xf32>, vector<2x32xf32> -> vector<2x32xf32>
    %131 = arith.addf %126, %130 : vector<2x32xf32>
    %132 = vector.extract_strided_slice %116 {offsets = [6, 0], sizes = [2, 16], strides = [1, 1]} : vector<8x16xf32> to vector<2x16xf32>
    %c3_103 = arith.constant 3 : index
    %c0_104 = arith.constant 0 : index
    %c0_105 = arith.constant 0 : index
    %133 = vector.load %arg5[%c3_103, %c0_104, %c0_105] : memref<16x16x32xf32, #tpu.memory_space<vmem>>, vector<1x16x32xf32>
    %134 = vector.shape_cast %133 : vector<1x16x32xf32> to vector<16x32xf32>
    %cst_106 = arith.constant dense<0.000000e+00> : vector<2x32xf32>
    %135 = tpu.matmul %132, %134, %cst_106 {dimension_numbers = #tpu.dot_dimension_numbers<[1], [0], [0], [1], [0, 0, 1, 1], [], []>} : vector<2x16xf32>, vector<16x32xf32>, vector<2x32xf32> -> vector<2x32xf32>
    %136 = arith.addf %131, %135 : vector<2x32xf32>
    %cst_107 = arith.constant 0.000000e+00 : f32
    %137 = vector.broadcast %cst_107 : f32 to vector<8x16xf32>
    %c10_108 = arith.constant 10 : index
    %c0_109 = arith.constant 0 : index
    %138 = vector.load %arg13[%c10_108, %c0_109] : memref<200x8xf32, #tpu.memory_space<vmem>>, vector<8x8xf32>
    %c0_110 = arith.constant 0 : index
    %c0_111 = arith.constant 0 : index
    %c0_112 = arith.constant 0 : index
    %139 = vector.load %arg3[%c0_110, %c0_111, %c0_112] : memref<9x8x16xf32, #tpu.memory_space<vmem>>, vector<1x8x16xf32>
    %140 = vector.shape_cast %139 : vector<1x8x16xf32> to vector<8x16xf32>
    %cst_113 = arith.constant dense<0.000000e+00> : vector<8x16xf32>
    %141 = tpu.matmul %138, %140, %cst_113 {dimension_numbers = #tpu.dot_dimension_numbers<[1], [0], [0], [1], [0, 0, 1, 1], [], []>} : vector<8x8xf32>, vector<8x16xf32>, vector<8x16xf32> -> vector<8x16xf32>
    %142 = arith.addf %137, %141 : vector<8x16xf32>
    %c60_114 = arith.constant 60 : index
    %c0_115 = arith.constant 0 : index
    %143 = vector.load %arg13[%c60_114, %c0_115] : memref<200x8xf32, #tpu.memory_space<vmem>>, vector<8x8xf32>
    %c1_116 = arith.constant 1 : index
    %c0_117 = arith.constant 0 : index
    %c0_118 = arith.constant 0 : index
    %144 = vector.load %arg3[%c1_116, %c0_117, %c0_118] : memref<9x8x16xf32, #tpu.memory_space<vmem>>, vector<1x8x16xf32>
    %145 = vector.shape_cast %144 : vector<1x8x16xf32> to vector<8x16xf32>
    %cst_119 = arith.constant dense<0.000000e+00> : vector<8x16xf32>
    %146 = tpu.matmul %143, %145, %cst_119 {dimension_numbers = #tpu.dot_dimension_numbers<[1], [0], [0], [1], [0, 0, 1, 1], [], []>} : vector<8x8xf32>, vector<8x16xf32>, vector<8x16xf32> -> vector<8x16xf32>
    %147 = arith.addf %142, %146 : vector<8x16xf32>
    %c12_120 = arith.constant 12 : index
    %c0_121 = arith.constant 0 : index
    %148 = vector.load %arg13[%c12_120, %c0_121] : memref<200x8xf32, #tpu.memory_space<vmem>>, vector<8x8xf32>
    %c2_122 = arith.constant 2 : index
    %c0_123 = arith.constant 0 : index
    %c0_124 = arith.constant 0 : index
    %149 = vector.load %arg3[%c2_122, %c0_123, %c0_124] : memref<9x8x16xf32, #tpu.memory_space<vmem>>, vector<1x8x16xf32>
    %150 = vector.shape_cast %149 : vector<1x8x16xf32> to vector<8x16xf32>
    %cst_125 = arith.constant dense<0.000000e+00> : vector<8x16xf32>
    %151 = tpu.matmul %148, %150, %cst_125 {dimension_numbers = #tpu.dot_dimension_numbers<[1], [0], [0], [1], [0, 0, 1, 1], [], []>} : vector<8x8xf32>, vector<8x16xf32>, vector<8x16xf32> -> vector<8x16xf32>
    %152 = arith.addf %147, %151 : vector<8x16xf32>
    %c110 = arith.constant 110 : index
    %c0_126 = arith.constant 0 : index
    %153 = vector.load %arg13[%c110, %c0_126] : memref<200x8xf32, #tpu.memory_space<vmem>>, vector<8x8xf32>
    %c3_127 = arith.constant 3 : index
    %c0_128 = arith.constant 0 : index
    %c0_129 = arith.constant 0 : index
    %154 = vector.load %arg3[%c3_127, %c0_128, %c0_129] : memref<9x8x16xf32, #tpu.memory_space<vmem>>, vector<1x8x16xf32>
    %155 = vector.shape_cast %154 : vector<1x8x16xf32> to vector<8x16xf32>
    %cst_130 = arith.constant dense<0.000000e+00> : vector<8x16xf32>
    %156 = tpu.matmul %153, %155, %cst_130 {dimension_numbers = #tpu.dot_dimension_numbers<[1], [0], [0], [1], [0, 0, 1, 1], [], []>} : vector<8x8xf32>, vector<8x16xf32>, vector<8x16xf32> -> vector<8x16xf32>
    %157 = arith.addf %152, %156 : vector<8x16xf32>
    %c160_131 = arith.constant 160 : index
    %c0_132 = arith.constant 0 : index
    %158 = vector.load %arg13[%c160_131, %c0_132] : memref<200x8xf32, #tpu.memory_space<vmem>>, vector<8x8xf32>
    %c4_133 = arith.constant 4 : index
    %c0_134 = arith.constant 0 : index
    %c0_135 = arith.constant 0 : index
    %159 = vector.load %arg3[%c4_133, %c0_134, %c0_135] : memref<9x8x16xf32, #tpu.memory_space<vmem>>, vector<1x8x16xf32>
    %160 = vector.shape_cast %159 : vector<1x8x16xf32> to vector<8x16xf32>
    %cst_136 = arith.constant dense<0.000000e+00> : vector<8x16xf32>
    %161 = tpu.matmul %158, %160, %cst_136 {dimension_numbers = #tpu.dot_dimension_numbers<[1], [0], [0], [1], [0, 0, 1, 1], [], []>} : vector<8x8xf32>, vector<8x16xf32>, vector<8x16xf32> -> vector<8x16xf32>
    %162 = arith.addf %157, %161 : vector<8x16xf32>
    %c112_137 = arith.constant 112 : index
    %c0_138 = arith.constant 0 : index
    %163 = vector.load %arg13[%c112_137, %c0_138] : memref<200x8xf32, #tpu.memory_space<vmem>>, vector<8x8xf32>
    %c5_139 = arith.constant 5 : index
    %c0_140 = arith.constant 0 : index
    %c0_141 = arith.constant 0 : index
    %164 = vector.load %arg3[%c5_139, %c0_140, %c0_141] : memref<9x8x16xf32, #tpu.memory_space<vmem>>, vector<1x8x16xf32>
    %165 = vector.shape_cast %164 : vector<1x8x16xf32> to vector<8x16xf32>
    %cst_142 = arith.constant dense<0.000000e+00> : vector<8x16xf32>
    %166 = tpu.matmul %163, %165, %cst_142 {dimension_numbers = #tpu.dot_dimension_numbers<[1], [0], [0], [1], [0, 0, 1, 1], [], []>} : vector<8x8xf32>, vector<8x16xf32>, vector<8x16xf32> -> vector<8x16xf32>
    %167 = arith.addf %162, %166 : vector<8x16xf32>
    %c20 = arith.constant 20 : index
    %c0_143 = arith.constant 0 : index
    %168 = vector.load %arg13[%c20, %c0_143] : memref<200x8xf32, #tpu.memory_space<vmem>>, vector<8x8xf32>
    %c6_144 = arith.constant 6 : index
    %c0_145 = arith.constant 0 : index
    %c0_146 = arith.constant 0 : index
    %169 = vector.load %arg3[%c6_144, %c0_145, %c0_146] : memref<9x8x16xf32, #tpu.memory_space<vmem>>, vector<1x8x16xf32>
    %170 = vector.shape_cast %169 : vector<1x8x16xf32> to vector<8x16xf32>
    %cst_147 = arith.constant dense<0.000000e+00> : vector<8x16xf32>
    %171 = tpu.matmul %168, %170, %cst_147 {dimension_numbers = #tpu.dot_dimension_numbers<[1], [0], [0], [1], [0, 0, 1, 1], [], []>} : vector<8x8xf32>, vector<8x16xf32>, vector<8x16xf32> -> vector<8x16xf32>
    %172 = arith.addf %167, %171 : vector<8x16xf32>
    %c70_148 = arith.constant 70 : index
    %c0_149 = arith.constant 0 : index
    %173 = vector.load %arg13[%c70_148, %c0_149] : memref<200x8xf32, #tpu.memory_space<vmem>>, vector<8x8xf32>
    %c7_150 = arith.constant 7 : index
    %c0_151 = arith.constant 0 : index
    %c0_152 = arith.constant 0 : index
    %174 = vector.load %arg3[%c7_150, %c0_151, %c0_152] : memref<9x8x16xf32, #tpu.memory_space<vmem>>, vector<1x8x16xf32>
    %175 = vector.shape_cast %174 : vector<1x8x16xf32> to vector<8x16xf32>
    %cst_153 = arith.constant dense<0.000000e+00> : vector<8x16xf32>
    %176 = tpu.matmul %173, %175, %cst_153 {dimension_numbers = #tpu.dot_dimension_numbers<[1], [0], [0], [1], [0, 0, 1, 1], [], []>} : vector<8x8xf32>, vector<8x16xf32>, vector<8x16xf32> -> vector<8x16xf32>
    %177 = arith.addf %172, %176 : vector<8x16xf32>
    %c22_154 = arith.constant 22 : index
    %c0_155 = arith.constant 0 : index
    %178 = vector.load %arg13[%c22_154, %c0_155] : memref<200x8xf32, #tpu.memory_space<vmem>>, vector<8x8xf32>
    %c8_156 = arith.constant 8 : index
    %c0_157 = arith.constant 0 : index
    %c0_158 = arith.constant 0 : index
    %179 = vector.load %arg3[%c8_156, %c0_157, %c0_158] : memref<9x8x16xf32, #tpu.memory_space<vmem>>, vector<1x8x16xf32>
    %180 = vector.shape_cast %179 : vector<1x8x16xf32> to vector<8x16xf32>
    %cst_159 = arith.constant dense<0.000000e+00> : vector<8x16xf32>
    %181 = tpu.matmul %178, %180, %cst_159 {dimension_numbers = #tpu.dot_dimension_numbers<[1], [0], [0], [1], [0, 0, 1, 1], [], []>} : vector<8x8xf32>, vector<8x16xf32>, vector<8x16xf32> -> vector<8x16xf32>
    %182 = arith.addf %177, %181 : vector<8x16xf32>
    %183 = vector.broadcast %64 : vector<1x16xf32> to vector<8x16xf32>
    %184 = arith.addf %182, %183 : vector<8x16xf32>
    %cst_160 = arith.constant 0.000000e+00 : f32
    %185 = vector.broadcast %cst_160 : f32 to vector<8x16xf32>
    %186 = arith.maximumf %184, %185 : vector<8x16xf32>
    %187 = vector.extract_strided_slice %186 {offsets = [0, 0], sizes = [2, 16], strides = [1, 1]} : vector<8x16xf32> to vector<2x16xf32>
    %c4_161 = arith.constant 4 : index
    %c0_162 = arith.constant 0 : index
    %c0_163 = arith.constant 0 : index
    %188 = vector.load %arg5[%c4_161, %c0_162, %c0_163] : memref<16x16x32xf32, #tpu.memory_space<vmem>>, vector<1x16x32xf32>
    %189 = vector.shape_cast %188 : vector<1x16x32xf32> to vector<16x32xf32>
    %cst_164 = arith.constant dense<0.000000e+00> : vector<2x32xf32>
    %190 = tpu.matmul %187, %189, %cst_164 {dimension_numbers = #tpu.dot_dimension_numbers<[1], [0], [0], [1], [0, 0, 1, 1], [], []>} : vector<2x16xf32>, vector<16x32xf32>, vector<2x32xf32> -> vector<2x32xf32>
    %191 = arith.addf %136, %190 : vector<2x32xf32>
    %192 = vector.extract_strided_slice %186 {offsets = [2, 0], sizes = [2, 16], strides = [1, 1]} : vector<8x16xf32> to vector<2x16xf32>
    %c5_165 = arith.constant 5 : index
    %c0_166 = arith.constant 0 : index
    %c0_167 = arith.constant 0 : index
    %193 = vector.load %arg5[%c5_165, %c0_166, %c0_167] : memref<16x16x32xf32, #tpu.memory_space<vmem>>, vector<1x16x32xf32>
    %194 = vector.shape_cast %193 : vector<1x16x32xf32> to vector<16x32xf32>
    %cst_168 = arith.constant dense<0.000000e+00> : vector<2x32xf32>
    %195 = tpu.matmul %192, %194, %cst_168 {dimension_numbers = #tpu.dot_dimension_numbers<[1], [0], [0], [1], [0, 0, 1, 1], [], []>} : vector<2x16xf32>, vector<16x32xf32>, vector<2x32xf32> -> vector<2x32xf32>
    %196 = arith.addf %191, %195 : vector<2x32xf32>
    %197 = vector.extract_strided_slice %186 {offsets = [4, 0], sizes = [2, 16], strides = [1, 1]} : vector<8x16xf32> to vector<2x16xf32>
    %c6_169 = arith.constant 6 : index
    %c0_170 = arith.constant 0 : index
    %c0_171 = arith.constant 0 : index
    %198 = vector.load %arg5[%c6_169, %c0_170, %c0_171] : memref<16x16x32xf32, #tpu.memory_space<vmem>>, vector<1x16x32xf32>
    %199 = vector.shape_cast %198 : vector<1x16x32xf32> to vector<16x32xf32>
    %cst_172 = arith.constant dense<0.000000e+00> : vector<2x32xf32>
    %200 = tpu.matmul %197, %199, %cst_172 {dimension_numbers = #tpu.dot_dimension_numbers<[1], [0], [0], [1], [0, 0, 1, 1], [], []>} : vector<2x16xf32>, vector<16x32xf32>, vector<2x32xf32> -> vector<2x32xf32>
    %201 = arith.addf %196, %200 : vector<2x32xf32>
    %202 = vector.extract_strided_slice %186 {offsets = [6, 0], sizes = [2, 16], strides = [1, 1]} : vector<8x16xf32> to vector<2x16xf32>
    %c7_173 = arith.constant 7 : index
    %c0_174 = arith.constant 0 : index
    %c0_175 = arith.constant 0 : index
    %203 = vector.load %arg5[%c7_173, %c0_174, %c0_175] : memref<16x16x32xf32, #tpu.memory_space<vmem>>, vector<1x16x32xf32>
    %204 = vector.shape_cast %203 : vector<1x16x32xf32> to vector<16x32xf32>
    %cst_176 = arith.constant dense<0.000000e+00> : vector<2x32xf32>
    %205 = tpu.matmul %202, %204, %cst_176 {dimension_numbers = #tpu.dot_dimension_numbers<[1], [0], [0], [1], [0, 0, 1, 1], [], []>} : vector<2x16xf32>, vector<16x32xf32>, vector<2x32xf32> -> vector<2x32xf32>
    %206 = arith.addf %201, %205 : vector<2x32xf32>
    %cst_177 = arith.constant 0.000000e+00 : f32
    %207 = vector.broadcast %cst_177 : f32 to vector<8x16xf32>
    %c20_178 = arith.constant 20 : index
    %c0_179 = arith.constant 0 : index
    %208 = vector.load %arg13[%c20_178, %c0_179] : memref<200x8xf32, #tpu.memory_space<vmem>>, vector<8x8xf32>
    %c0_180 = arith.constant 0 : index
    %c0_181 = arith.constant 0 : index
    %c0_182 = arith.constant 0 : index
    %209 = vector.load %arg3[%c0_180, %c0_181, %c0_182] : memref<9x8x16xf32, #tpu.memory_space<vmem>>, vector<1x8x16xf32>
    %210 = vector.shape_cast %209 : vector<1x8x16xf32> to vector<8x16xf32>
    %cst_183 = arith.constant dense<0.000000e+00> : vector<8x16xf32>
    %211 = tpu.matmul %208, %210, %cst_183 {dimension_numbers = #tpu.dot_dimension_numbers<[1], [0], [0], [1], [0, 0, 1, 1], [], []>} : vector<8x8xf32>, vector<8x16xf32>, vector<8x16xf32> -> vector<8x16xf32>
    %212 = arith.addf %207, %211 : vector<8x16xf32>
    %c70_184 = arith.constant 70 : index
    %c0_185 = arith.constant 0 : index
    %213 = vector.load %arg13[%c70_184, %c0_185] : memref<200x8xf32, #tpu.memory_space<vmem>>, vector<8x8xf32>
    %c1_186 = arith.constant 1 : index
    %c0_187 = arith.constant 0 : index
    %c0_188 = arith.constant 0 : index
    %214 = vector.load %arg3[%c1_186, %c0_187, %c0_188] : memref<9x8x16xf32, #tpu.memory_space<vmem>>, vector<1x8x16xf32>
    %215 = vector.shape_cast %214 : vector<1x8x16xf32> to vector<8x16xf32>
    %cst_189 = arith.constant dense<0.000000e+00> : vector<8x16xf32>
    %216 = tpu.matmul %213, %215, %cst_189 {dimension_numbers = #tpu.dot_dimension_numbers<[1], [0], [0], [1], [0, 0, 1, 1], [], []>} : vector<8x8xf32>, vector<8x16xf32>, vector<8x16xf32> -> vector<8x16xf32>
    %217 = arith.addf %212, %216 : vector<8x16xf32>
    %c22_190 = arith.constant 22 : index
    %c0_191 = arith.constant 0 : index
    %218 = vector.load %arg13[%c22_190, %c0_191] : memref<200x8xf32, #tpu.memory_space<vmem>>, vector<8x8xf32>
    %c2_192 = arith.constant 2 : index
    %c0_193 = arith.constant 0 : index
    %c0_194 = arith.constant 0 : index
    %219 = vector.load %arg3[%c2_192, %c0_193, %c0_194] : memref<9x8x16xf32, #tpu.memory_space<vmem>>, vector<1x8x16xf32>
    %220 = vector.shape_cast %219 : vector<1x8x16xf32> to vector<8x16xf32>
    %cst_195 = arith.constant dense<0.000000e+00> : vector<8x16xf32>
    %221 = tpu.matmul %218, %220, %cst_195 {dimension_numbers = #tpu.dot_dimension_numbers<[1], [0], [0], [1], [0, 0, 1, 1], [], []>} : vector<8x8xf32>, vector<8x16xf32>, vector<8x16xf32> -> vector<8x16xf32>
    %222 = arith.addf %217, %221 : vector<8x16xf32>
    %c120 = arith.constant 120 : index
    %c0_196 = arith.constant 0 : index
    %223 = vector.load %arg13[%c120, %c0_196] : memref<200x8xf32, #tpu.memory_space<vmem>>, vector<8x8xf32>
    %c3_197 = arith.constant 3 : index
    %c0_198 = arith.constant 0 : index
    %c0_199 = arith.constant 0 : index
    %224 = vector.load %arg3[%c3_197, %c0_198, %c0_199] : memref<9x8x16xf32, #tpu.memory_space<vmem>>, vector<1x8x16xf32>
    %225 = vector.shape_cast %224 : vector<1x8x16xf32> to vector<8x16xf32>
    %cst_200 = arith.constant dense<0.000000e+00> : vector<8x16xf32>
    %226 = tpu.matmul %223, %225, %cst_200 {dimension_numbers = #tpu.dot_dimension_numbers<[1], [0], [0], [1], [0, 0, 1, 1], [], []>} : vector<8x8xf32>, vector<8x16xf32>, vector<8x16xf32> -> vector<8x16xf32>
    %227 = arith.addf %222, %226 : vector<8x16xf32>
    %c170_201 = arith.constant 170 : index
    %c0_202 = arith.constant 0 : index
    %228 = vector.load %arg13[%c170_201, %c0_202] : memref<200x8xf32, #tpu.memory_space<vmem>>, vector<8x8xf32>
    %c4_203 = arith.constant 4 : index
    %c0_204 = arith.constant 0 : index
    %c0_205 = arith.constant 0 : index
    %229 = vector.load %arg3[%c4_203, %c0_204, %c0_205] : memref<9x8x16xf32, #tpu.memory_space<vmem>>, vector<1x8x16xf32>
    %230 = vector.shape_cast %229 : vector<1x8x16xf32> to vector<8x16xf32>
    %cst_206 = arith.constant dense<0.000000e+00> : vector<8x16xf32>
    %231 = tpu.matmul %228, %230, %cst_206 {dimension_numbers = #tpu.dot_dimension_numbers<[1], [0], [0], [1], [0, 0, 1, 1], [], []>} : vector<8x8xf32>, vector<8x16xf32>, vector<8x16xf32> -> vector<8x16xf32>
    %232 = arith.addf %227, %231 : vector<8x16xf32>
    %c122_207 = arith.constant 122 : index
    %c0_208 = arith.constant 0 : index
    %233 = vector.load %arg13[%c122_207, %c0_208] : memref<200x8xf32, #tpu.memory_space<vmem>>, vector<8x8xf32>
    %c5_209 = arith.constant 5 : index
    %c0_210 = arith.constant 0 : index
    %c0_211 = arith.constant 0 : index
    %234 = vector.load %arg3[%c5_209, %c0_210, %c0_211] : memref<9x8x16xf32, #tpu.memory_space<vmem>>, vector<1x8x16xf32>
    %235 = vector.shape_cast %234 : vector<1x8x16xf32> to vector<8x16xf32>
    %cst_212 = arith.constant dense<0.000000e+00> : vector<8x16xf32>
    %236 = tpu.matmul %233, %235, %cst_212 {dimension_numbers = #tpu.dot_dimension_numbers<[1], [0], [0], [1], [0, 0, 1, 1], [], []>} : vector<8x8xf32>, vector<8x16xf32>, vector<8x16xf32> -> vector<8x16xf32>
    %237 = arith.addf %232, %236 : vector<8x16xf32>
    %c30 = arith.constant 30 : index
    %c0_213 = arith.constant 0 : index
    %238 = vector.load %arg13[%c30, %c0_213] : memref<200x8xf32, #tpu.memory_space<vmem>>, vector<8x8xf32>
    %c6_214 = arith.constant 6 : index
    %c0_215 = arith.constant 0 : index
    %c0_216 = arith.constant 0 : index
    %239 = vector.load %arg3[%c6_214, %c0_215, %c0_216] : memref<9x8x16xf32, #tpu.memory_space<vmem>>, vector<1x8x16xf32>
    %240 = vector.shape_cast %239 : vector<1x8x16xf32> to vector<8x16xf32>
    %cst_217 = arith.constant dense<0.000000e+00> : vector<8x16xf32>
    %241 = tpu.matmul %238, %240, %cst_217 {dimension_numbers = #tpu.dot_dimension_numbers<[1], [0], [0], [1], [0, 0, 1, 1], [], []>} : vector<8x8xf32>, vector<8x16xf32>, vector<8x16xf32> -> vector<8x16xf32>
    %242 = arith.addf %237, %241 : vector<8x16xf32>
    %c80_218 = arith.constant 80 : index
    %c0_219 = arith.constant 0 : index
    %243 = vector.load %arg13[%c80_218, %c0_219] : memref<200x8xf32, #tpu.memory_space<vmem>>, vector<8x8xf32>
    %c7_220 = arith.constant 7 : index
    %c0_221 = arith.constant 0 : index
    %c0_222 = arith.constant 0 : index
    %244 = vector.load %arg3[%c7_220, %c0_221, %c0_222] : memref<9x8x16xf32, #tpu.memory_space<vmem>>, vector<1x8x16xf32>
    %245 = vector.shape_cast %244 : vector<1x8x16xf32> to vector<8x16xf32>
    %cst_223 = arith.constant dense<0.000000e+00> : vector<8x16xf32>
    %246 = tpu.matmul %243, %245, %cst_223 {dimension_numbers = #tpu.dot_dimension_numbers<[1], [0], [0], [1], [0, 0, 1, 1], [], []>} : vector<8x8xf32>, vector<8x16xf32>, vector<8x16xf32> -> vector<8x16xf32>
    %247 = arith.addf %242, %246 : vector<8x16xf32>
    %c32_224 = arith.constant 32 : index
    %c0_225 = arith.constant 0 : index
    %248 = vector.load %arg13[%c32_224, %c0_225] : memref<200x8xf32, #tpu.memory_space<vmem>>, vector<8x8xf32>
    %c8_226 = arith.constant 8 : index
    %c0_227 = arith.constant 0 : index
    %c0_228 = arith.constant 0 : index
    %249 = vector.load %arg3[%c8_226, %c0_227, %c0_228] : memref<9x8x16xf32, #tpu.memory_space<vmem>>, vector<1x8x16xf32>
    %250 = vector.shape_cast %249 : vector<1x8x16xf32> to vector<8x16xf32>
    %cst_229 = arith.constant dense<0.000000e+00> : vector<8x16xf32>
    %251 = tpu.matmul %248, %250, %cst_229 {dimension_numbers = #tpu.dot_dimension_numbers<[1], [0], [0], [1], [0, 0, 1, 1], [], []>} : vector<8x8xf32>, vector<8x16xf32>, vector<8x16xf32> -> vector<8x16xf32>
    %252 = arith.addf %247, %251 : vector<8x16xf32>
    %253 = vector.broadcast %64 : vector<1x16xf32> to vector<8x16xf32>
    %254 = arith.addf %252, %253 : vector<8x16xf32>
    %cst_230 = arith.constant 0.000000e+00 : f32
    %255 = vector.broadcast %cst_230 : f32 to vector<8x16xf32>
    %256 = arith.maximumf %254, %255 : vector<8x16xf32>
    %257 = vector.extract_strided_slice %256 {offsets = [0, 0], sizes = [2, 16], strides = [1, 1]} : vector<8x16xf32> to vector<2x16xf32>
    %c8_231 = arith.constant 8 : index
    %c0_232 = arith.constant 0 : index
    %c0_233 = arith.constant 0 : index
    %258 = vector.load %arg5[%c8_231, %c0_232, %c0_233] : memref<16x16x32xf32, #tpu.memory_space<vmem>>, vector<1x16x32xf32>
    %259 = vector.shape_cast %258 : vector<1x16x32xf32> to vector<16x32xf32>
    %cst_234 = arith.constant dense<0.000000e+00> : vector<2x32xf32>
    %260 = tpu.matmul %257, %259, %cst_234 {dimension_numbers = #tpu.dot_dimension_numbers<[1], [0], [0], [1], [0, 0, 1, 1], [], []>} : vector<2x16xf32>, vector<16x32xf32>, vector<2x32xf32> -> vector<2x32xf32>
    %261 = arith.addf %206, %260 : vector<2x32xf32>
    %262 = vector.extract_strided_slice %256 {offsets = [2, 0], sizes = [2, 16], strides = [1, 1]} : vector<8x16xf32> to vector<2x16xf32>
    %c9 = arith.constant 9 : index
    %c0_235 = arith.constant 0 : index
    %c0_236 = arith.constant 0 : index
    %263 = vector.load %arg5[%c9, %c0_235, %c0_236] : memref<16x16x32xf32, #tpu.memory_space<vmem>>, vector<1x16x32xf32>
    %264 = vector.shape_cast %263 : vector<1x16x32xf32> to vector<16x32xf32>
    %cst_237 = arith.constant dense<0.000000e+00> : vector<2x32xf32>
    %265 = tpu.matmul %262, %264, %cst_237 {dimension_numbers = #tpu.dot_dimension_numbers<[1], [0], [0], [1], [0, 0, 1, 1], [], []>} : vector<2x16xf32>, vector<16x32xf32>, vector<2x32xf32> -> vector<2x32xf32>
    %266 = arith.addf %261, %265 : vector<2x32xf32>
    %267 = vector.extract_strided_slice %256 {offsets = [4, 0], sizes = [2, 16], strides = [1, 1]} : vector<8x16xf32> to vector<2x16xf32>
    %c10_238 = arith.constant 10 : index
    %c0_239 = arith.constant 0 : index
    %c0_240 = arith.constant 0 : index
    %268 = vector.load %arg5[%c10_238, %c0_239, %c0_240] : memref<16x16x32xf32, #tpu.memory_space<vmem>>, vector<1x16x32xf32>
    %269 = vector.shape_cast %268 : vector<1x16x32xf32> to vector<16x32xf32>
    %cst_241 = arith.constant dense<0.000000e+00> : vector<2x32xf32>
    %270 = tpu.matmul %267, %269, %cst_241 {dimension_numbers = #tpu.dot_dimension_numbers<[1], [0], [0], [1], [0, 0, 1, 1], [], []>} : vector<2x16xf32>, vector<16x32xf32>, vector<2x32xf32> -> vector<2x32xf32>
    %271 = arith.addf %266, %270 : vector<2x32xf32>
    %272 = vector.extract_strided_slice %256 {offsets = [6, 0], sizes = [2, 16], strides = [1, 1]} : vector<8x16xf32> to vector<2x16xf32>
    %c11 = arith.constant 11 : index
    %c0_242 = arith.constant 0 : index
    %c0_243 = arith.constant 0 : index
    %273 = vector.load %arg5[%c11, %c0_242, %c0_243] : memref<16x16x32xf32, #tpu.memory_space<vmem>>, vector<1x16x32xf32>
    %274 = vector.shape_cast %273 : vector<1x16x32xf32> to vector<16x32xf32>
    %cst_244 = arith.constant dense<0.000000e+00> : vector<2x32xf32>
    %275 = tpu.matmul %272, %274, %cst_244 {dimension_numbers = #tpu.dot_dimension_numbers<[1], [0], [0], [1], [0, 0, 1, 1], [], []>} : vector<2x16xf32>, vector<16x32xf32>, vector<2x32xf32> -> vector<2x32xf32>
    %276 = arith.addf %271, %275 : vector<2x32xf32>
    %cst_245 = arith.constant 0.000000e+00 : f32
    %277 = vector.broadcast %cst_245 : f32 to vector<8x16xf32>
    %c30_246 = arith.constant 30 : index
    %c0_247 = arith.constant 0 : index
    %278 = vector.load %arg13[%c30_246, %c0_247] : memref<200x8xf32, #tpu.memory_space<vmem>>, vector<8x8xf32>
    %c0_248 = arith.constant 0 : index
    %c0_249 = arith.constant 0 : index
    %c0_250 = arith.constant 0 : index
    %279 = vector.load %arg3[%c0_248, %c0_249, %c0_250] : memref<9x8x16xf32, #tpu.memory_space<vmem>>, vector<1x8x16xf32>
    %280 = vector.shape_cast %279 : vector<1x8x16xf32> to vector<8x16xf32>
    %cst_251 = arith.constant dense<0.000000e+00> : vector<8x16xf32>
    %281 = tpu.matmul %278, %280, %cst_251 {dimension_numbers = #tpu.dot_dimension_numbers<[1], [0], [0], [1], [0, 0, 1, 1], [], []>} : vector<8x8xf32>, vector<8x16xf32>, vector<8x16xf32> -> vector<8x16xf32>
    %282 = arith.addf %277, %281 : vector<8x16xf32>
    %c80_252 = arith.constant 80 : index
    %c0_253 = arith.constant 0 : index
    %283 = vector.load %arg13[%c80_252, %c0_253] : memref<200x8xf32, #tpu.memory_space<vmem>>, vector<8x8xf32>
    %c1_254 = arith.constant 1 : index
    %c0_255 = arith.constant 0 : index
    %c0_256 = arith.constant 0 : index
    %284 = vector.load %arg3[%c1_254, %c0_255, %c0_256] : memref<9x8x16xf32, #tpu.memory_space<vmem>>, vector<1x8x16xf32>
    %285 = vector.shape_cast %284 : vector<1x8x16xf32> to vector<8x16xf32>
    %cst_257 = arith.constant dense<0.000000e+00> : vector<8x16xf32>
    %286 = tpu.matmul %283, %285, %cst_257 {dimension_numbers = #tpu.dot_dimension_numbers<[1], [0], [0], [1], [0, 0, 1, 1], [], []>} : vector<8x8xf32>, vector<8x16xf32>, vector<8x16xf32> -> vector<8x16xf32>
    %287 = arith.addf %282, %286 : vector<8x16xf32>
    %c32_258 = arith.constant 32 : index
    %c0_259 = arith.constant 0 : index
    %288 = vector.load %arg13[%c32_258, %c0_259] : memref<200x8xf32, #tpu.memory_space<vmem>>, vector<8x8xf32>
    %c2_260 = arith.constant 2 : index
    %c0_261 = arith.constant 0 : index
    %c0_262 = arith.constant 0 : index
    %289 = vector.load %arg3[%c2_260, %c0_261, %c0_262] : memref<9x8x16xf32, #tpu.memory_space<vmem>>, vector<1x8x16xf32>
    %290 = vector.shape_cast %289 : vector<1x8x16xf32> to vector<8x16xf32>
    %cst_263 = arith.constant dense<0.000000e+00> : vector<8x16xf32>
    %291 = tpu.matmul %288, %290, %cst_263 {dimension_numbers = #tpu.dot_dimension_numbers<[1], [0], [0], [1], [0, 0, 1, 1], [], []>} : vector<8x8xf32>, vector<8x16xf32>, vector<8x16xf32> -> vector<8x16xf32>
    %292 = arith.addf %287, %291 : vector<8x16xf32>
    %c130 = arith.constant 130 : index
    %c0_264 = arith.constant 0 : index
    %293 = vector.load %arg13[%c130, %c0_264] : memref<200x8xf32, #tpu.memory_space<vmem>>, vector<8x8xf32>
    %c3_265 = arith.constant 3 : index
    %c0_266 = arith.constant 0 : index
    %c0_267 = arith.constant 0 : index
    %294 = vector.load %arg3[%c3_265, %c0_266, %c0_267] : memref<9x8x16xf32, #tpu.memory_space<vmem>>, vector<1x8x16xf32>
    %295 = vector.shape_cast %294 : vector<1x8x16xf32> to vector<8x16xf32>
    %cst_268 = arith.constant dense<0.000000e+00> : vector<8x16xf32>
    %296 = tpu.matmul %293, %295, %cst_268 {dimension_numbers = #tpu.dot_dimension_numbers<[1], [0], [0], [1], [0, 0, 1, 1], [], []>} : vector<8x8xf32>, vector<8x16xf32>, vector<8x16xf32> -> vector<8x16xf32>
    %297 = arith.addf %292, %296 : vector<8x16xf32>
    %c180_269 = arith.constant 180 : index
    %c0_270 = arith.constant 0 : index
    %298 = vector.load %arg13[%c180_269, %c0_270] : memref<200x8xf32, #tpu.memory_space<vmem>>, vector<8x8xf32>
    %c4_271 = arith.constant 4 : index
    %c0_272 = arith.constant 0 : index
    %c0_273 = arith.constant 0 : index
    %299 = vector.load %arg3[%c4_271, %c0_272, %c0_273] : memref<9x8x16xf32, #tpu.memory_space<vmem>>, vector<1x8x16xf32>
    %300 = vector.shape_cast %299 : vector<1x8x16xf32> to vector<8x16xf32>
    %cst_274 = arith.constant dense<0.000000e+00> : vector<8x16xf32>
    %301 = tpu.matmul %298, %300, %cst_274 {dimension_numbers = #tpu.dot_dimension_numbers<[1], [0], [0], [1], [0, 0, 1, 1], [], []>} : vector<8x8xf32>, vector<8x16xf32>, vector<8x16xf32> -> vector<8x16xf32>
    %302 = arith.addf %297, %301 : vector<8x16xf32>
    %c132_275 = arith.constant 132 : index
    %c0_276 = arith.constant 0 : index
    %303 = vector.load %arg13[%c132_275, %c0_276] : memref<200x8xf32, #tpu.memory_space<vmem>>, vector<8x8xf32>
    %c5_277 = arith.constant 5 : index
    %c0_278 = arith.constant 0 : index
    %c0_279 = arith.constant 0 : index
    %304 = vector.load %arg3[%c5_277, %c0_278, %c0_279] : memref<9x8x16xf32, #tpu.memory_space<vmem>>, vector<1x8x16xf32>
    %305 = vector.shape_cast %304 : vector<1x8x16xf32> to vector<8x16xf32>
    %cst_280 = arith.constant dense<0.000000e+00> : vector<8x16xf32>
    %306 = tpu.matmul %303, %305, %cst_280 {dimension_numbers = #tpu.dot_dimension_numbers<[1], [0], [0], [1], [0, 0, 1, 1], [], []>} : vector<8x8xf32>, vector<8x16xf32>, vector<8x16xf32> -> vector<8x16xf32>
    %307 = arith.addf %302, %306 : vector<8x16xf32>
    %c40 = arith.constant 40 : index
    %c0_281 = arith.constant 0 : index
    %308 = vector.load %arg13[%c40, %c0_281] : memref<200x8xf32, #tpu.memory_space<vmem>>, vector<8x8xf32>
    %c6_282 = arith.constant 6 : index
    %c0_283 = arith.constant 0 : index
    %c0_284 = arith.constant 0 : index
    %309 = vector.load %arg3[%c6_282, %c0_283, %c0_284] : memref<9x8x16xf32, #tpu.memory_space<vmem>>, vector<1x8x16xf32>
    %310 = vector.shape_cast %309 : vector<1x8x16xf32> to vector<8x16xf32>
    %cst_285 = arith.constant dense<0.000000e+00> : vector<8x16xf32>
    %311 = tpu.matmul %308, %310, %cst_285 {dimension_numbers = #tpu.dot_dimension_numbers<[1], [0], [0], [1], [0, 0, 1, 1], [], []>} : vector<8x8xf32>, vector<8x16xf32>, vector<8x16xf32> -> vector<8x16xf32>
    %312 = arith.addf %307, %311 : vector<8x16xf32>
    %c90_286 = arith.constant 90 : index
    %c0_287 = arith.constant 0 : index
    %313 = vector.load %arg13[%c90_286, %c0_287] : memref<200x8xf32, #tpu.memory_space<vmem>>, vector<8x8xf32>
    %c7_288 = arith.constant 7 : index
    %c0_289 = arith.constant 0 : index
    %c0_290 = arith.constant 0 : index
    %314 = vector.load %arg3[%c7_288, %c0_289, %c0_290] : memref<9x8x16xf32, #tpu.memory_space<vmem>>, vector<1x8x16xf32>
    %315 = vector.shape_cast %314 : vector<1x8x16xf32> to vector<8x16xf32>
    %cst_291 = arith.constant dense<0.000000e+00> : vector<8x16xf32>
    %316 = tpu.matmul %313, %315, %cst_291 {dimension_numbers = #tpu.dot_dimension_numbers<[1], [0], [0], [1], [0, 0, 1, 1], [], []>} : vector<8x8xf32>, vector<8x16xf32>, vector<8x16xf32> -> vector<8x16xf32>
    %317 = arith.addf %312, %316 : vector<8x16xf32>
    %c42_292 = arith.constant 42 : index
    %c0_293 = arith.constant 0 : index
    %318 = vector.load %arg13[%c42_292, %c0_293] : memref<200x8xf32, #tpu.memory_space<vmem>>, vector<8x8xf32>
    %c8_294 = arith.constant 8 : index
    %c0_295 = arith.constant 0 : index
    %c0_296 = arith.constant 0 : index
    %319 = vector.load %arg3[%c8_294, %c0_295, %c0_296] : memref<9x8x16xf32, #tpu.memory_space<vmem>>, vector<1x8x16xf32>
    %320 = vector.shape_cast %319 : vector<1x8x16xf32> to vector<8x16xf32>
    %cst_297 = arith.constant dense<0.000000e+00> : vector<8x16xf32>
    %321 = tpu.matmul %318, %320, %cst_297 {dimension_numbers = #tpu.dot_dimension_numbers<[1], [0], [0], [1], [0, 0, 1, 1], [], []>} : vector<8x8xf32>, vector<8x16xf32>, vector<8x16xf32> -> vector<8x16xf32>
    %322 = arith.addf %317, %321 : vector<8x16xf32>
    %323 = vector.broadcast %64 : vector<1x16xf32> to vector<8x16xf32>
    %324 = arith.addf %322, %323 : vector<8x16xf32>
    %cst_298 = arith.constant 0.000000e+00 : f32
    %325 = vector.broadcast %cst_298 : f32 to vector<8x16xf32>
    %326 = arith.maximumf %324, %325 : vector<8x16xf32>
    %327 = vector.extract_strided_slice %326 {offsets = [0, 0], sizes = [2, 16], strides = [1, 1]} : vector<8x16xf32> to vector<2x16xf32>
    %c12_299 = arith.constant 12 : index
    %c0_300 = arith.constant 0 : index
    %c0_301 = arith.constant 0 : index
    %328 = vector.load %arg5[%c12_299, %c0_300, %c0_301] : memref<16x16x32xf32, #tpu.memory_space<vmem>>, vector<1x16x32xf32>
    %329 = vector.shape_cast %328 : vector<1x16x32xf32> to vector<16x32xf32>
    %cst_302 = arith.constant dense<0.000000e+00> : vector<2x32xf32>
    %330 = tpu.matmul %327, %329, %cst_302 {dimension_numbers = #tpu.dot_dimension_numbers<[1], [0], [0], [1], [0, 0, 1, 1], [], []>} : vector<2x16xf32>, vector<16x32xf32>, vector<2x32xf32> -> vector<2x32xf32>
    %331 = arith.addf %276, %330 : vector<2x32xf32>
    %332 = vector.extract_strided_slice %326 {offsets = [2, 0], sizes = [2, 16], strides = [1, 1]} : vector<8x16xf32> to vector<2x16xf32>
    %c13 = arith.constant 13 : index
    %c0_303 = arith.constant 0 : index
    %c0_304 = arith.constant 0 : index
    %333 = vector.load %arg5[%c13, %c0_303, %c0_304] : memref<16x16x32xf32, #tpu.memory_space<vmem>>, vector<1x16x32xf32>
    %334 = vector.shape_cast %333 : vector<1x16x32xf32> to vector<16x32xf32>
    %cst_305 = arith.constant dense<0.000000e+00> : vector<2x32xf32>
    %335 = tpu.matmul %332, %334, %cst_305 {dimension_numbers = #tpu.dot_dimension_numbers<[1], [0], [0], [1], [0, 0, 1, 1], [], []>} : vector<2x16xf32>, vector<16x32xf32>, vector<2x32xf32> -> vector<2x32xf32>
    %336 = arith.addf %331, %335 : vector<2x32xf32>
    %337 = vector.extract_strided_slice %326 {offsets = [4, 0], sizes = [2, 16], strides = [1, 1]} : vector<8x16xf32> to vector<2x16xf32>
    %c14 = arith.constant 14 : index
    %c0_306 = arith.constant 0 : index
    %c0_307 = arith.constant 0 : index
    %338 = vector.load %arg5[%c14, %c0_306, %c0_307] : memref<16x16x32xf32, #tpu.memory_space<vmem>>, vector<1x16x32xf32>
    %339 = vector.shape_cast %338 : vector<1x16x32xf32> to vector<16x32xf32>
    %cst_308 = arith.constant dense<0.000000e+00> : vector<2x32xf32>
    %340 = tpu.matmul %337, %339, %cst_308 {dimension_numbers = #tpu.dot_dimension_numbers<[1], [0], [0], [1], [0, 0, 1, 1], [], []>} : vector<2x16xf32>, vector<16x32xf32>, vector<2x32xf32> -> vector<2x32xf32>
    %341 = arith.addf %336, %340 : vector<2x32xf32>
    %342 = vector.extract_strided_slice %326 {offsets = [6, 0], sizes = [2, 16], strides = [1, 1]} : vector<8x16xf32> to vector<2x16xf32>
    %c15 = arith.constant 15 : index
    %c0_309 = arith.constant 0 : index
    %c0_310 = arith.constant 0 : index
    %343 = vector.load %arg5[%c15, %c0_309, %c0_310] : memref<16x16x32xf32, #tpu.memory_space<vmem>>, vector<1x16x32xf32>
    %344 = vector.shape_cast %343 : vector<1x16x32xf32> to vector<16x32xf32>
    %cst_311 = arith.constant dense<0.000000e+00> : vector<2x32xf32>
    %345 = tpu.matmul %342, %344, %cst_311 {dimension_numbers = #tpu.dot_dimension_numbers<[1], [0], [0], [1], [0, 0, 1, 1], [], []>} : vector<2x16xf32>, vector<16x32xf32>, vector<2x32xf32> -> vector<2x32xf32>
    %346 = arith.addf %341, %345 : vector<2x32xf32>
    %347 = vector.broadcast %65 : vector<1x32xf32> to vector<2x32xf32>
    %348 = arith.addf %346, %347 : vector<2x32xf32>
    %cst_312 = arith.constant 0.000000e+00 : f32
    %349 = vector.broadcast %cst_312 : f32 to vector<2x32xf32>
    %350 = arith.maximumf %348, %349 : vector<2x32xf32>
    %c0_313 = arith.constant 0 : index
    %c0_314 = arith.constant 0 : index
    %351 = vector.load %arg7[%c0_313, %c0_314] : memref<32x6xf32, #tpu.memory_space<vmem>>, vector<32x6xf32>
    %cst_315 = arith.constant dense<0.000000e+00> : vector<2x6xf32>
    %352 = tpu.matmul %350, %351, %cst_315 {dimension_numbers = #tpu.dot_dimension_numbers<[1], [0], [0], [1], [0, 0, 1, 1], [], []>} : vector<2x32xf32>, vector<32x6xf32>, vector<2x6xf32> -> vector<2x6xf32>
    %c0_316 = arith.constant 0 : index
    %c0_317 = arith.constant 0 : index
    %353 = vector.load %arg8[%c0_316, %c0_317] : memref<1x6xf32, #tpu.memory_space<vmem>>, vector<1x6xf32>
    %354 = vector.broadcast %353 : vector<1x6xf32> to vector<2x6xf32>
    %355 = arith.addf %352, %354 : vector<2x6xf32>
    %c0_318 = arith.constant 0 : index
    %c0_319 = arith.constant 0 : index
    %356 = vector.load %arg9[%c0_318, %c0_319] : memref<32x6xf32, #tpu.memory_space<vmem>>, vector<32x6xf32>
    %cst_320 = arith.constant dense<0.000000e+00> : vector<2x6xf32>
    %357 = tpu.matmul %350, %356, %cst_320 {dimension_numbers = #tpu.dot_dimension_numbers<[1], [0], [0], [1], [0, 0, 1, 1], [], []>} : vector<2x32xf32>, vector<32x6xf32>, vector<2x6xf32> -> vector<2x6xf32>
    %c0_321 = arith.constant 0 : index
    %c0_322 = arith.constant 0 : index
    %358 = vector.load %arg10[%c0_321, %c0_322] : memref<1x6xf32, #tpu.memory_space<vmem>>, vector<1x6xf32>
    %359 = vector.broadcast %358 : vector<1x6xf32> to vector<2x6xf32>
    %360 = arith.addf %357, %359 : vector<2x6xf32>
    %cst_323 = arith.constant -2.000000e+01 : f32
    %cst_324 = arith.constant 2.000000e+00 : f32
    %361 = vector.broadcast %cst_323 : f32 to vector<2x6xf32>
    %362 = arith.maximumf %361, %360 : vector<2x6xf32>
    %363 = vector.broadcast %cst_324 : f32 to vector<2x6xf32>
    %364 = arith.minimumf %363, %362 : vector<2x6xf32>
    %365 = math.exp %364 : vector<2x6xf32>
    %c0_325 = arith.constant 0 : index
    %c0_326 = arith.constant 0 : index
    %366 = vector.load %arg11[%c0_325, %c0_326] : memref<2x6xf32, #tpu.memory_space<vmem>>, vector<2x6xf32>
    %367 = arith.mulf %365, %366 : vector<2x6xf32>
    %368 = arith.addf %355, %367 : vector<2x6xf32>
    %369 = math.tanh %368 : vector<2x6xf32>
    %cst_327 = arith.constant 2.000000e+00 : f32
    %370 = vector.broadcast %cst_327 : f32 to vector<2x6xf32>
    %371 = arith.mulf %370, %369 : vector<2x6xf32>
    %c0_328 = arith.constant 0 : index
    %c0_329 = arith.constant 0 : index
    %372 = vector.load %arg12[%c0_328, %c0_329] : memref<2x6xf32, #tpu.memory_space<vmem>>, vector<2x6xf32>
    tpu.vector_store %arg12[%c0_328, %c0_329], %371 {strides = array<i32>} : memref<2x6xf32, #tpu.memory_space<vmem>>, vector<2x6xf32>,
    return
  }
}

</mosaic_0001>

<llo_original>
// kernel: gaussian_actor_forward.1
$region0: #{gaussian_actor_forward.1}
  #allocation0 [shape = 'u32[]', space=smem, size = 0x4, offset = 0x4, fixed_abs, tag = 'smem constant byte address 0x4 - core index']
  #allocation1 [shape = 'u32[144,128]{1,0:T(1,128)}', space=vmem, size = 0x12000, scoped, tag = 'internal scratch']
  #allocation2 [shape = 'f32[200,8]{1,0:T(8,128)}', space=vmem, size = 0x19000, scoped, tag = 'scratch operand']
  %s0 = inlined_call_operand.vmem [shape: f32[4,32,36], index: 0, kind: input, shape index: {}]
  %s1 = inlined_call_operand.vmem [shape: f32[36,8], index: 1, kind: input, shape index: {}]
  %s2 = inlined_call_operand.vmem [shape: f32[1,8], index: 2, kind: input, shape index: {}]
  %s3 = inlined_call_operand.vmem [shape: f32[9,8,16], index: 3, kind: input, shape index: {}]
  %s4 = inlined_call_operand.vmem [shape: f32[1,16], index: 4, kind: input, shape index: {}]
  %s5 = inlined_call_operand.vmem [shape: f32[16,16,32], index: 5, kind: input, shape index: {}]
  %s6 = inlined_call_operand.vmem [shape: f32[1,32], index: 6, kind: input, shape index: {}]
  %s7 = inlined_call_operand.vmem [shape: f32[32,6], index: 7, kind: input, shape index: {}]
  %s8 = inlined_call_operand.vmem [shape: f32[1,6], index: 8, kind: input, shape index: {}]
  %s9 = inlined_call_operand.vmem [shape: f32[32,6], index: 9, kind: input, shape index: {}]
  %s10 = inlined_call_operand.vmem [shape: f32[1,6], index: 10, kind: input, shape index: {}]
  %s11 = inlined_call_operand.vmem [shape: f32[2,6], index: 11, kind: input, shape index: {}]
  %s12 = inlined_call_operand.hbm [shape: f32[2,6], index: 12, kind: output, shape index: {}]
  %s13 = sld [smem:[#allocation0]]
  $region58: #{gaussian_actor_forward.1} parent=0
    _
  %s15 = ssub.s32 1, %s13
  %s16 = scalar_select 0, %s15, %s13
  $region1: #{gaussian_actor_forward.1} parent=0
    #allocation3 [shape = 'u8[1024]{0}', space=vmem, size = 0x400, scoped, tag = 'output window, operand 0, single buffered']
    #allocation4 [shape = 's32[1]{0}', space=sflag, size = 0x4, scoped, tag = 'scoped memory for gaussian_actor_forward.1']
    %17 = vsyncpa [#allocation4], 0
    // Predicated region
    $region2: #{gaussian_actor_forward.1} parent=1 // pred_check
      _
    $region3: #{gaussian_actor_forward.1} parent=1 // pred_check_branch
      %19 = sbr.rel (0) target = $region5
    $region4: #{gaussian_actor_forward.1} parent=1 // pred_region
      _
    $region5: #{gaussian_actor_forward.1} parent=1 // pred_fallthru
      _
    // Predicated region
    $region6: #{gaussian_actor_forward.1} parent=1 // pred_check
      _
    $region7: #{gaussian_actor_forward.1} parent=1 // pred_check_branch
      %21 = sbr.rel (0) target = $region9
    $region8: #{gaussian_actor_forward.1} parent=1 // pred_region
      _
    $region9: #{gaussian_actor_forward.1} parent=1 // pred_fallthru
      _
    // Predicated region
    $region10: #{gaussian_actor_forward.1} parent=1 // pred_check
      _
    $region11: #{gaussian_actor_forward.1} parent=1 // pred_check_branch
      %23 = sbr.rel (0) target = $region13
    $region12: #{gaussian_actor_forward.1} parent=1 // pred_region
      _
    $region13: #{gaussian_actor_forward.1} parent=1 // pred_fallthru
      _
    // Predicated region
    $region14: #{gaussian_actor_forward.1} parent=1 // pred_check
      _
    $region15: #{gaussian_actor_forward.1} parent=1 // pred_check_branch
      %25 = sbr.rel (0) target = $region17
    $region16: #{gaussian_actor_forward.1} parent=1 // pred_region
      _
    $region17: #{gaussian_actor_forward.1} parent=1 // pred_fallthru
      _
    // Predicated region
    $region18: #{gaussian_actor_forward.1} parent=1 // pred_check
      _
    $region19: #{gaussian_actor_forward.1} parent=1 // pred_check_branch
      %27 = sbr.rel (0) target = $region21
    $region20: #{gaussian_actor_forward.1} parent=1 // pred_region
      _
    $region21: #{gaussian_actor_forward.1} parent=1 // pred_fallthru
      _
    // Predicated region
    $region22: #{gaussian_actor_forward.1} parent=1 // pred_check
      _
    $region23: #{gaussian_actor_forward.1} parent=1 // pred_check_branch
      %29 = sbr.rel (0) target = $region25
    $region24: #{gaussian_actor_forward.1} parent=1 // pred_region
      _
    $region25: #{gaussian_actor_forward.1} parent=1 // pred_fallthru
      _
    // Predicated region
    $region26: #{gaussian_actor_forward.1} parent=1 // pred_check
      _
    $region27: #{gaussian_actor_forward.1} parent=1 // pred_check_branch
      %31 = sbr.rel (0) target = $region29
    $region28: #{gaussian_actor_forward.1} parent=1 // pred_region
      _
    $region29: #{gaussian_actor_forward.1} parent=1 // pred_fallthru
      _
    // Predicated region
    $region30: #{gaussian_actor_forward.1} parent=1 // pred_check
      _
    $region31: #{gaussian_actor_forward.1} parent=1 // pred_check_branch
      %33 = sbr.rel (0) target = $region33
    $region32: #{gaussian_actor_forward.1} parent=1 // pred_region
      _
    $region33: #{gaussian_actor_forward.1} parent=1 // pred_fallthru
      _
    // Predicated region
    $region34: #{gaussian_actor_forward.1} parent=1 // pred_check
      _
    $region35: #{gaussian_actor_forward.1} parent=1 // pred_check_branch
      %35 = sbr.rel (0) target = $region37
    $region36: #{gaussian_actor_forward.1} parent=1 // pred_region
      _
    $region37: #{gaussian_actor_forward.1} parent=1 // pred_fallthru
      _
    // Predicated region
    $region38: #{gaussian_actor_forward.1} parent=1 // pred_check
      _
    $region39: #{gaussian_actor_forward.1} parent=1 // pred_check_branch
      %37 = sbr.rel (0) target = $region41
    $region40: #{gaussian_actor_forward.1} parent=1 // pred_region
      _
    $region41: #{gaussian_actor_forward.1} parent=1 // pred_fallthru
      _
    // Predicated region
    $region42: #{gaussian_actor_forward.1} parent=1 // pred_check
      _
    $region43: #{gaussian_actor_forward.1} parent=1 // pred_check_branch
      %39 = sbr.rel (0) target = $region45
    $region44: #{gaussian_actor_forward.1} parent=1 // pred_region
      _
    $region45: #{gaussian_actor_forward.1} parent=1 // pred_fallthru
      _
    // Predicated region
    $region46: #{gaussian_actor_forward.1} parent=1 // pred_check
      _
    $region47: #{gaussian_actor_forward.1} parent=1 // pred_check_branch
      %41 = sbr.rel (0) target = $region49
    $region48: #{gaussian_actor_forward.1} parent=1 // pred_region
      _
    $region49: #{gaussian_actor_forward.1} parent=1 // pred_fallthru
      _
    %vm42 = vcmask 64512
    %43 = vst.msk [vmem:[#allocation2] sm:$0xff] %vm42, 0.0
    %44 = vst.msk [vmem:[#allocation2 + $0x8] sm:$0xff] %vm42, 0.0
    %45 = vst.msk [vmem:[#allocation2 + $0x10] sm:$0xff] %vm42, 0.0
    %46 = vst.msk [vmem:[#allocation2 + $0x18] sm:$0xff] %vm42, 0.0
    %47 = vst.msk [vmem:[#allocation2 + $0x20] sm:$0xff] %vm42, 0.0
    %48 = vst.msk [vmem:[#allocation2 + $0x28] sm:$0xff] %vm42, 0.0
    %49 = vst.msk [vmem:[#allocation2 + $0x30] sm:$0xff] %vm42, 0.0
    %50 = vst.msk [vmem:[#allocation2 + $0x38] sm:$0xff] %vm42, 0.0
    %51 = vst.msk [vmem:[#allocation2 + $0x40] sm:$0xff] %vm42, 0.0
    %52 = vst.msk [vmem:[#allocation2 + $0x48] sm:$0xff] %vm42, 0.0
    %53 = vst.msk [vmem:[#allocation2 + $0x50] sm:$0xff] %vm42, 0.0
    %54 = vst.msk [vmem:[#allocation2 + $0x58] sm:$0xff] %vm42, 0.0
    %55 = vst.msk [vmem:[#allocation2 + $0x60] sm:$0xff] %vm42, 0.0
    %56 = vst.msk [vmem:[#allocation2 + $0x68] sm:$0xff] %vm42, 0.0
    %57 = vst.msk [vmem:[#allocation2 + $0x70] sm:$0xff] %vm42, 0.0
    %58 = vst.msk [vmem:[#allocation2 + $0x78] sm:$0xff] %vm42, 0.0
    %59 = vst.msk [vmem:[#allocation2 + $0x80] sm:$0xff] %vm42, 0.0
    %60 = vst.msk [vmem:[#allocation2 + $0x88] sm:$0xff] %vm42, 0.0
    %61 = vst.msk [vmem:[#allocation2 + $0x90] sm:$0xff] %vm42, 0.0
    %62 = vst.msk [vmem:[#allocation2 + $0x98] sm:$0xff] %vm42, 0.0
    %63 = vst.msk [vmem:[#allocation2 + $0xa0] sm:$0xff] %vm42, 0.0
    %64 = vst.msk [vmem:[#allocation2 + $0xa8] sm:$0xff] %vm42, 0.0
    %65 = vst.msk [vmem:[#allocation2 + $0xb0] sm:$0xff] %vm42, 0.0
    %66 = vst.msk [vmem:[#allocation2 + $0xb8] sm:$0xff] %vm42, 0.0
    %67 = vst.msk [vmem:[#allocation2 + $0xc0] sm:$0xff] %vm42, 0.0
    %v68 = vld [vmem:[%s1] sm:$0xff]
    %v69 = vld [vmem:[%s1 + $0x8] sm:$0xff]
    %v70 = vld [vmem:[%s1 + $0x10] sm:$0xff]
    %v71 = vld [vmem:[%s1 + $0x18] sm:$0xff]
    %v72 = vld [vmem:[%s1 + $0x20] sm:$0xf]
    %v73 = vld [vmem:[%s2] sm:$0x1]
    %v74 = vld [vmem:[%s0] sm:$0xff]
    %v75 = vld [vmem:[%s0 + $0x8] sm:$0xff]
    %v76 = vld [vmem:[%s0 + $0x10] sm:$0xff]
    %v77 = vld [vmem:[%s0 + $0x18] sm:$0xff]
    %v79 = vlaneseq
    %v80 = vshrl.u32 %v79, 7
    %v81 = vsub.s32 0, %v80
    %v82 = vrot.slane %v73, %v81
    %vm84 = vcmask 293888
    %v86 = vsel %vm84, %v74, 0
    %v89 = vsel %vm84, %v75, 0
    %v92 = vsel %vm84, %v76, 0
    %v95 = vsel %vm84, %v77, 0
    %vm97 = vcmask 1043456
    %v99 = vsel %vm97, %v72, 0
    %101 = vmatprep.subr.mxu0 0.0
    %102 = vmatpush1.msra.mxu0 %v68
    %103 = vmatprep.subr.mxu0 0.0
    %104 = vmatpush1.msra.mxu0 %v69
    %105 = vmatprep.subr.mxu0 0.0
    %106 = vmatpush1.msra.mxu0 %v70
    %107 = vmatprep.subr.mxu0 0.0
    %108 = vmatpush1.msra.mxu0 %v71
    %109 = vmatprep.subr.mxu0 0.0
    %110 = vmatpush1.msra.mxu0 %v99
    %111 = vmatprep.subr.mxu0 0.0
    %112 = vmatpush1.msra.mxu0 0.0
    %113 = vmatprep.subr.mxu0 0.0
    %114 = vmatpush1.msra.mxu0 0.0
    %115 = vmatprep.subr.mxu0 0.0
    %116 = vmatpush1.msra.mxu0 0.0
    %117 = vmatprep.subr.mxu0 0.0
    %118 = vmatpush1.msra.mxu0 0.0
    %119 = vmatprep.subr.mxu0 0.0
    %120 = vmatpush1.msra.mxu0 0.0
    %121 = vmatprep.subr.mxu0 0.0
    %122 = vmatpush1.msra.mxu0 0.0
    %123 = vmatprep.subr.mxu0 0.0
    %124 = vmatpush1.msra.mxu0 0.0
    %125 = vmatprep.subr.mxu0 0.0
    %126 = vmatpush1.msra.mxu0 0.0
    %127 = vmatprep.subr.mxu0 0.0
    %128 = vmatpush1.msra.mxu0 0.0
    %129 = vmatprep.subr.mxu0 0.0
    %130 = vmatpush1.msra.mxu0 0.0
    %131 = vmatprep.subr.mxu0 0.0
    %132 = vmatpush1.msra.mxu0 0.0
    %133 = vmatprep.subr.mxu0 0.0
    %134 = vmatpush1.msra.mxu0 0.0
    %135 = vmatprep.subr.mxu0 0.0
    %136 = vmatpush1.msra.mxu0 0.0
    %137 = vmatprep.subr.mxu0 0.0
    %138 = vmatpush1.msra.mxu0 0.0
    %139 = vmatprep.subr.mxu0 0.0
    %140 = vmatpush1.msra.mxu0 0.0
    %141 = vmatprep.subr.mxu0 0.0
    %142 = vmatpush1.msra.mxu0 0.0
    %143 = vmatprep.subr.mxu0 0.0
    %144 = vmatpush1.msra.mxu0 0.0
    %145 = vmatprep.subr.mxu0 0.0
    %146 = vmatpush1.msra.mxu0 0.0
    %147 = vmatprep.subr.mxu0 0.0
    %148 = vmatpush1.msra.mxu0 0.0
    %149 = vmatprep.subr.mxu0 0.0
    %150 = vmatpush1.msra.mxu0 0.0
    %151 = vmatprep.subr.mxu0 0.0
    %152 = vmatpush1.msra.mxu0 0.0
    %153 = vmatprep.subr.mxu0 0.0
    %154 = vmatpush1.msra.mxu0 0.0
    %155 = vmatprep.subr.mxu0 0.0
    %156 = vmatpush1.msra.mxu0 0.0
    %157 = vmatprep.subr.mxu0 0.0
    %158 = vmatpush1.msra.mxu0 0.0
    %159 = vmatprep.subr.mxu0 0.0
    %160 = vmatpush1.msra.mxu0 0.0
    %161 = vmatprep.subr.mxu0 0.0
    %162 = vmatpush1.msra.mxu0 0.0
    %163 = vmatprep.subr.mxu0 0.0
    %164 = vmatpush1.msra.mxu0 0.0
    %165 = vmatprep.mubr.f32.mxu0 0.0
    %166 = vmatmul.mubr.f32.gmra.mrb[0].mxu0 %v86
    %v167 = vpop.f32.mrb[0].mxu0
    %v168 = vadd.f32 %v82, %v167
    %v169 = vpop.f32.mrb[0].mxu0
    %170 = vmatprep.mubr.f32.mxu0 0.0
    %171 = vmatmul.mubr.f32.gmra.mrb[0].mxu0 %v89
    %v172 = vpop.f32.mrb[0].mxu0
    %v173 = vadd.f32 %v82, %v172
    %v174 = vpop.f32.mrb[0].mxu0
    %175 = vmatprep.mubr.f32.mxu0 0.0
    %176 = vmatmul.mubr.f32.gmra.mrb[0].mxu0 %v92
    %v177 = vpop.f32.mrb[0].mxu0
    %v178 = vadd.f32 %v82, %v177
    %v179 = vpop.f32.mrb[0].mxu0
    %180 = vmatprep.mubr.f32.mxu0 0.0
    %181 = vmatmul.mubr.f32.gmra.mrb[0].mxu0 %v95
    %v182 = vpop.f32.mrb[0].mxu0
    %v183 = vadd.f32 %v82, %v182
    %v184 = vpop.f32.mrb[0].mxu0
    %185 = vdwg.mxu0
    %v186 = vmax.f32 %v168, 0.0
    %v187 = vmax.f32 %v173, 0.0
    %v188 = vmax.f32 %v178, 0.0
    %v189 = vmax.f32 %v183, 0.0
    %190 = vst.msk [vmem:[#allocation2 + $0x96] sm:$0xff] %vm42, %v186
    %191 = vst.msk [vmem:[#allocation2 + $0xa0] sm:$0xff] %vm42, %v187
    %192 = vst.msk [vmem:[#allocation2 + $0xaa] sm:$0xff] %vm42, %v188
    %193 = vst.msk [vmem:[#allocation2 + $0xb4] sm:$0xff] %vm42, %v189
    %s194 = scalar_lea.vmem %s0, 32
    %v195 = vld [vmem:[%s194] sm:$0xff]
    %v196 = vld [vmem:[%s194 + $0x8] sm:$0xff]
    %v197 = vld [vmem:[%s194 + $0x10] sm:$0xff]
    %v198 = vld [vmem:[%s194 + $0x18] sm:$0xff]
    %v200 = vsel %vm84, %v195, 0
    %v203 = vsel %vm84, %v196, 0
    %v206 = vsel %vm84, %v197, 0
    %v209 = vsel %vm84, %v198, 0
    %211 = vmatprep.subr.mxu0 0.0
    %212 = vmatpush1.msra.mxu0 %v68
    %213 = vmatprep.subr.mxu0 0.0
    %214 = vmatpush1.msra.mxu0 %v69
    %215 = vmatprep.subr.mxu0 0.0
    %216 = vmatpush1.msra.mxu0 %v70
    %217 = vmatprep.subr.mxu0 0.0
    %218 = vmatpush1.msra.mxu0 %v71
    %219 = vmatprep.subr.mxu0 0.0
    %220 = vmatpush1.msra.mxu0 %v99
    %221 = vmatprep.subr.mxu0 0.0
    %222 = vmatpush1.msra.mxu0 0.0
    %223 = vmatprep.subr.mxu0 0.0
    %224 = vmatpush1.msra.mxu0 0.0
    %225 = vmatprep.subr.mxu0 0.0
    %226 = vmatpush1.msra.mxu0 0.0
    %227 = vmatprep.subr.mxu0 0.0
    %228 = vmatpush1.msra.mxu0 0.0
    %229 = vmatprep.subr.mxu0 0.0
    %230 = vmatpush1.msra.mxu0 0.0
    %231 = vmatprep.subr.mxu0 0.0
    %232 = vmatpush1.msra.mxu0 0.0
    %233 = vmatprep.subr.mxu0 0.0
    %234 = vmatpush1.msra.mxu0 0.0
    %235 = vmatprep.subr.mxu0 0.0
    %236 = vmatpush1.msra.mxu0 0.0
    %237 = vmatprep.subr.mxu0 0.0
    %238 = vmatpush1.msra.mxu0 0.0
    %239 = vmatprep.subr.mxu0 0.0
    %240 = vmatpush1.msra.mxu0 0.0
    %241 = vmatprep.subr.mxu0 0.0
    %242 = vmatpush1.msra.mxu0 0.0
    %243 = vmatprep.subr.mxu0 0.0
    %244 = vmatpush1.msra.mxu0 0.0
    %245 = vmatprep.subr.mxu0 0.0
    %246 = vmatpush1.msra.mxu0 0.0
    %247 = vmatprep.subr.mxu0 0.0
    %248 = vmatpush1.msra.mxu0 0.0
    %249 = vmatprep.subr.mxu0 0.0
    %250 = vmatpush1.msra.mxu0 0.0
    %251 = vmatprep.subr.mxu0 0.0
    %252 = vmatpush1.msra.mxu0 0.0
    %253 = vmatprep.subr.mxu0 0.0
    %254 = vmatpush1.msra.mxu0 0.0
    %255 = vmatprep.subr.mxu0 0.0
    %256 = vmatpush1.msra.mxu0 0.0
    %257 = vmatprep.subr.mxu0 0.0
    %258 = vmatpush1.msra.mxu0 0.0
    %259 = vmatprep.subr.mxu0 0.0
    %260 = vmatpush1.msra.mxu0 0.0
    %261 = vmatprep.subr.mxu0 0.0
    %262 = vmatpush1.msra.mxu0 0.0
    %263 = vmatprep.subr.mxu0 0.0
    %264 = vmatpush1.msra.mxu0 0.0
    %265 = vmatprep.subr.mxu0 0.0
    %266 = vmatpush1.msra.mxu0 0.0
    %267 = vmatprep.subr.mxu0 0.0
    %268 = vmatpush1.msra.mxu0 0.0
    %269 = vmatprep.subr.mxu0 0.0
    %270 = vmatpush1.msra.mxu0 0.0
    %271 = vmatprep.subr.mxu0 0.0
    %272 = vmatpush1.msra.mxu0 0.0
    %273 = vmatprep.subr.mxu0 0.0
    %274 = vmatpush1.msra.mxu0 0.0
    %275 = vmatprep.mubr.f32.mxu0 0.0
    %276 = vmatmul.mubr.f32.gmra.mrb[0].mxu0 %v200
    %v277 = vpop.f32.mrb[0].mxu0
    %v278 = vadd.f32 %v82, %v277
    %v279 = vpop.f32.mrb[0].mxu0
    %280 = vmatprep.mubr.f32.mxu0 0.0
    %281 = vmatmul.mubr.f32.gmra.mrb[0].mxu0 %v203
    %v282 = vpop.f32.mrb[0].mxu0
    %v283 = vadd.f32 %v82, %v282
    %v284 = vpop.f32.mrb[0].mxu0
    %285 = vmatprep.mubr.f32.mxu0 0.0
    %286 = vmatmul.mubr.f32.gmra.mrb[0].mxu0 %v206
    %v287 = vpop.f32.mrb[0].mxu0
    %v288 = vadd.f32 %v82, %v287
    %v289 = vpop.f32.mrb[0].mxu0
    %290 = vmatprep.mubr.f32.mxu0 0.0
    %291 = vmatmul.mubr.f32.gmra.mrb[0].mxu0 %v209
    %v292 = vpop.f32.mrb[0].mxu0
    %v293 = vadd.f32 %v82, %v292
    %v294 = vpop.f32.mrb[0].mxu0
    %295 = vdwg.mxu0
    %v296 = vmax.f32 %v278, 0.0
    %v297 = vmax.f32 %v283, 0.0
    %v298 = vmax.f32 %v288, 0.0
    %v299 = vmax.f32 %v293, 0.0
    %300 = vst.msk [vmem:[#allocation2 + $0x66] sm:$0xff] %vm42, %v296
    %301 = vst.msk [vmem:[#allocation2 + $0x70] sm:$0xff] %vm42, %v297
    %302 = vst.msk [vmem:[#allocation2 + $0x7a] sm:$0xff] %vm42, %v298
    %303 = vst.msk [vmem:[#allocation2 + $0x84] sm:$0xff] %vm42, %v299
    %s304 = scalar_lea.vmem %s0, 64
    %v305 = vld [vmem:[%s304] sm:$0xff]
    %v306 = vld [vmem:[%s304 + $0x8] sm:$0xff]
    %v307 = vld [vmem:[%s304 + $0x10] sm:$0xff]
    %v308 = vld [vmem:[%s304 + $0x18] sm:$0xff]
    %v310 = vsel %vm84, %v305, 0
    %v313 = vsel %vm84, %v306, 0
    %v316 = vsel %vm84, %v307, 0
    %v319 = vsel %vm84, %v308, 0
    %321 = vmatprep.subr.mxu0 0.0
    %322 = vmatpush1.msra.mxu0 %v68
    %323 = vmatprep.subr.mxu0 0.0
    %324 = vmatpush1.msra.mxu0 %v69
    %325 = vmatprep.subr.mxu0 0.0
    %326 = vmatpush1.msra.mxu0 %v70
    %327 = vmatprep.subr.mxu0 0.0
    %328 = vmatpush1.msra.mxu0 %v71
    %329 = vmatprep.subr.mxu0 0.0
    %330 = vmatpush1.msra.mxu0 %v99
    %331 = vmatprep.subr.mxu0 0.0
    %332 = vmatpush1.msra.mxu0 0.0
    %333 = vmatprep.subr.mxu0 0.0
    %334 = vmatpush1.msra.mxu0 0.0
    %335 = vmatprep.subr.mxu0 0.0
    %336 = vmatpush1.msra.mxu0 0.0
    %337 = vmatprep.subr.mxu0 0.0
    %338 = vmatpush1.msra.mxu0 0.0
    %339 = vmatprep.subr.mxu0 0.0
    %340 = vmatpush1.msra.mxu0 0.0
    %341 = vmatprep.subr.mxu0 0.0
    %342 = vmatpush1.msra.mxu0 0.0
    %343 = vmatprep.subr.mxu0 0.0
    %344 = vmatpush1.msra.mxu0 0.0
    %345 = vmatprep.subr.mxu0 0.0
    %346 = vmatpush1.msra.mxu0 0.0
    %347 = vmatprep.subr.mxu0 0.0
    %348 = vmatpush1.msra.mxu0 0.0
    %349 = vmatprep.subr.mxu0 0.0
    %350 = vmatpush1.msra.mxu0 0.0
    %351 = vmatprep.subr.mxu0 0.0
    %352 = vmatpush1.msra.mxu0 0.0
    %353 = vmatprep.subr.mxu0 0.0
    %354 = vmatpush1.msra.mxu0 0.0
    %355 = vmatprep.subr.mxu0 0.0
    %356 = vmatpush1.msra.mxu0 0.0
    %357 = vmatprep.subr.mxu0 0.0
    %358 = vmatpush1.msra.mxu0 0.0
    %359 = vmatprep.subr.mxu0 0.0
    %360 = vmatpush1.msra.mxu0 0.0
    %361 = vmatprep.subr.mxu0 0.0
    %362 = vmatpush1.msra.mxu0 0.0
    %363 = vmatprep.subr.mxu0 0.0
    %364 = vmatpush1.msra.mxu0 0.0
    %365 = vmatprep.subr.mxu0 0.0
    %366 = vmatpush1.msra.mxu0 0.0
    %367 = vmatprep.subr.mxu0 0.0
    %368 = vmatpush1.msra.mxu0 0.0
    %369 = vmatprep.subr.mxu0 0.0
    %370 = vmatpush1.msra.mxu0 0.0
    %371 = vmatprep.subr.mxu0 0.0
    %372 = vmatpush1.msra.mxu0 0.0
    %373 = vmatprep.subr.mxu0 0.0
    %374 = vmatpush1.msra.mxu0 0.0
    %375 = vmatprep.subr.mxu0 0.0
    %376 = vmatpush1.msra.mxu0 0.0
    %377 = vmatprep.subr.mxu0 0.0
    %378 = vmatpush1.msra.mxu0 0.0
    %379 = vmatprep.subr.mxu0 0.0
    %380 = vmatpush1.msra.mxu0 0.0
    %381 = vmatprep.subr.mxu0 0.0
    %382 = vmatpush1.msra.mxu0 0.0
    %383 = vmatprep.subr.mxu0 0.0
    %384 = vmatpush1.msra.mxu0 0.0
    %385 = vmatprep.mubr.f32.mxu0 0.0
    %386 = vmatmul.mubr.f32.gmra.mrb[0].mxu0 %v310
    %v387 = vpop.f32.mrb[0].mxu0
    %v388 = vadd.f32 %v82, %v387
    %v389 = vpop.f32.mrb[0].mxu0
    %390 = vmatprep.mubr.f32.mxu0 0.0
    %391 = vmatmul.mubr.f32.gmra.mrb[0].mxu0 %v313
    %v392 = vpop.f32.mrb[0].mxu0
    %v393 = vadd.f32 %v82, %v392
    %v394 = vpop.f32.mrb[0].mxu0
    %395 = vmatprep.mubr.f32.mxu0 0.0
    %396 = vmatmul.mubr.f32.gmra.mrb[0].mxu0 %v316
    %v397 = vpop.f32.mrb[0].mxu0
    %v398 = vadd.f32 %v82, %v397
    %v399 = vpop.f32.mrb[0].mxu0
    %400 = vmatprep.mubr.f32.mxu0 0.0
    %401 = vmatmul.mubr.f32.gmra.mrb[0].mxu0 %v319
    %v402 = vpop.f32.mrb[0].mxu0
    %v403 = vadd.f32 %v82, %v402
    %v404 = vpop.f32.mrb[0].mxu0
    %405 = vdwg.mxu0
    %v406 = vmax.f32 %v388, 0.0
    %v407 = vmax.f32 %v393, 0.0
    %v408 = vmax.f32 %v398, 0.0
    %v409 = vmax.f32 %v403, 0.0
    %410 = vst.msk [vmem:[#allocation2 + $0x3c] sm:$0xff] %vm42, %v406
    %411 = vst.msk [vmem:[#allocation2 + $0x46] sm:$0xff] %vm42, %v407
    %412 = vst.msk [vmem:[#allocation2 + $0x50] sm:$0xff] %vm42, %v408
    %413 = vst.msk [vmem:[#allocation2 + $0x5a] sm:$0xff] %vm42, %v409
    %s414 = scalar_lea.vmem %s0, 96
    %v415 = vld [vmem:[%s414] sm:$0xff]
    %v416 = vld [vmem:[%s414 + $0x8] sm:$0xff]
    %v417 = vld [vmem:[%s414 + $0x10] sm:$0xff]
    %v418 = vld [vmem:[%s414 + $0x18] sm:$0xff]
    %v420 = vsel %vm84, %v415, 0
    %v423 = vsel %vm84, %v416, 0
    %v426 = vsel %vm84, %v417, 0
    %v429 = vsel %vm84, %v418, 0
    %431 = vmatprep.subr.mxu0 0.0
    %432 = vmatpush1.msra.mxu0 %v68
    %433 = vmatprep.subr.mxu0 0.0
    %434 = vmatpush1.msra.mxu0 %v69
    %435 = vmatprep.subr.mxu0 0.0
    %436 = vmatpush1.msra.mxu0 %v70
    %437 = vmatprep.subr.mxu0 0.0
    %438 = vmatpush1.msra.mxu0 %v71
    %439 = vmatprep.subr.mxu0 0.0
    %440 = vmatpush1.msra.mxu0 %v99
    %441 = vmatprep.subr.mxu0 0.0
    %442 = vmatpush1.msra.mxu0 0.0
    %443 = vmatprep.subr.mxu0 0.0
    %444 = vmatpush1.msra.mxu0 0.0
    %445 = vmatprep.subr.mxu0 0.0
    %446 = vmatpush1.msra.mxu0 0.0
    %447 = vmatprep.subr.mxu0 0.0
    %448 = vmatpush1.msra.mxu0 0.0
    %449 = vmatprep.subr.mxu0 0.0
    %450 = vmatpush1.msra.mxu0 0.0
    %451 = vmatprep.subr.mxu0 0.0
    %452 = vmatpush1.msra.mxu0 0.0
    %453 = vmatprep.subr.mxu0 0.0
    %454 = vmatpush1.msra.mxu0 0.0
    %455 = vmatprep.subr.mxu0 0.0
    %456 = vmatpush1.msra.mxu0 0.0
    %457 = vmatprep.subr.mxu0 0.0
    %458 = vmatpush1.msra.mxu0 0.0
    %459 = vmatprep.subr.mxu0 0.0
    %460 = vmatpush1.msra.mxu0 0.0
    %461 = vmatprep.subr.mxu0 0.0
    %462 = vmatpush1.msra.mxu0 0.0
    %463 = vmatprep.subr.mxu0 0.0
    %464 = vmatpush1.msra.mxu0 0.0
    %465 = vmatprep.subr.mxu0 0.0
    %466 = vmatpush1.msra.mxu0 0.0
    %467 = vmatprep.subr.mxu0 0.0
    %468 = vmatpush1.msra.mxu0 0.0
    %469 = vmatprep.subr.mxu0 0.0
    %470 = vmatpush1.msra.mxu0 0.0
    %471 = vmatprep.subr.mxu0 0.0
    %472 = vmatpush1.msra.mxu0 0.0
    %473 = vmatprep.subr.mxu0 0.0
    %474 = vmatpush1.msra.mxu0 0.0
    %475 = vmatprep.subr.mxu0 0.0
    %476 = vmatpush1.msra.mxu0 0.0
    %477 = vmatprep.subr.mxu0 0.0
    %478 = vmatpush1.msra.mxu0 0.0
    %479 = vmatprep.subr.mxu0 0.0
    %480 = vmatpush1.msra.mxu0 0.0
    %481 = vmatprep.subr.mxu0 0.0
    %482 = vmatpush1.msra.mxu0 0.0
    %483 = vmatprep.subr.mxu0 0.0
    %484 = vmatpush1.msra.mxu0 0.0
    %485 = vmatprep.subr.mxu0 0.0
    %486 = vmatpush1.msra.mxu0 0.0
    %487 = vmatprep.subr.mxu0 0.0
    %488 = vmatpush1.msra.mxu0 0.0
    %489 = vmatprep.subr.mxu0 0.0
    %490 = vmatpush1.msra.mxu0 0.0
    %491 = vmatprep.subr.mxu0 0.0
    %492 = vmatpush1.msra.mxu0 0.0
    %493 = vmatprep.subr.mxu0 0.0
    %494 = vmatpush1.msra.mxu0 0.0
    %495 = vmatprep.mubr.f32.mxu0 0.0
    %496 = vmatmul.mubr.f32.gmra.mrb[0].mxu0 %v420
    %v497 = vpop.f32.mrb[0].mxu0
    %v498 = vadd.f32 %v82, %v497
    %v499 = vpop.f32.mrb[0].mxu0
    %500 = vmatprep.mubr.f32.mxu0 0.0
    %501 = vmatmul.mubr.f32.gmra.mrb[0].mxu0 %v423
    %v502 = vpop.f32.mrb[0].mxu0
    %v503 = vadd.f32 %v82, %v502
    %v504 = vpop.f32.mrb[0].mxu0
    %505 = vmatprep.mubr.f32.mxu0 0.0
    %506 = vmatmul.mubr.f32.gmra.mrb[0].mxu0 %v426
    %v507 = vpop.f32.mrb[0].mxu0
    %v508 = vadd.f32 %v82, %v507
    %v509 = vpop.f32.mrb[0].mxu0
    %510 = vmatprep.mubr.f32.mxu0 0.0
    %511 = vmatmul.mubr.f32.gmra.mrb[0].mxu0 %v429
    %v512 = vpop.f32.mrb[0].mxu0
    %v513 = vadd.f32 %v82, %v512
    %v514 = vpop.f32.mrb[0].mxu0
    %515 = vdwg.mxu0
    %v516 = vmax.f32 %v498, 0.0
    %v517 = vmax.f32 %v503, 0.0
    %v518 = vmax.f32 %v508, 0.0
    %v519 = vmax.f32 %v513, 0.0
    %520 = vst.msk [vmem:[#allocation2 + $0xc] sm:$0xff] %vm42, %v516
    %521 = vst.msk [vmem:[#allocation2 + $0x16] sm:$0xff] %vm42, %v517
    %522 = vst.msk [vmem:[#allocation2 + $0x20] sm:$0xff] %vm42, %v518
    %523 = vst.msk [vmem:[#allocation2 + $0x2a] sm:$0xff] %vm42, %v519
    %v524 = vld [vmem:[%s4] sm:$0x1]
    %v525 = vld [vmem:[%s6] sm:$0x1]
    %v526 = vld [vmem:[#allocation2] sm:$0xff]
    %v527 = vld [vmem:[%s3] sm:$0xff]
    %v528 = vld [vmem:[#allocation2 + $0x32] sm:$0xff]
    %s529 = scalar_lea.vmem %s3, 8
    %v530 = vld [vmem:[%s529] sm:$0xff]
    %v532 = vsel %vm42, %v528, 0
    %534 = vmatprep.subr.mxu0 0.0
    %535 = vmatpush1.msra.mxu0 %v530
    %536 = vmatprep.subr.mxu0 0.0
    %537 = vmatpush1.msra.mxu0 0.0
    %538 = vmatprep.subr.mxu0 0.0
    %539 = vmatpush1.msra.mxu0 0.0
    %540 = vmatprep.subr.mxu0 0.0
    %541 = vmatpush1.msra.mxu0 0.0
    %542 = vmatprep.subr.mxu0 0.0
    %543 = vmatpush1.msra.mxu0 0.0
    %544 = vmatprep.subr.mxu0 0.0
    %545 = vmatpush1.msra.mxu0 0.0
    %546 = vmatprep.subr.mxu0 0.0
    %547 = vmatpush1.msra.mxu0 0.0
    %548 = vmatprep.subr.mxu0 0.0
    %549 = vmatpush1.msra.mxu0 0.0
    %550 = vmatprep.subr.mxu0 0.0
    %551 = vmatpush1.msra.mxu0 0.0
    %552 = vmatprep.subr.mxu0 0.0
    %553 = vmatpush1.msra.mxu0 0.0
    %554 = vmatprep.subr.mxu0 0.0
    %555 = vmatpush1.msra.mxu0 0.0
    %556 = vmatprep.subr.mxu0 0.0
    %557 = vmatpush1.msra.mxu0 0.0
    %558 = vmatprep.subr.mxu0 0.0
    %559 = vmatpush1.msra.mxu0 0.0
    %560 = vmatprep.subr.mxu0 0.0
    %561 = vmatpush1.msra.mxu0 0.0
    %562 = vmatprep.subr.mxu0 0.0
    %563 = vmatpush1.msra.mxu0 0.0
    %564 = vmatprep.subr.mxu0 0.0
    %565 = vmatpush1.msra.mxu0 0.0
    %566 = vmatprep.subr.mxu0 0.0
    %567 = vmatpush1.msra.mxu0 0.0
    %568 = vmatprep.subr.mxu0 0.0
    %569 = vmatpush1.msra.mxu0 0.0
    %570 = vmatprep.subr.mxu0 0.0
    %571 = vmatpush1.msra.mxu0 0.0
    %572 = vmatprep.subr.mxu0 0.0
    %573 = vmatpush1.msra.mxu0 0.0
    %574 = vmatprep.subr.mxu0 0.0
    %575 = vmatpush1.msra.mxu0 0.0
    %576 = vmatprep.subr.mxu0 0.0
    %577 = vmatpush1.msra.mxu0 0.0
    %578 = vmatprep.subr.mxu0 0.0
    %579 = vmatpush1.msra.mxu0 0.0
    %580 = vmatprep.subr.mxu0 0.0
    %581 = vmatpush1.msra.mxu0 0.0
    %582 = vmatprep.subr.mxu0 0.0
    %583 = vmatpush1.msra.mxu0 0.0
    %584 = vmatprep.subr.mxu0 0.0
    %585 = vmatpush1.msra.mxu0 0.0
    %586 = vmatprep.subr.mxu0 0.0
    %587 = vmatpush1.msra.mxu0 0.0
    %588 = vmatprep.subr.mxu0 0.0
    %589 = vmatpush1.msra.mxu0 0.0
    %590 = vmatprep.subr.mxu0 0.0
    %591 = vmatpush1.msra.mxu0 0.0
    %592 = vmatprep.subr.mxu0 0.0
    %593 = vmatpush1.msra.mxu0 0.0
    %594 = vmatprep.subr.mxu0 0.0
    %595 = vmatpush1.msra.mxu0 0.0
    %596 = vmatprep.subr.mxu0 0.0
    %597 = vmatpush1.msra.mxu0 0.0
    %598 = vmatprep.mubr.f32.mxu0 0.0
    %599 = vmatmul.mubr.f32.gmra.mrb[0].mxu0 %v532
    %v600 = vpop.f32.mrb[0].mxu0
    %v601 = vadd.f32 0.0, %v600
    %v602 = vpop.f32.mrb[0].mxu0
    %603 = vdwg.mxu0
    %v605 = vsel %vm42, %v526, 0
    %607 = vmatprep.subr.mxu0 0.0
    %608 = vmatpush1.msra.mxu0 %v527
    %609 = vmatprep.subr.mxu0 0.0
    %610 = vmatpush1.msra.mxu0 0.0
    %611 = vmatprep.subr.mxu0 0.0
    %612 = vmatpush1.msra.mxu0 0.0
    %613 = vmatprep.subr.mxu0 0.0
    %614 = vmatpush1.msra.mxu0 0.0
    %615 = vmatprep.subr.mxu0 0.0
    %616 = vmatpush1.msra.mxu0 0.0
    %617 = vmatprep.subr.mxu0 0.0
    %618 = vmatpush1.msra.mxu0 0.0
    %619 = vmatprep.subr.mxu0 0.0
    %620 = vmatpush1.msra.mxu0 0.0
    %621 = vmatprep.subr.mxu0 0.0
    %622 = vmatpush1.msra.mxu0 0.0
    %623 = vmatprep.subr.mxu0 0.0
    %624 = vmatpush1.msra.mxu0 0.0
    %625 = vmatprep.subr.mxu0 0.0
    %626 = vmatpush1.msra.mxu0 0.0
    %627 = vmatprep.subr.mxu0 0.0
    %628 = vmatpush1.msra.mxu0 0.0
    %629 = vmatprep.subr.mxu0 0.0
    %630 = vmatpush1.msra.mxu0 0.0
    %631 = vmatprep.subr.mxu0 0.0
    %632 = vmatpush1.msra.mxu0 0.0
    %633 = vmatprep.subr.mxu0 0.0
    %634 = vmatpush1.msra.mxu0 0.0
    %635 = vmatprep.subr.mxu0 0.0
    %636 = vmatpush1.msra.mxu0 0.0
    %637 = vmatprep.subr.mxu0 0.0
    %638 = vmatpush1.msra.mxu0 0.0
    %639 = vmatprep.subr.mxu0 0.0
    %640 = vmatpush1.msra.mxu0 0.0
    %641 = vmatprep.subr.mxu0 0.0
    %642 = vmatpush1.msra.mxu0 0.0
    %643 = vmatprep.subr.mxu0 0.0
    %644 = vmatpush1.msra.mxu0 0.0
    %645 = vmatprep.subr.mxu0 0.0
    %646 = vmatpush1.msra.mxu0 0.0
    %647 = vmatprep.subr.mxu0 0.0
    %648 = vmatpush1.msra.mxu0 0.0
    %649 = vmatprep.subr.mxu0 0.0
    %650 = vmatpush1.msra.mxu0 0.0
    %651 = vmatprep.subr.mxu0 0.0
    %652 = vmatpush1.msra.mxu0 0.0
    %653 = vmatprep.subr.mxu0 0.0
    %654 = vmatpush1.msra.mxu0 0.0
    %655 = vmatprep.subr.mxu0 0.0
    %656 = vmatpush1.msra.mxu0 0.0
    %657 = vmatprep.subr.mxu0 0.0
    %658 = vmatpush1.msra.mxu0 0.0
    %659 = vmatprep.subr.mxu0 0.0
    %660 = vmatpush1.msra.mxu0 0.0
    %661 = vmatprep.subr.mxu0 0.0
    %662 = vmatpush1.msra.mxu0 0.0
    %663 = vmatprep.subr.mxu0 0.0
    %664 = vmatpush1.msra.mxu0 0.0
    %665 = vmatprep.subr.mxu0 0.0
    %666 = vmatpush1.msra.mxu0 0.0
    %667 = vmatprep.subr.mxu0 0.0
    %668 = vmatpush1.msra.mxu0 0.0
    %669 = vmatprep.subr.mxu0 0.0
    %670 = vmatpush1.msra.mxu0 0.0
    %671 = vmatprep.mubr.f32.mxu0 0.0
    %672 = vmatmul.mubr.f32.gmra.mrb[0].mxu0 %v605
    %v673 = vpop.f32.mrb[0].mxu0
    %v674 = vadd.f32 %v601, %v673
    %v675 = vpop.f32.mrb[0].mxu0
    %676 = vdwg.mxu0
    %v677 = vld [vmem:[#allocation2 + $0x2] sm:$0xff]
    %s678 = scalar_lea.vmem %s3, 16
    %v679 = vld [vmem:[%s678] sm:$0xff]
    %v681 = vsel %vm42, %v677, 0
    %683 = vmatprep.subr.mxu0 0.0
    %684 = vmatpush1.msra.mxu0 %v679
    %685 = vmatprep.subr.mxu0 0.0
    %686 = vmatpush1.msra.mxu0 0.0
    %687 = vmatprep.subr.mxu0 0.0
    %688 = vmatpush1.msra.mxu0 0.0
    %689 = vmatprep.subr.mxu0 0.0
    %690 = vmatpush1.msra.mxu0 0.0
    %691 = vmatprep.subr.mxu0 0.0
    %692 = vmatpush1.msra.mxu0 0.0
    %693 = vmatprep.subr.mxu0 0.0
    %694 = vmatpush1.msra.mxu0 0.0
    %695 = vmatprep.subr.mxu0 0.0
    %696 = vmatpush1.msra.mxu0 0.0
    %697 = vmatprep.subr.mxu0 0.0
    %698 = vmatpush1.msra.mxu0 0.0
    %699 = vmatprep.subr.mxu0 0.0
    %700 = vmatpush1.msra.mxu0 0.0
    %701 = vmatprep.subr.mxu0 0.0
    %702 = vmatpush1.msra.mxu0 0.0
    %703 = vmatprep.subr.mxu0 0.0
    %704 = vmatpush1.msra.mxu0 0.0
    %705 = vmatprep.subr.mxu0 0.0
    %706 = vmatpush1.msra.mxu0 0.0
    %707 = vmatprep.subr.mxu0 0.0
    %708 = vmatpush1.msra.mxu0 0.0
    %709 = vmatprep.subr.mxu0 0.0
    %710 = vmatpush1.msra.mxu0 0.0
    %711 = vmatprep.subr.mxu0 0.0
    %712 = vmatpush1.msra.mxu0 0.0
    %713 = vmatprep.subr.mxu0 0.0
    %714 = vmatpush1.msra.mxu0 0.0
    %715 = vmatprep.subr.mxu0 0.0
    %716 = vmatpush1.msra.mxu0 0.0
    %717 = vmatprep.subr.mxu0 0.0
    %718 = vmatpush1.msra.mxu0 0.0
    %719 = vmatprep.subr.mxu0 0.0
    %720 = vmatpush1.msra.mxu0 0.0
    %721 = vmatprep.subr.mxu0 0.0
    %722 = vmatpush1.msra.mxu0 0.0
    %723 = vmatprep.subr.mxu0 0.0
    %724 = vmatpush1.msra.mxu0 0.0
    %725 = vmatprep.subr.mxu0 0.0
    %726 = vmatpush1.msra.mxu0 0.0
    %727 = vmatprep.subr.mxu0 0.0
    %728 = vmatpush1.msra.mxu0 0.0
    %729 = vmatprep.subr.mxu0 0.0
    %730 = vmatpush1.msra.mxu0 0.0
    %731 = vmatprep.subr.mxu0 0.0
    %732 = vmatpush1.msra.mxu0 0.0
    %733 = vmatprep.subr.mxu0 0.0
    %734 = vmatpush1.msra.mxu0 0.0
    %735 = vmatprep.subr.mxu0 0.0
    %736 = vmatpush1.msra.mxu0 0.0
    %737 = vmatprep.subr.mxu0 0.0
    %738 = vmatpush1.msra.mxu0 0.0
    %739 = vmatprep.subr.mxu0 0.0
    %740 = vmatpush1.msra.mxu0 0.0
    %741 = vmatprep.subr.mxu0 0.0
    %742 = vmatpush1.msra.mxu0 0.0
    %743 = vmatprep.subr.mxu0 0.0
    %744 = vmatpush1.msra.mxu0 0.0
    %745 = vmatprep.subr.mxu0 0.0
    %746 = vmatpush1.msra.mxu0 0.0
    %747 = vmatprep.mubr.f32.mxu0 0.0
    %748 = vmatmul.mubr.f32.gmra.mrb[0].mxu0 %v681
    %v749 = vpop.f32.mrb[0].mxu0
    %v750 = vadd.f32 0.0, %v749
    %v751 = vpop.f32.mrb[0].mxu0
    %752 = vdwg.mxu0
    %v753 = vadd.f32 %v674, %v750
    %v754 = vld [vmem:[#allocation2 + $0x64] sm:$0xff]
    %s755 = scalar_lea.vmem %s3, 24
    %v756 = vld [vmem:[%s755] sm:$0xff]
    %v758 = vsel %vm42, %v754, 0
    %760 = vmatprep.subr.mxu0 0.0
    %761 = vmatpush1.msra.mxu0 %v756
    %762 = vmatprep.subr.mxu0 0.0
    %763 = vmatpush1.msra.mxu0 0.0
    %764 = vmatprep.subr.mxu0 0.0
    %765 = vmatpush1.msra.mxu0 0.0
    %766 = vmatprep.subr.mxu0 0.0
    %767 = vmatpush1.msra.mxu0 0.0
    %768 = vmatprep.subr.mxu0 0.0
    %769 = vmatpush1.msra.mxu0 0.0
    %770 = vmatprep.subr.mxu0 0.0
    %771 = vmatpush1.msra.mxu0 0.0
    %772 = vmatprep.subr.mxu0 0.0
    %773 = vmatpush1.msra.mxu0 0.0
    %774 = vmatprep.subr.mxu0 0.0
    %775 = vmatpush1.msra.mxu0 0.0
    %776 = vmatprep.subr.mxu0 0.0
    %777 = vmatpush1.msra.mxu0 0.0
    %778 = vmatprep.subr.mxu0 0.0
    %779 = vmatpush1.msra.mxu0 0.0
    %780 = vmatprep.subr.mxu0 0.0
    %781 = vmatpush1.msra.mxu0 0.0
    %782 = vmatprep.subr.mxu0 0.0
    %783 = vmatpush1.msra.mxu0 0.0
    %784 = vmatprep.subr.mxu0 0.0
    %785 = vmatpush1.msra.mxu0 0.0
    %786 = vmatprep.subr.mxu0 0.0
    %787 = vmatpush1.msra.mxu0 0.0
    %788 = vmatprep.subr.mxu0 0.0
    %789 = vmatpush1.msra.mxu0 0.0
    %790 = vmatprep.subr.mxu0 0.0
    %791 = vmatpush1.msra.mxu0 0.0
    %792 = vmatprep.subr.mxu0 0.0
    %793 = vmatpush1.msra.mxu0 0.0
    %794 = vmatprep.subr.mxu0 0.0
    %795 = vmatpush1.msra.mxu0 0.0
    %796 = vmatprep.subr.mxu0 0.0
    %797 = vmatpush1.msra.mxu0 0.0
    %798 = vmatprep.subr.mxu0 0.0
    %799 = vmatpush1.msra.mxu0 0.0
    %800 = vmatprep.subr.mxu0 0.0
    %801 = vmatpush1.msra.mxu0 0.0
    %802 = vmatprep.subr.mxu0 0.0
    %803 = vmatpush1.msra.mxu0 0.0
    %804 = vmatprep.subr.mxu0 0.0
    %805 = vmatpush1.msra.mxu0 0.0
    %806 = vmatprep.subr.mxu0 0.0
    %807 = vmatpush1.msra.mxu0 0.0
    %808 = vmatprep.subr.mxu0 0.0
    %809 = vmatpush1.msra.mxu0 0.0
    %810 = vmatprep.subr.mxu0 0.0
    %811 = vmatpush1.msra.mxu0 0.0
    %812 = vmatprep.subr.mxu0 0.0
    %813 = vmatpush1.msra.mxu0 0.0
    %814 = vmatprep.subr.mxu0 0.0
    %815 = vmatpush1.msra.mxu0 0.0
    %816 = vmatprep.subr.mxu0 0.0
    %817 = vmatpush1.msra.mxu0 0.0
    %818 = vmatprep.subr.mxu0 0.0
    %819 = vmatpush1.msra.mxu0 0.0
    %820 = vmatprep.subr.mxu0 0.0
    %821 = vmatpush1.msra.mxu0 0.0
    %822 = vmatprep.subr.mxu0 0.0
    %823 = vmatpush1.msra.mxu0 0.0
    %824 = vmatprep.mubr.f32.mxu0 0.0
    %825 = vmatmul.mubr.f32.gmra.mrb[0].mxu0 %v758
    %v826 = vpop.f32.mrb[0].mxu0
    %v827 = vadd.f32 0.0, %v826
    %v828 = vpop.f32.mrb[0].mxu0
    %829 = vdwg.mxu0
    %v830 = vadd.f32 %v753, %v827
    %v831 = vld [vmem:[#allocation2 + $0x96] sm:$0xff]
    %s832 = scalar_lea.vmem %s3, 32
    %v833 = vld [vmem:[%s832] sm:$0xff]
    %v835 = vsel %vm42, %v831, 0
    %837 = vmatprep.subr.mxu0 0.0
    %838 = vmatpush1.msra.mxu0 %v833
    %839 = vmatprep.subr.mxu0 0.0
    %840 = vmatpush1.msra.mxu0 0.0
    %841 = vmatprep.subr.mxu0 0.0
    %842 = vmatpush1.msra.mxu0 0.0
    %843 = vmatprep.subr.mxu0 0.0
    %844 = vmatpush1.msra.mxu0 0.0
    %845 = vmatprep.subr.mxu0 0.0
    %846 = vmatpush1.msra.mxu0 0.0
    %847 = vmatprep.subr.mxu0 0.0
    %848 = vmatpush1.msra.mxu0 0.0
    %849 = vmatprep.subr.mxu0 0.0
    %850 = vmatpush1.msra.mxu0 0.0
    %851 = vmatprep.subr.mxu0 0.0
    %852 = vmatpush1.msra.mxu0 0.0
    %853 = vmatprep.subr.mxu0 0.0
    %854 = vmatpush1.msra.mxu0 0.0
    %855 = vmatprep.subr.mxu0 0.0
    %856 = vmatpush1.msra.mxu0 0.0
    %857 = vmatprep.subr.mxu0 0.0
    %858 = vmatpush1.msra.mxu0 0.0
    %859 = vmatprep.subr.mxu0 0.0
    %860 = vmatpush1.msra.mxu0 0.0
    %861 = vmatprep.subr.mxu0 0.0
    %862 = vmatpush1.msra.mxu0 0.0
    %863 = vmatprep.subr.mxu0 0.0
    %864 = vmatpush1.msra.mxu0 0.0
    %865 = vmatprep.subr.mxu0 0.0
    %866 = vmatpush1.msra.mxu0 0.0
    %867 = vmatprep.subr.mxu0 0.0
    %868 = vmatpush1.msra.mxu0 0.0
    %869 = vmatprep.subr.mxu0 0.0
    %870 = vmatpush1.msra.mxu0 0.0
    %871 = vmatprep.subr.mxu0 0.0
    %872 = vmatpush1.msra.mxu0 0.0
    %873 = vmatprep.subr.mxu0 0.0
    %874 = vmatpush1.msra.mxu0 0.0
    %875 = vmatprep.subr.mxu0 0.0
    %876 = vmatpush1.msra.mxu0 0.0
    %877 = vmatprep.subr.mxu0 0.0
    %878 = vmatpush1.msra.mxu0 0.0
    %879 = vmatprep.subr.mxu0 0.0
    %880 = vmatpush1.msra.mxu0 0.0
    %881 = vmatprep.subr.mxu0 0.0
    %882 = vmatpush1.msra.mxu0 0.0
    %883 = vmatprep.subr.mxu0 0.0
    %884 = vmatpush1.msra.mxu0 0.0
    %885 = vmatprep.subr.mxu0 0.0
    %886 = vmatpush1.msra.mxu0 0.0
    %887 = vmatprep.subr.mxu0 0.0
    %888 = vmatpush1.msra.mxu0 0.0
    %889 = vmatprep.subr.mxu0 0.0
    %890 = vmatpush1.msra.mxu0 0.0
    %891 = vmatprep.subr.mxu0 0.0
    %892 = vmatpush1.msra.mxu0 0.0
    %893 = vmatprep.subr.mxu0 0.0
    %894 = vmatpush1.msra.mxu0 0.0
    %895 = vmatprep.subr.mxu0 0.0
    %896 = vmatpush1.msra.mxu0 0.0
    %897 = vmatprep.subr.mxu0 0.0
    %898 = vmatpush1.msra.mxu0 0.0
    %899 = vmatprep.subr.mxu0 0.0
    %900 = vmatpush1.msra.mxu0 0.0
    %901 = vmatprep.mubr.f32.mxu0 0.0
    %902 = vmatmul.mubr.f32.gmra.mrb[0].mxu0 %v835
    %v903 = vpop.f32.mrb[0].mxu0
    %v904 = vadd.f32 0.0, %v903
    %v905 = vpop.f32.mrb[0].mxu0
    %906 = vdwg.mxu0
    %v907 = vadd.f32 %v830, %v904
    %v908 = vld [vmem:[#allocation2 + $0x66] sm:$0xff]
    %s909 = scalar_lea.vmem %s3, 40
    %v910 = vld [vmem:[%s909] sm:$0xff]
    %v912 = vsel %vm42, %v908, 0
    %914 = vmatprep.subr.mxu0 0.0
    %915 = vmatpush1.msra.mxu0 %v910
    %916 = vmatprep.subr.mxu0 0.0
    %917 = vmatpush1.msra.mxu0 0.0
    %918 = vmatprep.subr.mxu0 0.0
    %919 = vmatpush1.msra.mxu0 0.0
    %920 = vmatprep.subr.mxu0 0.0
    %921 = vmatpush1.msra.mxu0 0.0
    %922 = vmatprep.subr.mxu0 0.0
    %923 = vmatpush1.msra.mxu0 0.0
    %924 = vmatprep.subr.mxu0 0.0
    %925 = vmatpush1.msra.mxu0 0.0
    %926 = vmatprep.subr.mxu0 0.0
    %927 = vmatpush1.msra.mxu0 0.0
    %928 = vmatprep.subr.mxu0 0.0
    %929 = vmatpush1.msra.mxu0 0.0
    %930 = vmatprep.subr.mxu0 0.0
    %931 = vmatpush1.msra.mxu0 0.0
    %932 = vmatprep.subr.mxu0 0.0
    %933 = vmatpush1.msra.mxu0 0.0
    %934 = vmatprep.subr.mxu0 0.0
    %935 = vmatpush1.msra.mxu0 0.0
    %936 = vmatprep.subr.mxu0 0.0
    %937 = vmatpush1.msra.mxu0 0.0
    %938 = vmatprep.subr.mxu0 0.0
    %939 = vmatpush1.msra.mxu0 0.0
    %940 = vmatprep.subr.mxu0 0.0
    %941 = vmatpush1.msra.mxu0 0.0
    %942 = vmatprep.subr.mxu0 0.0
    %943 = vmatpush1.msra.mxu0 0.0
    %944 = vmatprep.subr.mxu0 0.0
    %945 = vmatpush1.msra.mxu0 0.0
    %946 = vmatprep.subr.mxu0 0.0
    %947 = vmatpush1.msra.mxu0 0.0
    %948 = vmatprep.subr.mxu0 0.0
    %949 = vmatpush1.msra.mxu0 0.0
    %950 = vmatprep.subr.mxu0 0.0
    %951 = vmatpush1.msra.mxu0 0.0
    %952 = vmatprep.subr.mxu0 0.0
    %953 = vmatpush1.msra.mxu0 0.0
    %954 = vmatprep.subr.mxu0 0.0
    %955 = vmatpush1.msra.mxu0 0.0
    %956 = vmatprep.subr.mxu0 0.0
    %957 = vmatpush1.msra.mxu0 0.0
    %958 = vmatprep.subr.mxu0 0.0
    %959 = vmatpush1.msra.mxu0 0.0
    %960 = vmatprep.subr.mxu0 0.0
    %961 = vmatpush1.msra.mxu0 0.0
    %962 = vmatprep.subr.mxu0 0.0
    %963 = vmatpush1.msra.mxu0 0.0
    %964 = vmatprep.subr.mxu0 0.0
    %965 = vmatpush1.msra.mxu0 0.0
    %966 = vmatprep.subr.mxu0 0.0
    %967 = vmatpush1.msra.mxu0 0.0
    %968 = vmatprep.subr.mxu0 0.0
    %969 = vmatpush1.msra.mxu0 0.0
    %970 = vmatprep.subr.mxu0 0.0
    %971 = vmatpush1.msra.mxu0 0.0
    %972 = vmatprep.subr.mxu0 0.0
    %973 = vmatpush1.msra.mxu0 0.0
    %974 = vmatprep.subr.mxu0 0.0
    %975 = vmatpush1.msra.mxu0 0.0
    %976 = vmatprep.subr.mxu0 0.0
    %977 = vmatpush1.msra.mxu0 0.0
    %978 = vmatprep.mubr.f32.mxu0 0.0
    %979 = vmatmul.mubr.f32.gmra.mrb[0].mxu0 %v912
    %v980 = vpop.f32.mrb[0].mxu0
    %v981 = vadd.f32 0.0, %v980
    %v982 = vpop.f32.mrb[0].mxu0
    %983 = vdwg.mxu0
    %v984 = vadd.f32 %v907, %v981
    %v985 = vld [vmem:[#allocation2 + $0xa] sm:$0xff]
    %s986 = scalar_lea.vmem %s3, 48
    %v987 = vld [vmem:[%s986] sm:$0xff]
    %v989 = vsel %vm42, %v985, 0
    %991 = vmatprep.subr.mxu0 0.0
    %992 = vmatpush1.msra.mxu0 %v987
    %993 = vmatprep.subr.mxu0 0.0
    %994 = vmatpush1.msra.mxu0 0.0
    %995 = vmatprep.subr.mxu0 0.0
    %996 = vmatpush1.msra.mxu0 0.0
    %997 = vmatprep.subr.mxu0 0.0
    %998 = vmatpush1.msra.mxu0 0.0
    %999 = vmatprep.subr.mxu0 0.0
    %1000 = vmatpush1.msra.mxu0 0.0
    %1001 = vmatprep.subr.mxu0 0.0
    %1002 = vmatpush1.msra.mxu0 0.0
    %1003 = vmatprep.subr.mxu0 0.0
    %1004 = vmatpush1.msra.mxu0 0.0
    %1005 = vmatprep.subr.mxu0 0.0
    %1006 = vmatpush1.msra.mxu0 0.0
    %1007 = vmatprep.subr.mxu0 0.0
    %1008 = vmatpush1.msra.mxu0 0.0
    %1009 = vmatprep.subr.mxu0 0.0
    %1010 = vmatpush1.msra.mxu0 0.0
    %1011 = vmatprep.subr.mxu0 0.0
    %1012 = vmatpush1.msra.mxu0 0.0
    %1013 = vmatprep.subr.mxu0 0.0
    %1014 = vmatpush1.msra.mxu0 0.0
    %1015 = vmatprep.subr.mxu0 0.0
    %1016 = vmatpush1.msra.mxu0 0.0
    %1017 = vmatprep.subr.mxu0 0.0
    %1018 = vmatpush1.msra.mxu0 0.0
    %1019 = vmatprep.subr.mxu0 0.0
    %1020 = vmatpush1.msra.mxu0 0.0
    %1021 = vmatprep.subr.mxu0 0.0
    %1022 = vmatpush1.msra.mxu0 0.0
    %1023 = vmatprep.subr.mxu0 0.0
    %1024 = vmatpush1.msra.mxu0 0.0
    %1025 = vmatprep.subr.mxu0 0.0
    %1026 = vmatpush1.msra.mxu0 0.0
    %1027 = vmatprep.subr.mxu0 0.0
    %1028 = vmatpush1.msra.mxu0 0.0
    %1029 = vmatprep.subr.mxu0 0.0
    %1030 = vmatpush1.msra.mxu0 0.0
    %1031 = vmatprep.subr.mxu0 0.0
    %1032 = vmatpush1.msra.mxu0 0.0
    %1033 = vmatprep.subr.mxu0 0.0
    %1034 = vmatpush1.msra.mxu0 0.0
    %1035 = vmatprep.subr.mxu0 0.0
    %1036 = vmatpush1.msra.mxu0 0.0
    %1037 = vmatprep.subr.mxu0 0.0
    %1038 = vmatpush1.msra.mxu0 0.0
    %1039 = vmatprep.subr.mxu0 0.0
    %1040 = vmatpush1.msra.mxu0 0.0
    %1041 = vmatprep.subr.mxu0 0.0
    %1042 = vmatpush1.msra.mxu0 0.0
    %1043 = vmatprep.subr.mxu0 0.0
    %1044 = vmatpush1.msra.mxu0 0.0
    %1045 = vmatprep.subr.mxu0 0.0
    %1046 = vmatpush1.msra.mxu0 0.0
    %1047 = vmatprep.subr.mxu0 0.0
    %1048 = vmatpush1.msra.mxu0 0.0
    %1049 = vmatprep.subr.mxu0 0.0
    %1050 = vmatpush1.msra.mxu0 0.0
    %1051 = vmatprep.subr.mxu0 0.0
    %1052 = vmatpush1.msra.mxu0 0.0
    %1053 = vmatprep.subr.mxu0 0.0
    %1054 = vmatpush1.msra.mxu0 0.0
    %1055 = vmatprep.mubr.f32.mxu0 0.0
    %1056 = vmatmul.mubr.f32.gmra.mrb[0].mxu0 %v989
    %v1057 = vpop.f32.mrb[0].mxu0
    %v1058 = vadd.f32 0.0, %v1057
    %v1059 = vpop.f32.mrb[0].mxu0
    %1060 = vdwg.mxu0
    %v1061 = vadd.f32 %v984, %v1058
    %v1062 = vld [vmem:[#allocation2 + $0x3c] sm:$0xff]
    %s1063 = scalar_lea.vmem %s3, 56
    %v1064 = vld [vmem:[%s1063] sm:$0xff]
    %v1066 = vsel %vm42, %v1062, 0
    %1068 = vmatprep.subr.mxu0 0.0
    %1069 = vmatpush1.msra.mxu0 %v1064
    %1070 = vmatprep.subr.mxu0 0.0
    %1071 = vmatpush1.msra.mxu0 0.0
    %1072 = vmatprep.subr.mxu0 0.0
    %1073 = vmatpush1.msra.mxu0 0.0
    %1074 = vmatprep.subr.mxu0 0.0
    %1075 = vmatpush1.msra.mxu0 0.0
    %1076 = vmatprep.subr.mxu0 0.0
    %1077 = vmatpush1.msra.mxu0 0.0
    %1078 = vmatprep.subr.mxu0 0.0
    %1079 = vmatpush1.msra.mxu0 0.0
    %1080 = vmatprep.subr.mxu0 0.0
    %1081 = vmatpush1.msra.mxu0 0.0
    %1082 = vmatprep.subr.mxu0 0.0
    %1083 = vmatpush1.msra.mxu0 0.0
    %1084 = vmatprep.subr.mxu0 0.0
    %1085 = vmatpush1.msra.mxu0 0.0
    %1086 = vmatprep.subr.mxu0 0.0
    %1087 = vmatpush1.msra.mxu0 0.0
    %1088 = vmatprep.subr.mxu0 0.0
    %1089 = vmatpush1.msra.mxu0 0.0
    %1090 = vmatprep.subr.mxu0 0.0
    %1091 = vmatpush1.msra.mxu0 0.0
    %1092 = vmatprep.subr.mxu0 0.0
    %1093 = vmatpush1.msra.mxu0 0.0
    %1094 = vmatprep.subr.mxu0 0.0
    %1095 = vmatpush1.msra.mxu0 0.0
    %1096 = vmatprep.subr.mxu0 0.0
    %1097 = vmatpush1.msra.mxu0 0.0
    %1098 = vmatprep.subr.mxu0 0.0
    %1099 = vmatpush1.msra.mxu0 0.0
    %1100 = vmatprep.subr.mxu0 0.0
    %1101 = vmatpush1.msra.mxu0 0.0
    %1102 = vmatprep.subr.mxu0 0.0
    %1103 = vmatpush1.msra.mxu0 0.0
    %1104 = vmatprep.subr.mxu0 0.0
    %1105 = vmatpush1.msra.mxu0 0.0
    %1106 = vmatprep.subr.mxu0 0.0
    %1107 = vmatpush1.msra.mxu0 0.0
    %1108 = vmatprep.subr.mxu0 0.0
    %1109 = vmatpush1.msra.mxu0 0.0
    %1110 = vmatprep.subr.mxu0 0.0
    %1111 = vmatpush1.msra.mxu0 0.0
    %1112 = vmatprep.subr.mxu0 0.0
    %1113 = vmatpush1.msra.mxu0 0.0
    %1114 = vmatprep.subr.mxu0 0.0
    %1115 = vmatpush1.msra.mxu0 0.0
    %1116 = vmatprep.subr.mxu0 0.0
    %1117 = vmatpush1.msra.mxu0 0.0
    %1118 = vmatprep.subr.mxu0 0.0
    %1119 = vmatpush1.msra.mxu0 0.0
    %1120 = vmatprep.subr.mxu0 0.0
    %1121 = vmatpush1.msra.mxu0 0.0
    %1122 = vmatprep.subr.mxu0 0.0
    %1123 = vmatpush1.msra.mxu0 0.0
    %1124 = vmatprep.subr.mxu0 0.0
    %1125 = vmatpush1.msra.mxu0 0.0
    %1126 = vmatprep.subr.mxu0 0.0
    %1127 = vmatpush1.msra.mxu0 0.0
    %1128 = vmatprep.subr.mxu0 0.0
    %1129 = vmatpush1.msra.mxu0 0.0
    %1130 = vmatprep.subr.mxu0 0.0
    %1131 = vmatpush1.msra.mxu0 0.0
    %1132 = vmatprep.mubr.f32.mxu0 0.0
    %1133 = vmatmul.mubr.f32.gmra.mrb[0].mxu0 %v1066
    %v1134 = vpop.f32.mrb[0].mxu0
    %v1135 = vadd.f32 0.0, %v1134
    %v1136 = vpop.f32.mrb[0].mxu0
    %1137 = vdwg.mxu0
    %v1138 = vadd.f32 %v1061, %v1135
    %v1139 = vld [vmem:[#allocation2 + $0xc] sm:$0xff]
    %s1140 = scalar_lea.vmem %s3, 64
    %v1141 = vld [vmem:[%s1140] sm:$0xff]
    %v1143 = vsel %vm42, %v1139, 0
    %1145 = vmatprep.subr.mxu0 0.0
    %1146 = vmatpush1.msra.mxu0 %v1141
    %1147 = vmatprep.subr.mxu0 0.0
    %1148 = vmatpush1.msra.mxu0 0.0
    %1149 = vmatprep.subr.mxu0 0.0
    %1150 = vmatpush1.msra.mxu0 0.0
    %1151 = vmatprep.subr.mxu0 0.0
    %1152 = vmatpush1.msra.mxu0 0.0
    %1153 = vmatprep.subr.mxu0 0.0
    %1154 = vmatpush1.msra.mxu0 0.0
    %1155 = vmatprep.subr.mxu0 0.0
    %1156 = vmatpush1.msra.mxu0 0.0
    %1157 = vmatprep.subr.mxu0 0.0
    %1158 = vmatpush1.msra.mxu0 0.0
    %1159 = vmatprep.subr.mxu0 0.0
    %1160 = vmatpush1.msra.mxu0 0.0
    %1161 = vmatprep.subr.mxu0 0.0
    %1162 = vmatpush1.msra.mxu0 0.0
    %1163 = vmatprep.subr.mxu0 0.0
    %1164 = vmatpush1.msra.mxu0 0.0
    %1165 = vmatprep.subr.mxu0 0.0
    %1166 = vmatpush1.msra.mxu0 0.0
    %1167 = vmatprep.subr.mxu0 0.0
    %1168 = vmatpush1.msra.mxu0 0.0
    %1169 = vmatprep.subr.mxu0 0.0
    %1170 = vmatpush1.msra.mxu0 0.0
    %1171 = vmatprep.subr.mxu0 0.0
    %1172 = vmatpush1.msra.mxu0 0.0
    %1173 = vmatprep.subr.mxu0 0.0
    %1174 = vmatpush1.msra.mxu0 0.0
    %1175 = vmatprep.subr.mxu0 0.0
    %1176 = vmatpush1.msra.mxu0 0.0
    %1177 = vmatprep.subr.mxu0 0.0
    %1178 = vmatpush1.msra.mxu0 0.0
    %1179 = vmatprep.subr.mxu0 0.0
    %1180 = vmatpush1.msra.mxu0 0.0
    %1181 = vmatprep.subr.mxu0 0.0
    %1182 = vmatpush1.msra.mxu0 0.0
    %1183 = vmatprep.subr.mxu0 0.0
    %1184 = vmatpush1.msra.mxu0 0.0
    %1185 = vmatprep.subr.mxu0 0.0
    %1186 = vmatpush1.msra.mxu0 0.0
    %1187 = vmatprep.subr.mxu0 0.0
    %1188 = vmatpush1.msra.mxu0 0.0
    %1189 = vmatprep.subr.mxu0 0.0
    %1190 = vmatpush1.msra.mxu0 0.0
    %1191 = vmatprep.subr.mxu0 0.0
    %1192 = vmatpush1.msra.mxu0 0.0
    %1193 = vmatprep.subr.mxu0 0.0
    %1194 = vmatpush1.msra.mxu0 0.0
    %1195 = vmatprep.subr.mxu0 0.0
    %1196 = vmatpush1.msra.mxu0 0.0
    %1197 = vmatprep.subr.mxu0 0.0
    %1198 = vmatpush1.msra.mxu0 0.0
    %1199 = vmatprep.subr.mxu0 0.0
    %1200 = vmatpush1.msra.mxu0 0.0
    %1201 = vmatprep.subr.mxu0 0.0
    %1202 = vmatpush1.msra.mxu0 0.0
    %1203 = vmatprep.subr.mxu0 0.0
    %1204 = vmatpush1.msra.mxu0 0.0
    %1205 = vmatprep.subr.mxu0 0.0
    %1206 = vmatpush1.msra.mxu0 0.0
    %1207 = vmatprep.subr.mxu0 0.0
    %1208 = vmatpush1.msra.mxu0 0.0
    %1209 = vmatprep.mubr.f32.mxu0 0.0
    %1210 = vmatmul.mubr.f32.gmra.mrb[0].mxu0 %v1143
    %v1211 = vpop.f32.mrb[0].mxu0
    %v1212 = vadd.f32 0.0, %v1211
    %v1213 = vpop.f32.mrb[0].mxu0
    %1214 = vdwg.mxu0
    %v1215 = vadd.f32 %v1138, %v1212
    %v1217 = vlaneseq
    %v1218 = vshrl.u32 %v1217, 7
    %v1219 = vsub.s32 0, %v1218
    %v1220 = vrot.slane %v524, %v1219
    %v1222 = vadd.f32 %v1215, %v1220
    %v1223 = vmax.f32 %v1222, 0.0
    %v1224 = vld [vmem:[%s5] sm:$0xff]
    %v1225 = vld [vmem:[%s5 + $0x8] sm:$0xff]
    %s1226 = scalar_lea.vmem %s5, 16
    %v1227 = vld [vmem:[%s1226] sm:$0xff]
    %v1228 = vld [vmem:[%s1226 + $0x8] sm:$0xff]
    %v1230 = vrot.slane %v1223, 2
    %vm1231 = vcmask 130048
    %v1232 = vsel %vm1231, %v1230, 0
    %1234 = vmatprep.subr.mxu0 0.0
    %1235 = vmatpush1.msra.mxu0 %v1227
    %1236 = vmatprep.subr.mxu0 0.0
    %1237 = vmatpush1.msra.mxu0 %v1228
    %1238 = vmatprep.subr.mxu0 0.0
    %1239 = vmatpush1.msra.mxu0 0.0
    %1240 = vmatprep.subr.mxu0 0.0
    %1241 = vmatpush1.msra.mxu0 0.0
    %1242 = vmatprep.subr.mxu0 0.0
    %1243 = vmatpush1.msra.mxu0 0.0
    %1244 = vmatprep.subr.mxu0 0.0
    %1245 = vmatpush1.msra.mxu0 0.0
    %1246 = vmatprep.subr.mxu0 0.0
    %1247 = vmatpush1.msra.mxu0 0.0
    %1248 = vmatprep.subr.mxu0 0.0
    %1249 = vmatpush1.msra.mxu0 0.0
    %1250 = vmatprep.subr.mxu0 0.0
    %1251 = vmatpush1.msra.mxu0 0.0
    %1252 = vmatprep.subr.mxu0 0.0
    %1253 = vmatpush1.msra.mxu0 0.0
    %1254 = vmatprep.subr.mxu0 0.0
    %1255 = vmatpush1.msra.mxu0 0.0
    %1256 = vmatprep.subr.mxu0 0.0
    %1257 = vmatpush1.msra.mxu0 0.0
    %1258 = vmatprep.subr.mxu0 0.0
    %1259 = vmatpush1.msra.mxu0 0.0
    %1260 = vmatprep.subr.mxu0 0.0
    %1261 = vmatpush1.msra.mxu0 0.0
    %1262 = vmatprep.subr.mxu0 0.0
    %1263 = vmatpush1.msra.mxu0 0.0
    %1264 = vmatprep.subr.mxu0 0.0
    %1265 = vmatpush1.msra.mxu0 0.0
    %1266 = vmatprep.subr.mxu0 0.0
    %1267 = vmatpush1.msra.mxu0 0.0
    %1268 = vmatprep.subr.mxu0 0.0
    %1269 = vmatpush1.msra.mxu0 0.0
    %1270 = vmatprep.subr.mxu0 0.0
    %1271 = vmatpush1.msra.mxu0 0.0
    %1272 = vmatprep.subr.mxu0 0.0
    %1273 = vmatpush1.msra.mxu0 0.0
    %1274 = vmatprep.subr.mxu0 0.0
    %1275 = vmatpush1.msra.mxu0 0.0
    %1276 = vmatprep.subr.mxu0 0.0
    %1277 = vmatpush1.msra.mxu0 0.0
    %1278 = vmatprep.subr.mxu0 0.0
    %1279 = vmatpush1.msra.mxu0 0.0
    %1280 = vmatprep.subr.mxu0 0.0
    %1281 = vmatpush1.msra.mxu0 0.0
    %1282 = vmatprep.subr.mxu0 0.0
    %1283 = vmatpush1.msra.mxu0 0.0
    %1284 = vmatprep.subr.mxu0 0.0
    %1285 = vmatpush1.msra.mxu0 0.0
    %1286 = vmatprep.subr.mxu0 0.0
    %1287 = vmatpush1.msra.mxu0 0.0
    %1288 = vmatprep.subr.mxu0 0.0
    %1289 = vmatpush1.msra.mxu0 0.0
    %1290 = vmatprep.subr.mxu0 0.0
    %1291 = vmatpush1.msra.mxu0 0.0
    %1292 = vmatprep.subr.mxu0 0.0
    %1293 = vmatpush1.msra.mxu0 0.0
    %1294 = vmatprep.subr.mxu0 0.0
    %1295 = vmatpush1.msra.mxu0 0.0
    %1296 = vmatprep.subr.mxu0 0.0
    %1297 = vmatpush1.msra.mxu0 0.0
    %1298 = vmatprep.mubr.f32.mxu0 0.0
    %1299 = vmatmul.mubr.f32.gmra.mrb[0].mxu0 %v1232
    %v1300 = vpop.f32.mrb[0].mxu0
    %v1301 = vadd.f32 0.0, %v1300
    %v1302 = vpop.f32.mrb[0].mxu0
    %1303 = vdwg.mxu0
    %v1304 = vsel %vm1231, %v1223, 0
    %1306 = vmatprep.subr.mxu0 0.0
    %1307 = vmatpush1.msra.mxu0 %v1224
    %1308 = vmatprep.subr.mxu0 0.0
    %1309 = vmatpush1.msra.mxu0 %v1225
    %1310 = vmatprep.subr.mxu0 0.0
    %1311 = vmatpush1.msra.mxu0 0.0
    %1312 = vmatprep.subr.mxu0 0.0
    %1313 = vmatpush1.msra.mxu0 0.0
    %1314 = vmatprep.subr.mxu0 0.0
    %1315 = vmatpush1.msra.mxu0 0.0
    %1316 = vmatprep.subr.mxu0 0.0
    %1317 = vmatpush1.msra.mxu0 0.0
    %1318 = vmatprep.subr.mxu0 0.0
    %1319 = vmatpush1.msra.mxu0 0.0
    %1320 = vmatprep.subr.mxu0 0.0
    %1321 = vmatpush1.msra.mxu0 0.0
    %1322 = vmatprep.subr.mxu0 0.0
    %1323 = vmatpush1.msra.mxu0 0.0
    %1324 = vmatprep.subr.mxu0 0.0
    %1325 = vmatpush1.msra.mxu0 0.0
    %1326 = vmatprep.subr.mxu0 0.0
    %1327 = vmatpush1.msra.mxu0 0.0
    %1328 = vmatprep.subr.mxu0 0.0
    %1329 = vmatpush1.msra.mxu0 0.0
    %1330 = vmatprep.subr.mxu0 0.0
    %1331 = vmatpush1.msra.mxu0 0.0
    %1332 = vmatprep.subr.mxu0 0.0
    %1333 = vmatpush1.msra.mxu0 0.0
    %1334 = vmatprep.subr.mxu0 0.0
    %1335 = vmatpush1.msra.mxu0 0.0
    %1336 = vmatprep.subr.mxu0 0.0
    %1337 = vmatpush1.msra.mxu0 0.0
    %1338 = vmatprep.subr.mxu0 0.0
    %1339 = vmatpush1.msra.mxu0 0.0
    %1340 = vmatprep.subr.mxu0 0.0
    %1341 = vmatpush1.msra.mxu0 0.0
    %1342 = vmatprep.subr.mxu0 0.0
    %1343 = vmatpush1.msra.mxu0 0.0
    %1344 = vmatprep.subr.mxu0 0.0
    %1345 = vmatpush1.msra.mxu0 0.0
    %1346 = vmatprep.subr.mxu0 0.0
    %1347 = vmatpush1.msra.mxu0 0.0
    %1348 = vmatprep.subr.mxu0 0.0
    %1349 = vmatpush1.msra.mxu0 0.0
    %1350 = vmatprep.subr.mxu0 0.0
    %1351 = vmatpush1.msra.mxu0 0.0
    %1352 = vmatprep.subr.mxu0 0.0
    %1353 = vmatpush1.msra.mxu0 0.0
    %1354 = vmatprep.subr.mxu0 0.0
    %1355 = vmatpush1.msra.mxu0 0.0
    %1356 = vmatprep.subr.mxu0 0.0
    %1357 = vmatpush1.msra.mxu0 0.0
    %1358 = vmatprep.subr.mxu0 0.0
    %1359 = vmatpush1.msra.mxu0 0.0
    %1360 = vmatprep.subr.mxu0 0.0
    %1361 = vmatpush1.msra.mxu0 0.0
    %1362 = vmatprep.subr.mxu0 0.0
    %1363 = vmatpush1.msra.mxu0 0.0
    %1364 = vmatprep.subr.mxu0 0.0
    %1365 = vmatpush1.msra.mxu0 0.0
    %1366 = vmatprep.subr.mxu0 0.0
    %1367 = vmatpush1.msra.mxu0 0.0
    %1368 = vmatprep.subr.mxu0 0.0
    %1369 = vmatpush1.msra.mxu0 0.0
    %1370 = vmatprep.mubr.f32.mxu0 0.0
    %1371 = vmatmul.mubr.f32.gmra.mrb[0].mxu0 %v1304
    %v1372 = vpop.f32.mrb[0].mxu0
    %v1373 = vadd.f32 %v1301, %v1372
    %v1374 = vpop.f32.mrb[0].mxu0
    %1375 = vdwg.mxu0
    %s1376 = scalar_lea.vmem %s5, 32
    %v1377 = vld [vmem:[%s1376] sm:$0xff]
    %v1378 = vld [vmem:[%s1376 + $0x8] sm:$0xff]
    %v1379 = vrot.slane %v1223, 4
    %v1380 = vsel %vm1231, %v1379, 0
    %1382 = vmatprep.subr.mxu0 0.0
    %1383 = vmatpush1.msra.mxu0 %v1377
    %1384 = vmatprep.subr.mxu0 0.0
    %1385 = vmatpush1.msra.mxu0 %v1378
    %1386 = vmatprep.subr.mxu0 0.0
    %1387 = vmatpush1.msra.mxu0 0.0
    %1388 = vmatprep.subr.mxu0 0.0
    %1389 = vmatpush1.msra.mxu0 0.0
    %1390 = vmatprep.subr.mxu0 0.0
    %1391 = vmatpush1.msra.mxu0 0.0
    %1392 = vmatprep.subr.mxu0 0.0
    %1393 = vmatpush1.msra.mxu0 0.0
    %1394 = vmatprep.subr.mxu0 0.0
    %1395 = vmatpush1.msra.mxu0 0.0
    %1396 = vmatprep.subr.mxu0 0.0
    %1397 = vmatpush1.msra.mxu0 0.0
    %1398 = vmatprep.subr.mxu0 0.0
    %1399 = vmatpush1.msra.mxu0 0.0
    %1400 = vmatprep.subr.mxu0 0.0
    %1401 = vmatpush1.msra.mxu0 0.0
    %1402 = vmatprep.subr.mxu0 0.0
    %1403 = vmatpush1.msra.mxu0 0.0
    %1404 = vmatprep.subr.mxu0 0.0
    %1405 = vmatpush1.msra.mxu0 0.0
    %1406 = vmatprep.subr.mxu0 0.0
    %1407 = vmatpush1.msra.mxu0 0.0
    %1408 = vmatprep.subr.mxu0 0.0
    %1409 = vmatpush1.msra.mxu0 0.0
    %1410 = vmatprep.subr.mxu0 0.0
    %1411 = vmatpush1.msra.mxu0 0.0
    %1412 = vmatprep.subr.mxu0 0.0
    %1413 = vmatpush1.msra.mxu0 0.0
    %1414 = vmatprep.subr.mxu0 0.0
    %1415 = vmatpush1.msra.mxu0 0.0
    %1416 = vmatprep.subr.mxu0 0.0
    %1417 = vmatpush1.msra.mxu0 0.0
    %1418 = vmatprep.subr.mxu0 0.0
    %1419 = vmatpush1.msra.mxu0 0.0
    %1420 = vmatprep.subr.mxu0 0.0
    %1421 = vmatpush1.msra.mxu0 0.0
    %1422 = vmatprep.subr.mxu0 0.0
    %1423 = vmatpush1.msra.mxu0 0.0
    %1424 = vmatprep.subr.mxu0 0.0
    %1425 = vmatpush1.msra.mxu0 0.0
    %1426 = vmatprep.subr.mxu0 0.0
    %1427 = vmatpush1.msra.mxu0 0.0
    %1428 = vmatprep.subr.mxu0 0.0
    %1429 = vmatpush1.msra.mxu0 0.0
    %1430 = vmatprep.subr.mxu0 0.0
    %1431 = vmatpush1.msra.mxu0 0.0
    %1432 = vmatprep.subr.mxu0 0.0
    %1433 = vmatpush1.msra.mxu0 0.0
    %1434 = vmatprep.subr.mxu0 0.0
    %1435 = vmatpush1.msra.mxu0 0.0
    %1436 = vmatprep.subr.mxu0 0.0
    %1437 = vmatpush1.msra.mxu0 0.0
    %1438 = vmatprep.subr.mxu0 0.0
    %1439 = vmatpush1.msra.mxu0 0.0
    %1440 = vmatprep.subr.mxu0 0.0
    %1441 = vmatpush1.msra.mxu0 0.0
    %1442 = vmatprep.subr.mxu0 0.0
    %1443 = vmatpush1.msra.mxu0 0.0
    %1444 = vmatprep.subr.mxu0 0.0
    %1445 = vmatpush1.msra.mxu0 0.0
    %1446 = vmatprep.mubr.f32.mxu0 0.0
    %1447 = vmatmul.mubr.f32.gmra.mrb[0].mxu0 %v1380
    %v1448 = vpop.f32.mrb[0].mxu0
    %v1449 = vadd.f32 0.0, %v1448
    %v1450 = vpop.f32.mrb[0].mxu0
    %1451 = vdwg.mxu0
    %v1452 = vadd.f32 %v1373, %v1449
    %s1453 = scalar_lea.vmem %s5, 48
    %v1454 = vld [vmem:[%s1453] sm:$0xff]
    %v1455 = vld [vmem:[%s1453 + $0x8] sm:$0xff]
    %v1456 = vrot.slane %v1223, 6
    %v1457 = vsel %vm1231, %v1456, 0
    %1459 = vmatprep.subr.mxu0 0.0
    %1460 = vmatpush1.msra.mxu0 %v1454
    %1461 = vmatprep.subr.mxu0 0.0
    %1462 = vmatpush1.msra.mxu0 %v1455
    %1463 = vmatprep.subr.mxu0 0.0
    %1464 = vmatpush1.msra.mxu0 0.0
    %1465 = vmatprep.subr.mxu0 0.0
    %1466 = vmatpush1.msra.mxu0 0.0
    %1467 = vmatprep.subr.mxu0 0.0
    %1468 = vmatpush1.msra.mxu0 0.0
    %1469 = vmatprep.subr.mxu0 0.0
    %1470 = vmatpush1.msra.mxu0 0.0
    %1471 = vmatprep.subr.mxu0 0.0
    %1472 = vmatpush1.msra.mxu0 0.0
    %1473 = vmatprep.subr.mxu0 0.0
    %1474 = vmatpush1.msra.mxu0 0.0
    %1475 = vmatprep.subr.mxu0 0.0
    %1476 = vmatpush1.msra.mxu0 0.0
    %1477 = vmatprep.subr.mxu0 0.0
    %1478 = vmatpush1.msra.mxu0 0.0
    %1479 = vmatprep.subr.mxu0 0.0
    %1480 = vmatpush1.msra.mxu0 0.0
    %1481 = vmatprep.subr.mxu0 0.0
    %1482 = vmatpush1.msra.mxu0 0.0
    %1483 = vmatprep.subr.mxu0 0.0
    %1484 = vmatpush1.msra.mxu0 0.0
    %1485 = vmatprep.subr.mxu0 0.0
    %1486 = vmatpush1.msra.mxu0 0.0
    %1487 = vmatprep.subr.mxu0 0.0
    %1488 = vmatpush1.msra.mxu0 0.0
    %1489 = vmatprep.subr.mxu0 0.0
    %1490 = vmatpush1.msra.mxu0 0.0
    %1491 = vmatprep.subr.mxu0 0.0
    %1492 = vmatpush1.msra.mxu0 0.0
    %1493 = vmatprep.subr.mxu0 0.0
    %1494 = vmatpush1.msra.mxu0 0.0
    %1495 = vmatprep.subr.mxu0 0.0
    %1496 = vmatpush1.msra.mxu0 0.0
    %1497 = vmatprep.subr.mxu0 0.0
    %1498 = vmatpush1.msra.mxu0 0.0
    %1499 = vmatprep.subr.mxu0 0.0
    %1500 = vmatpush1.msra.mxu0 0.0
    %1501 = vmatprep.subr.mxu0 0.0
    %1502 = vmatpush1.msra.mxu0 0.0
    %1503 = vmatprep.subr.mxu0 0.0
    %1504 = vmatpush1.msra.mxu0 0.0
    %1505 = vmatprep.subr.mxu0 0.0
    %1506 = vmatpush1.msra.mxu0 0.0
    %1507 = vmatprep.subr.mxu0 0.0
    %1508 = vmatpush1.msra.mxu0 0.0
    %1509 = vmatprep.subr.mxu0 0.0
    %1510 = vmatpush1.msra.mxu0 0.0
    %1511 = vmatprep.subr.mxu0 0.0
    %1512 = vmatpush1.msra.mxu0 0.0
    %1513 = vmatprep.subr.mxu0 0.0
    %1514 = vmatpush1.msra.mxu0 0.0
    %1515 = vmatprep.subr.mxu0 0.0
    %1516 = vmatpush1.msra.mxu0 0.0
    %1517 = vmatprep.subr.mxu0 0.0
    %1518 = vmatpush1.msra.mxu0 0.0
    %1519 = vmatprep.subr.mxu0 0.0
    %1520 = vmatpush1.msra.mxu0 0.0
    %1521 = vmatprep.subr.mxu0 0.0
    %1522 = vmatpush1.msra.mxu0 0.0
    %1523 = vmatprep.mubr.f32.mxu0 0.0
    %1524 = vmatmul.mubr.f32.gmra.mrb[0].mxu0 %v1457
    %v1525 = vpop.f32.mrb[0].mxu0
    %v1526 = vadd.f32 0.0, %v1525
    %v1527 = vpop.f32.mrb[0].mxu0
    %1528 = vdwg.mxu0
    %v1529 = vadd.f32 %v1452, %v1526
    %1530 = vmatprep.subr.mxu0 0.0
    %1531 = vmatpush1.msra.mxu0 %v530
    %1532 = vmatprep.subr.mxu0 0.0
    %1533 = vmatpush1.msra.mxu0 0.0
    %1534 = vmatprep.subr.mxu0 0.0
    %1535 = vmatpush1.msra.mxu0 0.0
    %1536 = vmatprep.subr.mxu0 0.0
    %1537 = vmatpush1.msra.mxu0 0.0
    %1538 = vmatprep.subr.mxu0 0.0
    %1539 = vmatpush1.msra.mxu0 0.0
    %1540 = vmatprep.subr.mxu0 0.0
    %1541 = vmatpush1.msra.mxu0 0.0
    %1542 = vmatprep.subr.mxu0 0.0
    %1543 = vmatpush1.msra.mxu0 0.0
    %1544 = vmatprep.subr.mxu0 0.0
    %1545 = vmatpush1.msra.mxu0 0.0
    %1546 = vmatprep.subr.mxu0 0.0
    %1547 = vmatpush1.msra.mxu0 0.0
    %1548 = vmatprep.subr.mxu0 0.0
    %1549 = vmatpush1.msra.mxu0 0.0
    %1550 = vmatprep.subr.mxu0 0.0
    %1551 = vmatpush1.msra.mxu0 0.0
    %1552 = vmatprep.subr.mxu0 0.0
    %1553 = vmatpush1.msra.mxu0 0.0
    %1554 = vmatprep.subr.mxu0 0.0
    %1555 = vmatpush1.msra.mxu0 0.0
    %1556 = vmatprep.subr.mxu0 0.0
    %1557 = vmatpush1.msra.mxu0 0.0
    %1558 = vmatprep.subr.mxu0 0.0
    %1559 = vmatpush1.msra.mxu0 0.0
    %1560 = vmatprep.subr.mxu0 0.0
    %1561 = vmatpush1.msra.mxu0 0.0
    %1562 = vmatprep.subr.mxu0 0.0
    %1563 = vmatpush1.msra.mxu0 0.0
    %1564 = vmatprep.subr.mxu0 0.0
    %1565 = vmatpush1.msra.mxu0 0.0
    %1566 = vmatprep.subr.mxu0 0.0
    %1567 = vmatpush1.msra.mxu0 0.0
    %1568 = vmatprep.subr.mxu0 0.0
    %1569 = vmatpush1.msra.mxu0 0.0
    %1570 = vmatprep.subr.mxu0 0.0
    %1571 = vmatpush1.msra.mxu0 0.0
    %1572 = vmatprep.subr.mxu0 0.0
    %1573 = vmatpush1.msra.mxu0 0.0
    %1574 = vmatprep.subr.mxu0 0.0
    %1575 = vmatpush1.msra.mxu0 0.0
    %1576 = vmatprep.subr.mxu0 0.0
    %1577 = vmatpush1.msra.mxu0 0.0
    %1578 = vmatprep.subr.mxu0 0.0
    %1579 = vmatpush1.msra.mxu0 0.0
    %1580 = vmatprep.subr.mxu0 0.0
    %1581 = vmatpush1.msra.mxu0 0.0
    %1582 = vmatprep.subr.mxu0 0.0
    %1583 = vmatpush1.msra.mxu0 0.0
    %1584 = vmatprep.subr.mxu0 0.0
    %1585 = vmatpush1.msra.mxu0 0.0
    %1586 = vmatprep.subr.mxu0 0.0
    %1587 = vmatpush1.msra.mxu0 0.0
    %1588 = vmatprep.subr.mxu0 0.0
    %1589 = vmatpush1.msra.mxu0 0.0
    %1590 = vmatprep.subr.mxu0 0.0
    %1591 = vmatpush1.msra.mxu0 0.0
    %1592 = vmatprep.subr.mxu0 0.0
    %1593 = vmatpush1.msra.mxu0 0.0
    %1594 = vmatprep.mubr.f32.mxu0 0.0
    %1595 = vmatmul.mubr.f32.gmra.mrb[0].mxu0 %v1066
    %v1596 = vpop.f32.mrb[0].mxu0
    %v1597 = vadd.f32 0.0, %v1596
    %v1598 = vpop.f32.mrb[0].mxu0
    %1599 = vdwg.mxu0
    %1600 = vmatprep.subr.mxu0 0.0
    %1601 = vmatpush1.msra.mxu0 %v527
    %1602 = vmatprep.subr.mxu0 0.0
    %1603 = vmatpush1.msra.mxu0 0.0
    %1604 = vmatprep.subr.mxu0 0.0
    %1605 = vmatpush1.msra.mxu0 0.0
    %1606 = vmatprep.subr.mxu0 0.0
    %1607 = vmatpush1.msra.mxu0 0.0
    %1608 = vmatprep.subr.mxu0 0.0
    %1609 = vmatpush1.msra.mxu0 0.0
    %1610 = vmatprep.subr.mxu0 0.0
    %1611 = vmatpush1.msra.mxu0 0.0
    %1612 = vmatprep.subr.mxu0 0.0
    %1613 = vmatpush1.msra.mxu0 0.0
    %1614 = vmatprep.subr.mxu0 0.0
    %1615 = vmatpush1.msra.mxu0 0.0
    %1616 = vmatprep.subr.mxu0 0.0
    %1617 = vmatpush1.msra.mxu0 0.0
    %1618 = vmatprep.subr.mxu0 0.0
    %1619 = vmatpush1.msra.mxu0 0.0
    %1620 = vmatprep.subr.mxu0 0.0
    %1621 = vmatpush1.msra.mxu0 0.0
    %1622 = vmatprep.subr.mxu0 0.0
    %1623 = vmatpush1.msra.mxu0 0.0
    %1624 = vmatprep.subr.mxu0 0.0
    %1625 = vmatpush1.msra.mxu0 0.0
    %1626 = vmatprep.subr.mxu0 0.0
    %1627 = vmatpush1.msra.mxu0 0.0
    %1628 = vmatprep.subr.mxu0 0.0
    %1629 = vmatpush1.msra.mxu0 0.0
    %1630 = vmatprep.subr.mxu0 0.0
    %1631 = vmatpush1.msra.mxu0 0.0
    %1632 = vmatprep.subr.mxu0 0.0
    %1633 = vmatpush1.msra.mxu0 0.0
    %1634 = vmatprep.subr.mxu0 0.0
    %1635 = vmatpush1.msra.mxu0 0.0
    %1636 = vmatprep.subr.mxu0 0.0
    %1637 = vmatpush1.msra.mxu0 0.0
    %1638 = vmatprep.subr.mxu0 0.0
    %1639 = vmatpush1.msra.mxu0 0.0
    %1640 = vmatprep.subr.mxu0 0.0
    %1641 = vmatpush1.msra.mxu0 0.0
    %1642 = vmatprep.subr.mxu0 0.0
    %1643 = vmatpush1.msra.mxu0 0.0
    %1644 = vmatprep.subr.mxu0 0.0
    %1645 = vmatpush1.msra.mxu0 0.0
    %1646 = vmatprep.subr.mxu0 0.0
    %1647 = vmatpush1.msra.mxu0 0.0
    %1648 = vmatprep.subr.mxu0 0.0
    %1649 = vmatpush1.msra.mxu0 0.0
    %1650 = vmatprep.subr.mxu0 0.0
    %1651 = vmatpush1.msra.mxu0 0.0
    %1652 = vmatprep.subr.mxu0 0.0
    %1653 = vmatpush1.msra.mxu0 0.0
    %1654 = vmatprep.subr.mxu0 0.0
    %1655 = vmatpush1.msra.mxu0 0.0
    %1656 = vmatprep.subr.mxu0 0.0
    %1657 = vmatpush1.msra.mxu0 0.0
    %1658 = vmatprep.subr.mxu0 0.0
    %1659 = vmatpush1.msra.mxu0 0.0
    %1660 = vmatprep.subr.mxu0 0.0
    %1661 = vmatpush1.msra.mxu0 0.0
    %1662 = vmatprep.subr.mxu0 0.0
    %1663 = vmatpush1.msra.mxu0 0.0
    %1664 = vmatprep.mubr.f32.mxu0 0.0
    %1665 = vmatmul.mubr.f32.gmra.mrb[0].mxu0 %v989
    %v1666 = vpop.f32.mrb[0].mxu0
    %v1667 = vadd.f32 %v1597, %v1666
    %v1668 = vpop.f32.mrb[0].mxu0
    %1669 = vdwg.mxu0
    %1670 = vmatprep.subr.mxu0 0.0
    %1671 = vmatpush1.msra.mxu0 %v679
    %1672 = vmatprep.subr.mxu0 0.0
    %1673 = vmatpush1.msra.mxu0 0.0
    %1674 = vmatprep.subr.mxu0 0.0
    %1675 = vmatpush1.msra.mxu0 0.0
    %1676 = vmatprep.subr.mxu0 0.0
    %1677 = vmatpush1.msra.mxu0 0.0
    %1678 = vmatprep.subr.mxu0 0.0
    %1679 = vmatpush1.msra.mxu0 0.0
    %1680 = vmatprep.subr.mxu0 0.0
    %1681 = vmatpush1.msra.mxu0 0.0
    %1682 = vmatprep.subr.mxu0 0.0
    %1683 = vmatpush1.msra.mxu0 0.0
    %1684 = vmatprep.subr.mxu0 0.0
    %1685 = vmatpush1.msra.mxu0 0.0
    %1686 = vmatprep.subr.mxu0 0.0
    %1687 = vmatpush1.msra.mxu0 0.0
    %1688 = vmatprep.subr.mxu0 0.0
    %1689 = vmatpush1.msra.mxu0 0.0
    %1690 = vmatprep.subr.mxu0 0.0
    %1691 = vmatpush1.msra.mxu0 0.0
    %1692 = vmatprep.subr.mxu0 0.0
    %1693 = vmatpush1.msra.mxu0 0.0
    %1694 = vmatprep.subr.mxu0 0.0
    %1695 = vmatpush1.msra.mxu0 0.0
    %1696 = vmatprep.subr.mxu0 0.0
    %1697 = vmatpush1.msra.mxu0 0.0
    %1698 = vmatprep.subr.mxu0 0.0
    %1699 = vmatpush1.msra.mxu0 0.0
    %1700 = vmatprep.subr.mxu0 0.0
    %1701 = vmatpush1.msra.mxu0 0.0
    %1702 = vmatprep.subr.mxu0 0.0
    %1703 = vmatpush1.msra.mxu0 0.0
    %1704 = vmatprep.subr.mxu0 0.0
    %1705 = vmatpush1.msra.mxu0 0.0
    %1706 = vmatprep.subr.mxu0 0.0
    %1707 = vmatpush1.msra.mxu0 0.0
    %1708 = vmatprep.subr.mxu0 0.0
    %1709 = vmatpush1.msra.mxu0 0.0
    %1710 = vmatprep.subr.mxu0 0.0
    %1711 = vmatpush1.msra.mxu0 0.0
    %1712 = vmatprep.subr.mxu0 0.0
    %1713 = vmatpush1.msra.mxu0 0.0
    %1714 = vmatprep.subr.mxu0 0.0
    %1715 = vmatpush1.msra.mxu0 0.0
    %1716 = vmatprep.subr.mxu0 0.0
    %1717 = vmatpush1.msra.mxu0 0.0
    %1718 = vmatprep.subr.mxu0 0.0
    %1719 = vmatpush1.msra.mxu0 0.0
    %1720 = vmatprep.subr.mxu0 0.0
    %1721 = vmatpush1.msra.mxu0 0.0
    %1722 = vmatprep.subr.mxu0 0.0
    %1723 = vmatpush1.msra.mxu0 0.0
    %1724 = vmatprep.subr.mxu0 0.0
    %1725 = vmatpush1.msra.mxu0 0.0
    %1726 = vmatprep.subr.mxu0 0.0
    %1727 = vmatpush1.msra.mxu0 0.0
    %1728 = vmatprep.subr.mxu0 0.0
    %1729 = vmatpush1.msra.mxu0 0.0
    %1730 = vmatprep.subr.mxu0 0.0
    %1731 = vmatpush1.msra.mxu0 0.0
    %1732 = vmatprep.subr.mxu0 0.0
    %1733 = vmatpush1.msra.mxu0 0.0
    %1734 = vmatprep.mubr.f32.mxu0 0.0
    %1735 = vmatmul.mubr.f32.gmra.mrb[0].mxu0 %v1143
    %v1736 = vpop.f32.mrb[0].mxu0
    %v1737 = vadd.f32 0.0, %v1736
    %v1738 = vpop.f32.mrb[0].mxu0
    %1739 = vdwg.mxu0
    %v1740 = vadd.f32 %v1667, %v1737
    %v1741 = vld [vmem:[#allocation2 + $0x6e] sm:$0xff]
    %v1743 = vsel %vm42, %v1741, 0
    %1745 = vmatprep.subr.mxu0 0.0
    %1746 = vmatpush1.msra.mxu0 %v756
    %1747 = vmatprep.subr.mxu0 0.0
    %1748 = vmatpush1.msra.mxu0 0.0
    %1749 = vmatprep.subr.mxu0 0.0
    %1750 = vmatpush1.msra.mxu0 0.0
    %1751 = vmatprep.subr.mxu0 0.0
    %1752 = vmatpush1.msra.mxu0 0.0
    %1753 = vmatprep.subr.mxu0 0.0
    %1754 = vmatpush1.msra.mxu0 0.0
    %1755 = vmatprep.subr.mxu0 0.0
    %1756 = vmatpush1.msra.mxu0 0.0
    %1757 = vmatprep.subr.mxu0 0.0
    %1758 = vmatpush1.msra.mxu0 0.0
    %1759 = vmatprep.subr.mxu0 0.0
    %1760 = vmatpush1.msra.mxu0 0.0
    %1761 = vmatprep.subr.mxu0 0.0
    %1762 = vmatpush1.msra.mxu0 0.0
    %1763 = vmatprep.subr.mxu0 0.0
    %1764 = vmatpush1.msra.mxu0 0.0
    %1765 = vmatprep.subr.mxu0 0.0
    %1766 = vmatpush1.msra.mxu0 0.0
    %1767 = vmatprep.subr.mxu0 0.0
    %1768 = vmatpush1.msra.mxu0 0.0
    %1769 = vmatprep.subr.mxu0 0.0
    %1770 = vmatpush1.msra.mxu0 0.0
    %1771 = vmatprep.subr.mxu0 0.0
    %1772 = vmatpush1.msra.mxu0 0.0
    %1773 = vmatprep.subr.mxu0 0.0
    %1774 = vmatpush1.msra.mxu0 0.0
    %1775 = vmatprep.subr.mxu0 0.0
    %1776 = vmatpush1.msra.mxu0 0.0
    %1777 = vmatprep.subr.mxu0 0.0
    %1778 = vmatpush1.msra.mxu0 0.0
    %1779 = vmatprep.subr.mxu0 0.0
    %1780 = vmatpush1.msra.mxu0 0.0
    %1781 = vmatprep.subr.mxu0 0.0
    %1782 = vmatpush1.msra.mxu0 0.0
    %1783 = vmatprep.subr.mxu0 0.0
    %1784 = vmatpush1.msra.mxu0 0.0
    %1785 = vmatprep.subr.mxu0 0.0
    %1786 = vmatpush1.msra.mxu0 0.0
    %1787 = vmatprep.subr.mxu0 0.0
    %1788 = vmatpush1.msra.mxu0 0.0
    %1789 = vmatprep.subr.mxu0 0.0
    %1790 = vmatpush1.msra.mxu0 0.0
    %1791 = vmatprep.subr.mxu0 0.0
    %1792 = vmatpush1.msra.mxu0 0.0
    %1793 = vmatprep.subr.mxu0 0.0
    %1794 = vmatpush1.msra.mxu0 0.0
    %1795 = vmatprep.subr.mxu0 0.0
    %1796 = vmatpush1.msra.mxu0 0.0
    %1797 = vmatprep.subr.mxu0 0.0
    %1798 = vmatpush1.msra.mxu0 0.0
    %1799 = vmatprep.subr.mxu0 0.0
    %1800 = vmatpush1.msra.mxu0 0.0
    %1801 = vmatprep.subr.mxu0 0.0
    %1802 = vmatpush1.msra.mxu0 0.0
    %1803 = vmatprep.subr.mxu0 0.0
    %1804 = vmatpush1.msra.mxu0 0.0
    %1805 = vmatprep.subr.mxu0 0.0
    %1806 = vmatpush1.msra.mxu0 0.0
    %1807 = vmatprep.subr.mxu0 0.0
    %1808 = vmatpush1.msra.mxu0 0.0
    %1809 = vmatprep.mubr.f32.mxu0 0.0
    %1810 = vmatmul.mubr.f32.gmra.mrb[0].mxu0 %v1743
    %v1811 = vpop.f32.mrb[0].mxu0
    %v1812 = vadd.f32 0.0, %v1811
    %v1813 = vpop.f32.mrb[0].mxu0
    %1814 = vdwg.mxu0
    %v1815 = vadd.f32 %v1740, %v1812
    %v1816 = vld [vmem:[#allocation2 + $0xa0] sm:$0xff]
    %v1818 = vsel %vm42, %v1816, 0
    %1820 = vmatprep.subr.mxu0 0.0
    %1821 = vmatpush1.msra.mxu0 %v833
    %1822 = vmatprep.subr.mxu0 0.0
    %1823 = vmatpush1.msra.mxu0 0.0
    %1824 = vmatprep.subr.mxu0 0.0
    %1825 = vmatpush1.msra.mxu0 0.0
    %1826 = vmatprep.subr.mxu0 0.0
    %1827 = vmatpush1.msra.mxu0 0.0
    %1828 = vmatprep.subr.mxu0 0.0
    %1829 = vmatpush1.msra.mxu0 0.0
    %1830 = vmatprep.subr.mxu0 0.0
    %1831 = vmatpush1.msra.mxu0 0.0
    %1832 = vmatprep.subr.mxu0 0.0
    %1833 = vmatpush1.msra.mxu0 0.0
    %1834 = vmatprep.subr.mxu0 0.0
    %1835 = vmatpush1.msra.mxu0 0.0
    %1836 = vmatprep.subr.mxu0 0.0
    %1837 = vmatpush1.msra.mxu0 0.0
    %1838 = vmatprep.subr.mxu0 0.0
    %1839 = vmatpush1.msra.mxu0 0.0
    %1840 = vmatprep.subr.mxu0 0.0
    %1841 = vmatpush1.msra.mxu0 0.0
    %1842 = vmatprep.subr.mxu0 0.0
    %1843 = vmatpush1.msra.mxu0 0.0
    %1844 = vmatprep.subr.mxu0 0.0
    %1845 = vmatpush1.msra.mxu0 0.0
    %1846 = vmatprep.subr.mxu0 0.0
    %1847 = vmatpush1.msra.mxu0 0.0
    %1848 = vmatprep.subr.mxu0 0.0
    %1849 = vmatpush1.msra.mxu0 0.0
    %1850 = vmatprep.subr.mxu0 0.0
    %1851 = vmatpush1.msra.mxu0 0.0
    %1852 = vmatprep.subr.mxu0 0.0
    %1853 = vmatpush1.msra.mxu0 0.0
    %1854 = vmatprep.subr.mxu0 0.0
    %1855 = vmatpush1.msra.mxu0 0.0
    %1856 = vmatprep.subr.mxu0 0.0
    %1857 = vmatpush1.msra.mxu0 0.0
    %1858 = vmatprep.subr.mxu0 0.0
    %1859 = vmatpush1.msra.mxu0 0.0
    %1860 = vmatprep.subr.mxu0 0.0
    %1861 = vmatpush1.msra.mxu0 0.0
    %1862 = vmatprep.subr.mxu0 0.0
    %1863 = vmatpush1.msra.mxu0 0.0
    %1864 = vmatprep.subr.mxu0 0.0
    %1865 = vmatpush1.msra.mxu0 0.0
    %1866 = vmatprep.subr.mxu0 0.0
    %1867 = vmatpush1.msra.mxu0 0.0
    %1868 = vmatprep.subr.mxu0 0.0
    %1869 = vmatpush1.msra.mxu0 0.0
    %1870 = vmatprep.subr.mxu0 0.0
    %1871 = vmatpush1.msra.mxu0 0.0
    %1872 = vmatprep.subr.mxu0 0.0
    %1873 = vmatpush1.msra.mxu0 0.0
    %1874 = vmatprep.subr.mxu0 0.0
    %1875 = vmatpush1.msra.mxu0 0.0
    %1876 = vmatprep.subr.mxu0 0.0
    %1877 = vmatpush1.msra.mxu0 0.0
    %1878 = vmatprep.subr.mxu0 0.0
    %1879 = vmatpush1.msra.mxu0 0.0
    %1880 = vmatprep.subr.mxu0 0.0
    %1881 = vmatpush1.msra.mxu0 0.0
    %1882 = vmatprep.subr.mxu0 0.0
    %1883 = vmatpush1.msra.mxu0 0.0
    %1884 = vmatprep.mubr.f32.mxu0 0.0
    %1885 = vmatmul.mubr.f32.gmra.mrb[0].mxu0 %v1818
    %v1886 = vpop.f32.mrb[0].mxu0
    %v1887 = vadd.f32 0.0, %v1886
    %v1888 = vpop.f32.mrb[0].mxu0
    %1889 = vdwg.mxu0
    %v1890 = vadd.f32 %v1815, %v1887
    %v1891 = vld [vmem:[#allocation2 + $0x70] sm:$0xff]
    %v1893 = vsel %vm42, %v1891, 0
    %1895 = vmatprep.subr.mxu0 0.0
    %1896 = vmatpush1.msra.mxu0 %v910
    %1897 = vmatprep.subr.mxu0 0.0
    %1898 = vmatpush1.msra.mxu0 0.0
    %1899 = vmatprep.subr.mxu0 0.0
    %1900 = vmatpush1.msra.mxu0 0.0
    %1901 = vmatprep.subr.mxu0 0.0
    %1902 = vmatpush1.msra.mxu0 0.0
    %1903 = vmatprep.subr.mxu0 0.0
    %1904 = vmatpush1.msra.mxu0 0.0
    %1905 = vmatprep.subr.mxu0 0.0
    %1906 = vmatpush1.msra.mxu0 0.0
    %1907 = vmatprep.subr.mxu0 0.0
    %1908 = vmatpush1.msra.mxu0 0.0
    %1909 = vmatprep.subr.mxu0 0.0
    %1910 = vmatpush1.msra.mxu0 0.0
    %1911 = vmatprep.subr.mxu0 0.0
    %1912 = vmatpush1.msra.mxu0 0.0
    %1913 = vmatprep.subr.mxu0 0.0
    %1914 = vmatpush1.msra.mxu0 0.0
    %1915 = vmatprep.subr.mxu0 0.0
    %1916 = vmatpush1.msra.mxu0 0.0
    %1917 = vmatprep.subr.mxu0 0.0
    %1918 = vmatpush1.msra.mxu0 0.0
    %1919 = vmatprep.subr.mxu0 0.0
    %1920 = vmatpush1.msra.mxu0 0.0
    %1921 = vmatprep.subr.mxu0 0.0
    %1922 = vmatpush1.msra.mxu0 0.0
    %1923 = vmatprep.subr.mxu0 0.0
    %1924 = vmatpush1.msra.mxu0 0.0
    %1925 = vmatprep.subr.mxu0 0.0
    %1926 = vmatpush1.msra.mxu0 0.0
    %1927 = vmatprep.subr.mxu0 0.0
    %1928 = vmatpush1.msra.mxu0 0.0
    %1929 = vmatprep.subr.mxu0 0.0
    %1930 = vmatpush1.msra.mxu0 0.0
    %1931 = vmatprep.subr.mxu0 0.0
    %1932 = vmatpush1.msra.mxu0 0.0
    %1933 = vmatprep.subr.mxu0 0.0
    %1934 = vmatpush1.msra.mxu0 0.0
    %1935 = vmatprep.subr.mxu0 0.0
    %1936 = vmatpush1.msra.mxu0 0.0
    %1937 = vmatprep.subr.mxu0 0.0
    %1938 = vmatpush1.msra.mxu0 0.0
    %1939 = vmatprep.subr.mxu0 0.0
    %1940 = vmatpush1.msra.mxu0 0.0
    %1941 = vmatprep.subr.mxu0 0.0
    %1942 = vmatpush1.msra.mxu0 0.0
    %1943 = vmatprep.subr.mxu0 0.0
    %1944 = vmatpush1.msra.mxu0 0.0
    %1945 = vmatprep.subr.mxu0 0.0
    %1946 = vmatpush1.msra.mxu0 0.0
    %1947 = vmatprep.subr.mxu0 0.0
    %1948 = vmatpush1.msra.mxu0 0.0
    %1949 = vmatprep.subr.mxu0 0.0
    %1950 = vmatpush1.msra.mxu0 0.0
    %1951 = vmatprep.subr.mxu0 0.0
    %1952 = vmatpush1.msra.mxu0 0.0
    %1953 = vmatprep.subr.mxu0 0.0
    %1954 = vmatpush1.msra.mxu0 0.0
    %1955 = vmatprep.subr.mxu0 0.0
    %1956 = vmatpush1.msra.mxu0 0.0
    %1957 = vmatprep.subr.mxu0 0.0
    %1958 = vmatpush1.msra.mxu0 0.0
    %1959 = vmatprep.mubr.f32.mxu0 0.0
    %1960 = vmatmul.mubr.f32.gmra.mrb[0].mxu0 %v1893
    %v1961 = vpop.f32.mrb[0].mxu0
    %v1962 = vadd.f32 0.0, %v1961
    %v1963 = vpop.f32.mrb[0].mxu0
    %1964 = vdwg.mxu0
    %v1965 = vadd.f32 %v1890, %v1962
    %v1966 = vld [vmem:[#allocation2 + $0x14] sm:$0xff]
    %v1968 = vsel %vm42, %v1966, 0
    %1970 = vmatprep.subr.mxu0 0.0
    %1971 = vmatpush1.msra.mxu0 %v987
    %1972 = vmatprep.subr.mxu0 0.0
    %1973 = vmatpush1.msra.mxu0 0.0
    %1974 = vmatprep.subr.mxu0 0.0
    %1975 = vmatpush1.msra.mxu0 0.0
    %1976 = vmatprep.subr.mxu0 0.0
    %1977 = vmatpush1.msra.mxu0 0.0
    %1978 = vmatprep.subr.mxu0 0.0
    %1979 = vmatpush1.msra.mxu0 0.0
    %1980 = vmatprep.subr.mxu0 0.0
    %1981 = vmatpush1.msra.mxu0 0.0
    %1982 = vmatprep.subr.mxu0 0.0
    %1983 = vmatpush1.msra.mxu0 0.0
    %1984 = vmatprep.subr.mxu0 0.0
    %1985 = vmatpush1.msra.mxu0 0.0
    %1986 = vmatprep.subr.mxu0 0.0
    %1987 = vmatpush1.msra.mxu0 0.0
    %1988 = vmatprep.subr.mxu0 0.0
    %1989 = vmatpush1.msra.mxu0 0.0
    %1990 = vmatprep.subr.mxu0 0.0
    %1991 = vmatpush1.msra.mxu0 0.0
    %1992 = vmatprep.subr.mxu0 0.0
    %1993 = vmatpush1.msra.mxu0 0.0
    %1994 = vmatprep.subr.mxu0 0.0
    %1995 = vmatpush1.msra.mxu0 0.0
    %1996 = vmatprep.subr.mxu0 0.0
    %1997 = vmatpush1.msra.mxu0 0.0
    %1998 = vmatprep.subr.mxu0 0.0
    %1999 = vmatpush1.msra.mxu0 0.0
    %2000 = vmatprep.subr.mxu0 0.0
    %2001 = vmatpush1.msra.mxu0 0.0
    %2002 = vmatprep.subr.mxu0 0.0
    %2003 = vmatpush1.msra.mxu0 0.0
    %2004 = vmatprep.subr.mxu0 0.0
    %2005 = vmatpush1.msra.mxu0 0.0
    %2006 = vmatprep.subr.mxu0 0.0
    %2007 = vmatpush1.msra.mxu0 0.0
    %2008 = vmatprep.subr.mxu0 0.0
    %2009 = vmatpush1.msra.mxu0 0.0
    %2010 = vmatprep.subr.mxu0 0.0
    %2011 = vmatpush1.msra.mxu0 0.0
    %2012 = vmatprep.subr.mxu0 0.0
    %2013 = vmatpush1.msra.mxu0 0.0
    %2014 = vmatprep.subr.mxu0 0.0
    %2015 = vmatpush1.msra.mxu0 0.0
    %2016 = vmatprep.subr.mxu0 0.0
    %2017 = vmatpush1.msra.mxu0 0.0
    %2018 = vmatprep.subr.mxu0 0.0
    %2019 = vmatpush1.msra.mxu0 0.0
    %2020 = vmatprep.subr.mxu0 0.0
    %2021 = vmatpush1.msra.mxu0 0.0
    %2022 = vmatprep.subr.mxu0 0.0
    %2023 = vmatpush1.msra.mxu0 0.0
    %2024 = vmatprep.subr.mxu0 0.0
    %2025 = vmatpush1.msra.mxu0 0.0
    %2026 = vmatprep.subr.mxu0 0.0
    %2027 = vmatpush1.msra.mxu0 0.0
    %2028 = vmatprep.subr.mxu0 0.0
    %2029 = vmatpush1.msra.mxu0 0.0
    %2030 = vmatprep.subr.mxu0 0.0
    %2031 = vmatpush1.msra.mxu0 0.0
    %2032 = vmatprep.subr.mxu0 0.0
    %2033 = vmatpush1.msra.mxu0 0.0
    %2034 = vmatprep.mubr.f32.mxu0 0.0
    %2035 = vmatmul.mubr.f32.gmra.mrb[0].mxu0 %v1968
    %v2036 = vpop.f32.mrb[0].mxu0
    %v2037 = vadd.f32 0.0, %v2036
    %v2038 = vpop.f32.mrb[0].mxu0
    %2039 = vdwg.mxu0
    %v2040 = vadd.f32 %v1965, %v2037
    %v2041 = vld [vmem:[#allocation2 + $0x46] sm:$0xff]
    %v2043 = vsel %vm42, %v2041, 0
    %2045 = vmatprep.subr.mxu0 0.0
    %2046 = vmatpush1.msra.mxu0 %v1064
    %2047 = vmatprep.subr.mxu0 0.0
    %2048 = vmatpush1.msra.mxu0 0.0
    %2049 = vmatprep.subr.mxu0 0.0
    %2050 = vmatpush1.msra.mxu0 0.0
    %2051 = vmatprep.subr.mxu0 0.0
    %2052 = vmatpush1.msra.mxu0 0.0
    %2053 = vmatprep.subr.mxu0 0.0
    %2054 = vmatpush1.msra.mxu0 0.0
    %2055 = vmatprep.subr.mxu0 0.0
    %2056 = vmatpush1.msra.mxu0 0.0
    %2057 = vmatprep.subr.mxu0 0.0
    %2058 = vmatpush1.msra.mxu0 0.0
    %2059 = vmatprep.subr.mxu0 0.0
    %2060 = vmatpush1.msra.mxu0 0.0
    %2061 = vmatprep.subr.mxu0 0.0
    %2062 = vmatpush1.msra.mxu0 0.0
    %2063 = vmatprep.subr.mxu0 0.0
    %2064 = vmatpush1.msra.mxu0 0.0
    %2065 = vmatprep.subr.mxu0 0.0
    %2066 = vmatpush1.msra.mxu0 0.0
    %2067 = vmatprep.subr.mxu0 0.0
    %2068 = vmatpush1.msra.mxu0 0.0
    %2069 = vmatprep.subr.mxu0 0.0
    %2070 = vmatpush1.msra.mxu0 0.0
    %2071 = vmatprep.subr.mxu0 0.0
    %2072 = vmatpush1.msra.mxu0 0.0
    %2073 = vmatprep.subr.mxu0 0.0
    %2074 = vmatpush1.msra.mxu0 0.0
    %2075 = vmatprep.subr.mxu0 0.0
    %2076 = vmatpush1.msra.mxu0 0.0
    %2077 = vmatprep.subr.mxu0 0.0
    %2078 = vmatpush1.msra.mxu0 0.0
    %2079 = vmatprep.subr.mxu0 0.0
    %2080 = vmatpush1.msra.mxu0 0.0
    %2081 = vmatprep.subr.mxu0 0.0
    %2082 = vmatpush1.msra.mxu0 0.0
    %2083 = vmatprep.subr.mxu0 0.0
    %2084 = vmatpush1.msra.mxu0 0.0
    %2085 = vmatprep.subr.mxu0 0.0
    %2086 = vmatpush1.msra.mxu0 0.0
    %2087 = vmatprep.subr.mxu0 0.0
    %2088 = vmatpush1.msra.mxu0 0.0
    %2089 = vmatprep.subr.mxu0 0.0
    %2090 = vmatpush1.msra.mxu0 0.0
    %2091 = vmatprep.subr.mxu0 0.0
    %2092 = vmatpush1.msra.mxu0 0.0
    %2093 = vmatprep.subr.mxu0 0.0
    %2094 = vmatpush1.msra.mxu0 0.0
    %2095 = vmatprep.subr.mxu0 0.0
    %2096 = vmatpush1.msra.mxu0 0.0
    %2097 = vmatprep.subr.mxu0 0.0
    %2098 = vmatpush1.msra.mxu0 0.0
    %2099 = vmatprep.subr.mxu0 0.0
    %2100 = vmatpush1.msra.mxu0 0.0
    %2101 = vmatprep.subr.mxu0 0.0
    %2102 = vmatpush1.msra.mxu0 0.0
    %2103 = vmatprep.subr.mxu0 0.0
    %2104 = vmatpush1.msra.mxu0 0.0
    %2105 = vmatprep.subr.mxu0 0.0
    %2106 = vmatpush1.msra.mxu0 0.0
    %2107 = vmatprep.subr.mxu0 0.0
    %2108 = vmatpush1.msra.mxu0 0.0
    %2109 = vmatprep.mubr.f32.mxu0 0.0
    %2110 = vmatmul.mubr.f32.gmra.mrb[0].mxu0 %v2043
    %v2111 = vpop.f32.mrb[0].mxu0
    %v2112 = vadd.f32 0.0, %v2111
    %v2113 = vpop.f32.mrb[0].mxu0
    %2114 = vdwg.mxu0
    %v2115 = vadd.f32 %v2040, %v2112
    %v2116 = vld [vmem:[#allocation2 + $0x16] sm:$0xff]
    %v2118 = vsel %vm42, %v2116, 0
    %2120 = vmatprep.subr.mxu0 0.0
    %2121 = vmatpush1.msra.mxu0 %v1141
    %2122 = vmatprep.subr.mxu0 0.0
    %2123 = vmatpush1.msra.mxu0 0.0
    %2124 = vmatprep.subr.mxu0 0.0
    %2125 = vmatpush1.msra.mxu0 0.0
    %2126 = vmatprep.subr.mxu0 0.0
    %2127 = vmatpush1.msra.mxu0 0.0
    %2128 = vmatprep.subr.mxu0 0.0
    %2129 = vmatpush1.msra.mxu0 0.0
    %2130 = vmatprep.subr.mxu0 0.0
    %2131 = vmatpush1.msra.mxu0 0.0
    %2132 = vmatprep.subr.mxu0 0.0
    %2133 = vmatpush1.msra.mxu0 0.0
    %2134 = vmatprep.subr.mxu0 0.0
    %2135 = vmatpush1.msra.mxu0 0.0
    %2136 = vmatprep.subr.mxu0 0.0
    %2137 = vmatpush1.msra.mxu0 0.0
    %2138 = vmatprep.subr.mxu0 0.0
    %2139 = vmatpush1.msra.mxu0 0.0
    %2140 = vmatprep.subr.mxu0 0.0
    %2141 = vmatpush1.msra.mxu0 0.0
    %2142 = vmatprep.subr.mxu0 0.0
    %2143 = vmatpush1.msra.mxu0 0.0
    %2144 = vmatprep.subr.mxu0 0.0
    %2145 = vmatpush1.msra.mxu0 0.0
    %2146 = vmatprep.subr.mxu0 0.0
    %2147 = vmatpush1.msra.mxu0 0.0
    %2148 = vmatprep.subr.mxu0 0.0
    %2149 = vmatpush1.msra.mxu0 0.0
    %2150 = vmatprep.subr.mxu0 0.0
    %2151 = vmatpush1.msra.mxu0 0.0
    %2152 = vmatprep.subr.mxu0 0.0
    %2153 = vmatpush1.msra.mxu0 0.0
    %2154 = vmatprep.subr.mxu0 0.0
    %2155 = vmatpush1.msra.mxu0 0.0
    %2156 = vmatprep.subr.mxu0 0.0
    %2157 = vmatpush1.msra.mxu0 0.0
    %2158 = vmatprep.subr.mxu0 0.0
    %2159 = vmatpush1.msra.mxu0 0.0
    %2160 = vmatprep.subr.mxu0 0.0
    %2161 = vmatpush1.msra.mxu0 0.0
    %2162 = vmatprep.subr.mxu0 0.0
    %2163 = vmatpush1.msra.mxu0 0.0
    %2164 = vmatprep.subr.mxu0 0.0
    %2165 = vmatpush1.msra.mxu0 0.0
    %2166 = vmatprep.subr.mxu0 0.0
    %2167 = vmatpush1.msra.mxu0 0.0
    %2168 = vmatprep.subr.mxu0 0.0
    %2169 = vmatpush1.msra.mxu0 0.0
    %2170 = vmatprep.subr.mxu0 0.0
    %2171 = vmatpush1.msra.mxu0 0.0
    %2172 = vmatprep.subr.mxu0 0.0
    %2173 = vmatpush1.msra.mxu0 0.0
    %2174 = vmatprep.subr.mxu0 0.0
    %2175 = vmatpush1.msra.mxu0 0.0
    %2176 = vmatprep.subr.mxu0 0.0
    %2177 = vmatpush1.msra.mxu0 0.0
    %2178 = vmatprep.subr.mxu0 0.0
    %2179 = vmatpush1.msra.mxu0 0.0
    %2180 = vmatprep.subr.mxu0 0.0
    %2181 = vmatpush1.msra.mxu0 0.0
    %2182 = vmatprep.subr.mxu0 0.0
    %2183 = vmatpush1.msra.mxu0 0.0
    %2184 = vmatprep.mubr.f32.mxu0 0.0
    %2185 = vmatmul.mubr.f32.gmra.mrb[0].mxu0 %v2118
    %v2186 = vpop.f32.mrb[0].mxu0
    %v2187 = vadd.f32 0.0, %v2186
    %v2188 = vpop.f32.mrb[0].mxu0
    %2189 = vdwg.mxu0
    %v2190 = vadd.f32 %v2115, %v2187
    %v2191 = vadd.f32 %v2190, %v1220
    %v2192 = vmax.f32 %v2191, 0.0
    %s2193 = scalar_lea.vmem %s5, 64
    %v2194 = vld [vmem:[%s2193] sm:$0xff]
    %v2195 = vld [vmem:[%s2193 + $0x8] sm:$0xff]
    %v2197 = vsel %vm1231, %v2192, 0
    %2199 = vmatprep.subr.mxu0 0.0
    %2200 = vmatpush1.msra.mxu0 %v2194
    %2201 = vmatprep.subr.mxu0 0.0
    %2202 = vmatpush1.msra.mxu0 %v2195
    %2203 = vmatprep.subr.mxu0 0.0
    %2204 = vmatpush1.msra.mxu0 0.0
    %2205 = vmatprep.subr.mxu0 0.0
    %2206 = vmatpush1.msra.mxu0 0.0
    %2207 = vmatprep.subr.mxu0 0.0
    %2208 = vmatpush1.msra.mxu0 0.0
    %2209 = vmatprep.subr.mxu0 0.0
    %2210 = vmatpush1.msra.mxu0 0.0
    %2211 = vmatprep.subr.mxu0 0.0
    %2212 = vmatpush1.msra.mxu0 0.0
    %2213 = vmatprep.subr.mxu0 0.0
    %2214 = vmatpush1.msra.mxu0 0.0
    %2215 = vmatprep.subr.mxu0 0.0
    %2216 = vmatpush1.msra.mxu0 0.0
    %2217 = vmatprep.subr.mxu0 0.0
    %2218 = vmatpush1.msra.mxu0 0.0
    %2219 = vmatprep.subr.mxu0 0.0
    %2220 = vmatpush1.msra.mxu0 0.0
    %2221 = vmatprep.subr.mxu0 0.0
    %2222 = vmatpush1.msra.mxu0 0.0
    %2223 = vmatprep.subr.mxu0 0.0
    %2224 = vmatpush1.msra.mxu0 0.0
    %2225 = vmatprep.subr.mxu0 0.0
    %2226 = vmatpush1.msra.mxu0 0.0
    %2227 = vmatprep.subr.mxu0 0.0
    %2228 = vmatpush1.msra.mxu0 0.0
    %2229 = vmatprep.subr.mxu0 0.0
    %2230 = vmatpush1.msra.mxu0 0.0
    %2231 = vmatprep.subr.mxu0 0.0
    %2232 = vmatpush1.msra.mxu0 0.0
    %2233 = vmatprep.subr.mxu0 0.0
    %2234 = vmatpush1.msra.mxu0 0.0
    %2235 = vmatprep.subr.mxu0 0.0
    %2236 = vmatpush1.msra.mxu0 0.0
    %2237 = vmatprep.subr.mxu0 0.0
    %2238 = vmatpush1.msra.mxu0 0.0
    %2239 = vmatprep.subr.mxu0 0.0
    %2240 = vmatpush1.msra.mxu0 0.0
    %2241 = vmatprep.subr.mxu0 0.0
    %2242 = vmatpush1.msra.mxu0 0.0
    %2243 = vmatprep.subr.mxu0 0.0
    %2244 = vmatpush1.msra.mxu0 0.0
    %2245 = vmatprep.subr.mxu0 0.0
    %2246 = vmatpush1.msra.mxu0 0.0
    %2247 = vmatprep.subr.mxu0 0.0
    %2248 = vmatpush1.msra.mxu0 0.0
    %2249 = vmatprep.subr.mxu0 0.0
    %2250 = vmatpush1.msra.mxu0 0.0
    %2251 = vmatprep.subr.mxu0 0.0
    %2252 = vmatpush1.msra.mxu0 0.0
    %2253 = vmatprep.subr.mxu0 0.0
    %2254 = vmatpush1.msra.mxu0 0.0
    %2255 = vmatprep.subr.mxu0 0.0
    %2256 = vmatpush1.msra.mxu0 0.0
    %2257 = vmatprep.subr.mxu0 0.0
    %2258 = vmatpush1.msra.mxu0 0.0
    %2259 = vmatprep.subr.mxu0 0.0
    %2260 = vmatpush1.msra.mxu0 0.0
    %2261 = vmatprep.subr.mxu0 0.0
    %2262 = vmatpush1.msra.mxu0 0.0
    %2263 = vmatprep.mubr.f32.mxu0 0.0
    %2264 = vmatmul.mubr.f32.gmra.mrb[0].mxu0 %v2197
    %v2265 = vpop.f32.mrb[0].mxu0
    %v2266 = vadd.f32 0.0, %v2265
    %v2267 = vpop.f32.mrb[0].mxu0
    %2268 = vdwg.mxu0
    %v2269 = vadd.f32 %v1529, %v2266
    %s2270 = scalar_lea.vmem %s5, 80
    %v2271 = vld [vmem:[%s2270] sm:$0xff]
    %v2272 = vld [vmem:[%s2270 + $0x8] sm:$0xff]
    %v2273 = vrot.slane %v2192, 2
    %v2274 = vsel %vm1231, %v2273, 0
    %2276 = vmatprep.subr.mxu0 0.0
    %2277 = vmatpush1.msra.mxu0 %v2271
    %2278 = vmatprep.subr.mxu0 0.0
    %2279 = vmatpush1.msra.mxu0 %v2272
    %2280 = vmatprep.subr.mxu0 0.0
    %2281 = vmatpush1.msra.mxu0 0.0
    %2282 = vmatprep.subr.mxu0 0.0
    %2283 = vmatpush1.msra.mxu0 0.0
    %2284 = vmatprep.subr.mxu0 0.0
    %2285 = vmatpush1.msra.mxu0 0.0
    %2286 = vmatprep.subr.mxu0 0.0
    %2287 = vmatpush1.msra.mxu0 0.0
    %2288 = vmatprep.subr.mxu0 0.0
    %2289 = vmatpush1.msra.mxu0 0.0
    %2290 = vmatprep.subr.mxu0 0.0
    %2291 = vmatpush1.msra.mxu0 0.0
    %2292 = vmatprep.subr.mxu0 0.0
    %2293 = vmatpush1.msra.mxu0 0.0
    %2294 = vmatprep.subr.mxu0 0.0
    %2295 = vmatpush1.msra.mxu0 0.0
    %2296 = vmatprep.subr.mxu0 0.0
    %2297 = vmatpush1.msra.mxu0 0.0
    %2298 = vmatprep.subr.mxu0 0.0
    %2299 = vmatpush1.msra.mxu0 0.0
    %2300 = vmatprep.subr.mxu0 0.0
    %2301 = vmatpush1.msra.mxu0 0.0
    %2302 = vmatprep.subr.mxu0 0.0
    %2303 = vmatpush1.msra.mxu0 0.0
    %2304 = vmatprep.subr.mxu0 0.0
    %2305 = vmatpush1.msra.mxu0 0.0
    %2306 = vmatprep.subr.mxu0 0.0
    %2307 = vmatpush1.msra.mxu0 0.0
    %2308 = vmatprep.subr.mxu0 0.0
    %2309 = vmatpush1.msra.mxu0 0.0
    %2310 = vmatprep.subr.mxu0 0.0
    %2311 = vmatpush1.msra.mxu0 0.0
    %2312 = vmatprep.subr.mxu0 0.0
    %2313 = vmatpush1.msra.mxu0 0.0
    %2314 = vmatprep.subr.mxu0 0.0
    %2315 = vmatpush1.msra.mxu0 0.0
    %2316 = vmatprep.subr.mxu0 0.0
    %2317 = vmatpush1.msra.mxu0 0.0
    %2318 = vmatprep.subr.mxu0 0.0
    %2319 = vmatpush1.msra.mxu0 0.0
    %2320 = vmatprep.subr.mxu0 0.0
    %2321 = vmatpush1.msra.mxu0 0.0
    %2322 = vmatprep.subr.mxu0 0.0
    %2323 = vmatpush1.msra.mxu0 0.0
    %2324 = vmatprep.subr.mxu0 0.0
    %2325 = vmatpush1.msra.mxu0 0.0
    %2326 = vmatprep.subr.mxu0 0.0
    %2327 = vmatpush1.msra.mxu0 0.0
    %2328 = vmatprep.subr.mxu0 0.0
    %2329 = vmatpush1.msra.mxu0 0.0
    %2330 = vmatprep.subr.mxu0 0.0
    %2331 = vmatpush1.msra.mxu0 0.0
    %2332 = vmatprep.subr.mxu0 0.0
    %2333 = vmatpush1.msra.mxu0 0.0
    %2334 = vmatprep.subr.mxu0 0.0
    %2335 = vmatpush1.msra.mxu0 0.0
    %2336 = vmatprep.subr.mxu0 0.0
    %2337 = vmatpush1.msra.mxu0 0.0
    %2338 = vmatprep.subr.mxu0 0.0
    %2339 = vmatpush1.msra.mxu0 0.0
    %2340 = vmatprep.mubr.f32.mxu0 0.0
    %2341 = vmatmul.mubr.f32.gmra.mrb[0].mxu0 %v2274
    %v2342 = vpop.f32.mrb[0].mxu0
    %v2343 = vadd.f32 0.0, %v2342
    %v2344 = vpop.f32.mrb[0].mxu0
    %2345 = vdwg.mxu0
    %v2346 = vadd.f32 %v2269, %v2343
    %s2347 = scalar_lea.vmem %s5, 96
    %v2348 = vld [vmem:[%s2347] sm:$0xff]
    %v2349 = vld [vmem:[%s2347 + $0x8] sm:$0xff]
    %v2350 = vrot.slane %v2192, 4
    %v2351 = vsel %vm1231, %v2350, 0
    %2353 = vmatprep.subr.mxu0 0.0
    %2354 = vmatpush1.msra.mxu0 %v2348
    %2355 = vmatprep.subr.mxu0 0.0
    %2356 = vmatpush1.msra.mxu0 %v2349
    %2357 = vmatprep.subr.mxu0 0.0
    %2358 = vmatpush1.msra.mxu0 0.0
    %2359 = vmatprep.subr.mxu0 0.0
    %2360 = vmatpush1.msra.mxu0 0.0
    %2361 = vmatprep.subr.mxu0 0.0
    %2362 = vmatpush1.msra.mxu0 0.0
    %2363 = vmatprep.subr.mxu0 0.0
    %2364 = vmatpush1.msra.mxu0 0.0
    %2365 = vmatprep.subr.mxu0 0.0
    %2366 = vmatpush1.msra.mxu0 0.0
    %2367 = vmatprep.subr.mxu0 0.0
    %2368 = vmatpush1.msra.mxu0 0.0
    %2369 = vmatprep.subr.mxu0 0.0
    %2370 = vmatpush1.msra.mxu0 0.0
    %2371 = vmatprep.subr.mxu0 0.0
    %2372 = vmatpush1.msra.mxu0 0.0
    %2373 = vmatprep.subr.mxu0 0.0
    %2374 = vmatpush1.msra.mxu0 0.0
    %2375 = vmatprep.subr.mxu0 0.0
    %2376 = vmatpush1.msra.mxu0 0.0
    %2377 = vmatprep.subr.mxu0 0.0
    %2378 = vmatpush1.msra.mxu0 0.0
    %2379 = vmatprep.subr.mxu0 0.0
    %2380 = vmatpush1.msra.mxu0 0.0
    %2381 = vmatprep.subr.mxu0 0.0
    %2382 = vmatpush1.msra.mxu0 0.0
    %2383 = vmatprep.subr.mxu0 0.0
    %2384 = vmatpush1.msra.mxu0 0.0
    %2385 = vmatprep.subr.mxu0 0.0
    %2386 = vmatpush1.msra.mxu0 0.0
    %2387 = vmatprep.subr.mxu0 0.0
    %2388 = vmatpush1.msra.mxu0 0.0
    %2389 = vmatprep.subr.mxu0 0.0
    %2390 = vmatpush1.msra.mxu0 0.0
    %2391 = vmatprep.subr.mxu0 0.0
    %2392 = vmatpush1.msra.mxu0 0.0
    %2393 = vmatprep.subr.mxu0 0.0
    %2394 = vmatpush1.msra.mxu0 0.0
    %2395 = vmatprep.subr.mxu0 0.0
    %2396 = vmatpush1.msra.mxu0 0.0
    %2397 = vmatprep.subr.mxu0 0.0
    %2398 = vmatpush1.msra.mxu0 0.0
    %2399 = vmatprep.subr.mxu0 0.0
    %2400 = vmatpush1.msra.mxu0 0.0
    %2401 = vmatprep.subr.mxu0 0.0
    %2402 = vmatpush1.msra.mxu0 0.0
    %2403 = vmatprep.subr.mxu0 0.0
    %2404 = vmatpush1.msra.mxu0 0.0
    %2405 = vmatprep.subr.mxu0 0.0
    %2406 = vmatpush1.msra.mxu0 0.0
    %2407 = vmatprep.subr.mxu0 0.0
    %2408 = vmatpush1.msra.mxu0 0.0
    %2409 = vmatprep.subr.mxu0 0.0
    %2410 = vmatpush1.msra.mxu0 0.0
    %2411 = vmatprep.subr.mxu0 0.0
    %2412 = vmatpush1.msra.mxu0 0.0
    %2413 = vmatprep.subr.mxu0 0.0
    %2414 = vmatpush1.msra.mxu0 0.0
    %2415 = vmatprep.subr.mxu0 0.0
    %2416 = vmatpush1.msra.mxu0 0.0
    %2417 = vmatprep.mubr.f32.mxu0 0.0
    %2418 = vmatmul.mubr.f32.gmra.mrb[0].mxu0 %v2351
    %v2419 = vpop.f32.mrb[0].mxu0
    %v2420 = vadd.f32 0.0, %v2419
    %v2421 = vpop.f32.mrb[0].mxu0
    %2422 = vdwg.mxu0
    %v2423 = vadd.f32 %v2346, %v2420
    %s2424 = scalar_lea.vmem %s5, 112
    %v2425 = vld [vmem:[%s2424] sm:$0xff]
    %v2426 = vld [vmem:[%s2424 + $0x8] sm:$0xff]
    %v2427 = vrot.slane %v2192, 6
    %v2428 = vsel %vm1231, %v2427, 0
    %2430 = vmatprep.subr.mxu0 0.0
    %2431 = vmatpush1.msra.mxu0 %v2425
    %2432 = vmatprep.subr.mxu0 0.0
    %2433 = vmatpush1.msra.mxu0 %v2426
    %2434 = vmatprep.subr.mxu0 0.0
    %2435 = vmatpush1.msra.mxu0 0.0
    %2436 = vmatprep.subr.mxu0 0.0
    %2437 = vmatpush1.msra.mxu0 0.0
    %2438 = vmatprep.subr.mxu0 0.0
    %2439 = vmatpush1.msra.mxu0 0.0
    %2440 = vmatprep.subr.mxu0 0.0
    %2441 = vmatpush1.msra.mxu0 0.0
    %2442 = vmatprep.subr.mxu0 0.0
    %2443 = vmatpush1.msra.mxu0 0.0
    %2444 = vmatprep.subr.mxu0 0.0
    %2445 = vmatpush1.msra.mxu0 0.0
    %2446 = vmatprep.subr.mxu0 0.0
    %2447 = vmatpush1.msra.mxu0 0.0
    %2448 = vmatprep.subr.mxu0 0.0
    %2449 = vmatpush1.msra.mxu0 0.0
    %2450 = vmatprep.subr.mxu0 0.0
    %2451 = vmatpush1.msra.mxu0 0.0
    %2452 = vmatprep.subr.mxu0 0.0
    %2453 = vmatpush1.msra.mxu0 0.0
    %2454 = vmatprep.subr.mxu0 0.0
    %2455 = vmatpush1.msra.mxu0 0.0
    %2456 = vmatprep.subr.mxu0 0.0
    %2457 = vmatpush1.msra.mxu0 0.0
    %2458 = vmatprep.subr.mxu0 0.0
    %2459 = vmatpush1.msra.mxu0 0.0
    %2460 = vmatprep.subr.mxu0 0.0
    %2461 = vmatpush1.msra.mxu0 0.0
    %2462 = vmatprep.subr.mxu0 0.0
    %2463 = vmatpush1.msra.mxu0 0.0
    %2464 = vmatprep.subr.mxu0 0.0
    %2465 = vmatpush1.msra.mxu0 0.0
    %2466 = vmatprep.subr.mxu0 0.0
    %2467 = vmatpush1.msra.mxu0 0.0
    %2468 = vmatprep.subr.mxu0 0.0
    %2469 = vmatpush1.msra.mxu0 0.0
    %2470 = vmatprep.subr.mxu0 0.0
    %2471 = vmatpush1.msra.mxu0 0.0
    %2472 = vmatprep.subr.mxu0 0.0
    %2473 = vmatpush1.msra.mxu0 0.0
    %2474 = vmatprep.subr.mxu0 0.0
    %2475 = vmatpush1.msra.mxu0 0.0
    %2476 = vmatprep.subr.mxu0 0.0
    %2477 = vmatpush1.msra.mxu0 0.0
    %2478 = vmatprep.subr.mxu0 0.0
    %2479 = vmatpush1.msra.mxu0 0.0
    %2480 = vmatprep.subr.mxu0 0.0
    %2481 = vmatpush1.msra.mxu0 0.0
    %2482 = vmatprep.subr.mxu0 0.0
    %2483 = vmatpush1.msra.mxu0 0.0
    %2484 = vmatprep.subr.mxu0 0.0
    %2485 = vmatpush1.msra.mxu0 0.0
    %2486 = vmatprep.subr.mxu0 0.0
    %2487 = vmatpush1.msra.mxu0 0.0
    %2488 = vmatprep.subr.mxu0 0.0
    %2489 = vmatpush1.msra.mxu0 0.0
    %2490 = vmatprep.subr.mxu0 0.0
    %2491 = vmatpush1.msra.mxu0 0.0
    %2492 = vmatprep.subr.mxu0 0.0
    %2493 = vmatpush1.msra.mxu0 0.0
    %2494 = vmatprep.mubr.f32.mxu0 0.0
    %2495 = vmatmul.mubr.f32.gmra.mrb[0].mxu0 %v2428
    %v2496 = vpop.f32.mrb[0].mxu0
    %v2497 = vadd.f32 0.0, %v2496
    %v2498 = vpop.f32.mrb[0].mxu0
    %2499 = vdwg.mxu0
    %v2500 = vadd.f32 %v2423, %v2497
    %2501 = vmatprep.subr.mxu0 0.0
    %2502 = vmatpush1.msra.mxu0 %v530
    %2503 = vmatprep.subr.mxu0 0.0
    %2504 = vmatpush1.msra.mxu0 0.0
    %2505 = vmatprep.subr.mxu0 0.0
    %2506 = vmatpush1.msra.mxu0 0.0
    %2507 = vmatprep.subr.mxu0 0.0
    %2508 = vmatpush1.msra.mxu0 0.0
    %2509 = vmatprep.subr.mxu0 0.0
    %2510 = vmatpush1.msra.mxu0 0.0
    %2511 = vmatprep.subr.mxu0 0.0
    %2512 = vmatpush1.msra.mxu0 0.0
    %2513 = vmatprep.subr.mxu0 0.0
    %2514 = vmatpush1.msra.mxu0 0.0
    %2515 = vmatprep.subr.mxu0 0.0
    %2516 = vmatpush1.msra.mxu0 0.0
    %2517 = vmatprep.subr.mxu0 0.0
    %2518 = vmatpush1.msra.mxu0 0.0
    %2519 = vmatprep.subr.mxu0 0.0
    %2520 = vmatpush1.msra.mxu0 0.0
    %2521 = vmatprep.subr.mxu0 0.0
    %2522 = vmatpush1.msra.mxu0 0.0
    %2523 = vmatprep.subr.mxu0 0.0
    %2524 = vmatpush1.msra.mxu0 0.0
    %2525 = vmatprep.subr.mxu0 0.0
    %2526 = vmatpush1.msra.mxu0 0.0
    %2527 = vmatprep.subr.mxu0 0.0
    %2528 = vmatpush1.msra.mxu0 0.0
    %2529 = vmatprep.subr.mxu0 0.0
    %2530 = vmatpush1.msra.mxu0 0.0
    %2531 = vmatprep.subr.mxu0 0.0
    %2532 = vmatpush1.msra.mxu0 0.0
    %2533 = vmatprep.subr.mxu0 0.0
    %2534 = vmatpush1.msra.mxu0 0.0
    %2535 = vmatprep.subr.mxu0 0.0
    %2536 = vmatpush1.msra.mxu0 0.0
    %2537 = vmatprep.subr.mxu0 0.0
    %2538 = vmatpush1.msra.mxu0 0.0
    %2539 = vmatprep.subr.mxu0 0.0
    %2540 = vmatpush1.msra.mxu0 0.0
    %2541 = vmatprep.subr.mxu0 0.0
    %2542 = vmatpush1.msra.mxu0 0.0
    %2543 = vmatprep.subr.mxu0 0.0
    %2544 = vmatpush1.msra.mxu0 0.0
    %2545 = vmatprep.subr.mxu0 0.0
    %2546 = vmatpush1.msra.mxu0 0.0
    %2547 = vmatprep.subr.mxu0 0.0
    %2548 = vmatpush1.msra.mxu0 0.0
    %2549 = vmatprep.subr.mxu0 0.0
    %2550 = vmatpush1.msra.mxu0 0.0
    %2551 = vmatprep.subr.mxu0 0.0
    %2552 = vmatpush1.msra.mxu0 0.0
    %2553 = vmatprep.subr.mxu0 0.0
    %2554 = vmatpush1.msra.mxu0 0.0
    %2555 = vmatprep.subr.mxu0 0.0
    %2556 = vmatpush1.msra.mxu0 0.0
    %2557 = vmatprep.subr.mxu0 0.0
    %2558 = vmatpush1.msra.mxu0 0.0
    %2559 = vmatprep.subr.mxu0 0.0
    %2560 = vmatpush1.msra.mxu0 0.0
    %2561 = vmatprep.subr.mxu0 0.0
    %2562 = vmatpush1.msra.mxu0 0.0
    %2563 = vmatprep.subr.mxu0 0.0
    %2564 = vmatpush1.msra.mxu0 0.0
    %2565 = vmatprep.mubr.f32.mxu0 0.0
    %2566 = vmatmul.mubr.f32.gmra.mrb[0].mxu0 %v2043
    %v2567 = vpop.f32.mrb[0].mxu0
    %v2568 = vadd.f32 0.0, %v2567
    %v2569 = vpop.f32.mrb[0].mxu0
    %2570 = vdwg.mxu0
    %2571 = vmatprep.subr.mxu0 0.0
    %2572 = vmatpush1.msra.mxu0 %v527
    %2573 = vmatprep.subr.mxu0 0.0
    %2574 = vmatpush1.msra.mxu0 0.0
    %2575 = vmatprep.subr.mxu0 0.0
    %2576 = vmatpush1.msra.mxu0 0.0
    %2577 = vmatprep.subr.mxu0 0.0
    %2578 = vmatpush1.msra.mxu0 0.0
    %2579 = vmatprep.subr.mxu0 0.0
    %2580 = vmatpush1.msra.mxu0 0.0
    %2581 = vmatprep.subr.mxu0 0.0
    %2582 = vmatpush1.msra.mxu0 0.0
    %2583 = vmatprep.subr.mxu0 0.0
    %2584 = vmatpush1.msra.mxu0 0.0
    %2585 = vmatprep.subr.mxu0 0.0
    %2586 = vmatpush1.msra.mxu0 0.0
    %2587 = vmatprep.subr.mxu0 0.0
    %2588 = vmatpush1.msra.mxu0 0.0
    %2589 = vmatprep.subr.mxu0 0.0
    %2590 = vmatpush1.msra.mxu0 0.0
    %2591 = vmatprep.subr.mxu0 0.0
    %2592 = vmatpush1.msra.mxu0 0.0
    %2593 = vmatprep.subr.mxu0 0.0
    %2594 = vmatpush1.msra.mxu0 0.0
    %2595 = vmatprep.subr.mxu0 0.0
    %2596 = vmatpush1.msra.mxu0 0.0
    %2597 = vmatprep.subr.mxu0 0.0
    %2598 = vmatpush1.msra.mxu0 0.0
    %2599 = vmatprep.subr.mxu0 0.0
    %2600 = vmatpush1.msra.mxu0 0.0
    %2601 = vmatprep.subr.mxu0 0.0
    %2602 = vmatpush1.msra.mxu0 0.0
    %2603 = vmatprep.subr.mxu0 0.0
    %2604 = vmatpush1.msra.mxu0 0.0
    %2605 = vmatprep.subr.mxu0 0.0
    %2606 = vmatpush1.msra.mxu0 0.0
    %2607 = vmatprep.subr.mxu0 0.0
    %2608 = vmatpush1.msra.mxu0 0.0
    %2609 = vmatprep.subr.mxu0 0.0
    %2610 = vmatpush1.msra.mxu0 0.0
    %2611 = vmatprep.subr.mxu0 0.0
    %2612 = vmatpush1.msra.mxu0 0.0
    %2613 = vmatprep.subr.mxu0 0.0
    %2614 = vmatpush1.msra.mxu0 0.0
    %2615 = vmatprep.subr.mxu0 0.0
    %2616 = vmatpush1.msra.mxu0 0.0
    %2617 = vmatprep.subr.mxu0 0.0
    %2618 = vmatpush1.msra.mxu0 0.0
    %2619 = vmatprep.subr.mxu0 0.0
    %2620 = vmatpush1.msra.mxu0 0.0
    %2621 = vmatprep.subr.mxu0 0.0
    %2622 = vmatpush1.msra.mxu0 0.0
    %2623 = vmatprep.subr.mxu0 0.0
    %2624 = vmatpush1.msra.mxu0 0.0
    %2625 = vmatprep.subr.mxu0 0.0
    %2626 = vmatpush1.msra.mxu0 0.0
    %2627 = vmatprep.subr.mxu0 0.0
    %2628 = vmatpush1.msra.mxu0 0.0
    %2629 = vmatprep.subr.mxu0 0.0
    %2630 = vmatpush1.msra.mxu0 0.0
    %2631 = vmatprep.subr.mxu0 0.0
    %2632 = vmatpush1.msra.mxu0 0.0
    %2633 = vmatprep.subr.mxu0 0.0
    %2634 = vmatpush1.msra.mxu0 0.0
    %2635 = vmatprep.mubr.f32.mxu0 0.0
    %2636 = vmatmul.mubr.f32.gmra.mrb[0].mxu0 %v1968
    %v2637 = vpop.f32.mrb[0].mxu0
    %v2638 = vadd.f32 %v2568, %v2637
    %v2639 = vpop.f32.mrb[0].mxu0
    %2640 = vdwg.mxu0
    %2641 = vmatprep.subr.mxu0 0.0
    %2642 = vmatpush1.msra.mxu0 %v679
    %2643 = vmatprep.subr.mxu0 0.0
    %2644 = vmatpush1.msra.mxu0 0.0
    %2645 = vmatprep.subr.mxu0 0.0
    %2646 = vmatpush1.msra.mxu0 0.0
    %2647 = vmatprep.subr.mxu0 0.0
    %2648 = vmatpush1.msra.mxu0 0.0
    %2649 = vmatprep.subr.mxu0 0.0
    %2650 = vmatpush1.msra.mxu0 0.0
    %2651 = vmatprep.subr.mxu0 0.0
    %2652 = vmatpush1.msra.mxu0 0.0
    %2653 = vmatprep.subr.mxu0 0.0
    %2654 = vmatpush1.msra.mxu0 0.0
    %2655 = vmatprep.subr.mxu0 0.0
    %2656 = vmatpush1.msra.mxu0 0.0
    %2657 = vmatprep.subr.mxu0 0.0
    %2658 = vmatpush1.msra.mxu0 0.0
    %2659 = vmatprep.subr.mxu0 0.0
    %2660 = vmatpush1.msra.mxu0 0.0
    %2661 = vmatprep.subr.mxu0 0.0
    %2662 = vmatpush1.msra.mxu0 0.0
    %2663 = vmatprep.subr.mxu0 0.0
    %2664 = vmatpush1.msra.mxu0 0.0
    %2665 = vmatprep.subr.mxu0 0.0
    %2666 = vmatpush1.msra.mxu0 0.0
    %2667 = vmatprep.subr.mxu0 0.0
    %2668 = vmatpush1.msra.mxu0 0.0
    %2669 = vmatprep.subr.mxu0 0.0
    %2670 = vmatpush1.msra.mxu0 0.0
    %2671 = vmatprep.subr.mxu0 0.0
    %2672 = vmatpush1.msra.mxu0 0.0
    %2673 = vmatprep.subr.mxu0 0.0
    %2674 = vmatpush1.msra.mxu0 0.0
    %2675 = vmatprep.subr.mxu0 0.0
    %2676 = vmatpush1.msra.mxu0 0.0
    %2677 = vmatprep.subr.mxu0 0.0
    %2678 = vmatpush1.msra.mxu0 0.0
    %2679 = vmatprep.subr.mxu0 0.0
    %2680 = vmatpush1.msra.mxu0 0.0
    %2681 = vmatprep.subr.mxu0 0.0
    %2682 = vmatpush1.msra.mxu0 0.0
    %2683 = vmatprep.subr.mxu0 0.0
    %2684 = vmatpush1.msra.mxu0 0.0
    %2685 = vmatprep.subr.mxu0 0.0
    %2686 = vmatpush1.msra.mxu0 0.0
    %2687 = vmatprep.subr.mxu0 0.0
    %2688 = vmatpush1.msra.mxu0 0.0
    %2689 = vmatprep.subr.mxu0 0.0
    %2690 = vmatpush1.msra.mxu0 0.0
    %2691 = vmatprep.subr.mxu0 0.0
    %2692 = vmatpush1.msra.mxu0 0.0
    %2693 = vmatprep.subr.mxu0 0.0
    %2694 = vmatpush1.msra.mxu0 0.0
    %2695 = vmatprep.subr.mxu0 0.0
    %2696 = vmatpush1.msra.mxu0 0.0
    %2697 = vmatprep.subr.mxu0 0.0
    %2698 = vmatpush1.msra.mxu0 0.0
    %2699 = vmatprep.subr.mxu0 0.0
    %2700 = vmatpush1.msra.mxu0 0.0
    %2701 = vmatprep.subr.mxu0 0.0
    %2702 = vmatpush1.msra.mxu0 0.0
    %2703 = vmatprep.subr.mxu0 0.0
    %2704 = vmatpush1.msra.mxu0 0.0
    %2705 = vmatprep.mubr.f32.mxu0 0.0
    %2706 = vmatmul.mubr.f32.gmra.mrb[0].mxu0 %v2118
    %v2707 = vpop.f32.mrb[0].mxu0
    %v2708 = vadd.f32 0.0, %v2707
    %v2709 = vpop.f32.mrb[0].mxu0
    %2710 = vdwg.mxu0
    %v2711 = vadd.f32 %v2638, %v2708
    %v2712 = vld [vmem:[#allocation2 + $0x78] sm:$0xff]
    %v2714 = vsel %vm42, %v2712, 0
    %2716 = vmatprep.subr.mxu0 0.0
    %2717 = vmatpush1.msra.mxu0 %v756
    %2718 = vmatprep.subr.mxu0 0.0
    %2719 = vmatpush1.msra.mxu0 0.0
    %2720 = vmatprep.subr.mxu0 0.0
    %2721 = vmatpush1.msra.mxu0 0.0
    %2722 = vmatprep.subr.mxu0 0.0
    %2723 = vmatpush1.msra.mxu0 0.0
    %2724 = vmatprep.subr.mxu0 0.0
    %2725 = vmatpush1.msra.mxu0 0.0
    %2726 = vmatprep.subr.mxu0 0.0
    %2727 = vmatpush1.msra.mxu0 0.0
    %2728 = vmatprep.subr.mxu0 0.0
    %2729 = vmatpush1.msra.mxu0 0.0
    %2730 = vmatprep.subr.mxu0 0.0
    %2731 = vmatpush1.msra.mxu0 0.0
    %2732 = vmatprep.subr.mxu0 0.0
    %2733 = vmatpush1.msra.mxu0 0.0
    %2734 = vmatprep.subr.mxu0 0.0
    %2735 = vmatpush1.msra.mxu0 0.0
    %2736 = vmatprep.subr.mxu0 0.0
    %2737 = vmatpush1.msra.mxu0 0.0
    %2738 = vmatprep.subr.mxu0 0.0
    %2739 = vmatpush1.msra.mxu0 0.0
    %2740 = vmatprep.subr.mxu0 0.0
    %2741 = vmatpush1.msra.mxu0 0.0
    %2742 = vmatprep.subr.mxu0 0.0
    %2743 = vmatpush1.msra.mxu0 0.0
    %2744 = vmatprep.subr.mxu0 0.0
    %2745 = vmatpush1.msra.mxu0 0.0
    %2746 = vmatprep.subr.mxu0 0.0
    %2747 = vmatpush1.msra.mxu0 0.0
    %2748 = vmatprep.subr.mxu0 0.0
    %2749 = vmatpush1.msra.mxu0 0.0
    %2750 = vmatprep.subr.mxu0 0.0
    %2751 = vmatpush1.msra.mxu0 0.0
    %2752 = vmatprep.subr.mxu0 0.0
    %2753 = vmatpush1.msra.mxu0 0.0
    %2754 = vmatprep.subr.mxu0 0.0
    %2755 = vmatpush1.msra.mxu0 0.0
    %2756 = vmatprep.subr.mxu0 0.0
    %2757 = vmatpush1.msra.mxu0 0.0
    %2758 = vmatprep.subr.mxu0 0.0
    %2759 = vmatpush1.msra.mxu0 0.0
    %2760 = vmatprep.subr.mxu0 0.0
    %2761 = vmatpush1.msra.mxu0 0.0
    %2762 = vmatprep.subr.mxu0 0.0
    %2763 = vmatpush1.msra.mxu0 0.0
    %2764 = vmatprep.subr.mxu0 0.0
    %2765 = vmatpush1.msra.mxu0 0.0
    %2766 = vmatprep.subr.mxu0 0.0
    %2767 = vmatpush1.msra.mxu0 0.0
    %2768 = vmatprep.subr.mxu0 0.0
    %2769 = vmatpush1.msra.mxu0 0.0
    %2770 = vmatprep.subr.mxu0 0.0
    %2771 = vmatpush1.msra.mxu0 0.0
    %2772 = vmatprep.subr.mxu0 0.0
    %2773 = vmatpush1.msra.mxu0 0.0
    %2774 = vmatprep.subr.mxu0 0.0
    %2775 = vmatpush1.msra.mxu0 0.0
    %2776 = vmatprep.subr.mxu0 0.0
    %2777 = vmatpush1.msra.mxu0 0.0
    %2778 = vmatprep.subr.mxu0 0.0
    %2779 = vmatpush1.msra.mxu0 0.0
    %2780 = vmatprep.mubr.f32.mxu0 0.0
    %2781 = vmatmul.mubr.f32.gmra.mrb[0].mxu0 %v2714
    %v2782 = vpop.f32.mrb[0].mxu0
    %v2783 = vadd.f32 0.0, %v2782
    %v2784 = vpop.f32.mrb[0].mxu0
    %2785 = vdwg.mxu0
    %v2786 = vadd.f32 %v2711, %v2783
    %v2787 = vld [vmem:[#allocation2 + $0xaa] sm:$0xff]
    %v2789 = vsel %vm42, %v2787, 0
    %2791 = vmatprep.subr.mxu0 0.0
    %2792 = vmatpush1.msra.mxu0 %v833
    %2793 = vmatprep.subr.mxu0 0.0
    %2794 = vmatpush1.msra.mxu0 0.0
    %2795 = vmatprep.subr.mxu0 0.0
    %2796 = vmatpush1.msra.mxu0 0.0
    %2797 = vmatprep.subr.mxu0 0.0
    %2798 = vmatpush1.msra.mxu0 0.0
    %2799 = vmatprep.subr.mxu0 0.0
    %2800 = vmatpush1.msra.mxu0 0.0
    %2801 = vmatprep.subr.mxu0 0.0
    %2802 = vmatpush1.msra.mxu0 0.0
    %2803 = vmatprep.subr.mxu0 0.0
    %2804 = vmatpush1.msra.mxu0 0.0
    %2805 = vmatprep.subr.mxu0 0.0
    %2806 = vmatpush1.msra.mxu0 0.0
    %2807 = vmatprep.subr.mxu0 0.0
    %2808 = vmatpush1.msra.mxu0 0.0
    %2809 = vmatprep.subr.mxu0 0.0
    %2810 = vmatpush1.msra.mxu0 0.0
    %2811 = vmatprep.subr.mxu0 0.0
    %2812 = vmatpush1.msra.mxu0 0.0
    %2813 = vmatprep.subr.mxu0 0.0
    %2814 = vmatpush1.msra.mxu0 0.0
    %2815 = vmatprep.subr.mxu0 0.0
    %2816 = vmatpush1.msra.mxu0 0.0
    %2817 = vmatprep.subr.mxu0 0.0
    %2818 = vmatpush1.msra.mxu0 0.0
    %2819 = vmatprep.subr.mxu0 0.0
    %2820 = vmatpush1.msra.mxu0 0.0
    %2821 = vmatprep.subr.mxu0 0.0
    %2822 = vmatpush1.msra.mxu0 0.0
    %2823 = vmatprep.subr.mxu0 0.0
    %2824 = vmatpush1.msra.mxu0 0.0
    %2825 = vmatprep.subr.mxu0 0.0
    %2826 = vmatpush1.msra.mxu0 0.0
    %2827 = vmatprep.subr.mxu0 0.0
    %2828 = vmatpush1.msra.mxu0 0.0
    %2829 = vmatprep.subr.mxu0 0.0
    %2830 = vmatpush1.msra.mxu0 0.0
    %2831 = vmatprep.subr.mxu0 0.0
    %2832 = vmatpush1.msra.mxu0 0.0
    %2833 = vmatprep.subr.mxu0 0.0
    %2834 = vmatpush1.msra.mxu0 0.0
    %2835 = vmatprep.subr.mxu0 0.0
    %2836 = vmatpush1.msra.mxu0 0.0
    %2837 = vmatprep.subr.mxu0 0.0
    %2838 = vmatpush1.msra.mxu0 0.0
    %2839 = vmatprep.subr.mxu0 0.0
    %2840 = vmatpush1.msra.mxu0 0.0
    %2841 = vmatprep.subr.mxu0 0.0
    %2842 = vmatpush1.msra.mxu0 0.0
    %2843 = vmatprep.subr.mxu0 0.0
    %2844 = vmatpush1.msra.mxu0 0.0
    %2845 = vmatprep.subr.mxu0 0.0
    %2846 = vmatpush1.msra.mxu0 0.0
    %2847 = vmatprep.subr.mxu0 0.0
    %2848 = vmatpush1.msra.mxu0 0.0
    %2849 = vmatprep.subr.mxu0 0.0
    %2850 = vmatpush1.msra.mxu0 0.0
    %2851 = vmatprep.subr.mxu0 0.0
    %2852 = vmatpush1.msra.mxu0 0.0
    %2853 = vmatprep.subr.mxu0 0.0
    %2854 = vmatpush1.msra.mxu0 0.0
    %2855 = vmatprep.mubr.f32.mxu0 0.0
    %2856 = vmatmul.mubr.f32.gmra.mrb[0].mxu0 %v2789
    %v2857 = vpop.f32.mrb[0].mxu0
    %v2858 = vadd.f32 0.0, %v2857
    %v2859 = vpop.f32.mrb[0].mxu0
    %2860 = vdwg.mxu0
    %v2861 = vadd.f32 %v2786, %v2858
    %v2862 = vld [vmem:[#allocation2 + $0x7a] sm:$0xff]
    %v2864 = vsel %vm42, %v2862, 0
    %2866 = vmatprep.subr.mxu0 0.0
    %2867 = vmatpush1.msra.mxu0 %v910
    %2868 = vmatprep.subr.mxu0 0.0
    %2869 = vmatpush1.msra.mxu0 0.0
    %2870 = vmatprep.subr.mxu0 0.0
    %2871 = vmatpush1.msra.mxu0 0.0
    %2872 = vmatprep.subr.mxu0 0.0
    %2873 = vmatpush1.msra.mxu0 0.0
    %2874 = vmatprep.subr.mxu0 0.0
    %2875 = vmatpush1.msra.mxu0 0.0
    %2876 = vmatprep.subr.mxu0 0.0
    %2877 = vmatpush1.msra.mxu0 0.0
    %2878 = vmatprep.subr.mxu0 0.0
    %2879 = vmatpush1.msra.mxu0 0.0
    %2880 = vmatprep.subr.mxu0 0.0
    %2881 = vmatpush1.msra.mxu0 0.0
    %2882 = vmatprep.subr.mxu0 0.0
    %2883 = vmatpush1.msra.mxu0 0.0
    %2884 = vmatprep.subr.mxu0 0.0
    %2885 = vmatpush1.msra.mxu0 0.0
    %2886 = vmatprep.subr.mxu0 0.0
    %2887 = vmatpush1.msra.mxu0 0.0
    %2888 = vmatprep.subr.mxu0 0.0
    %2889 = vmatpush1.msra.mxu0 0.0
    %2890 = vmatprep.subr.mxu0 0.0
    %2891 = vmatpush1.msra.mxu0 0.0
    %2892 = vmatprep.subr.mxu0 0.0
    %2893 = vmatpush1.msra.mxu0 0.0
    %2894 = vmatprep.subr.mxu0 0.0
    %2895 = vmatpush1.msra.mxu0 0.0
    %2896 = vmatprep.subr.mxu0 0.0
    %2897 = vmatpush1.msra.mxu0 0.0
    %2898 = vmatprep.subr.mxu0 0.0
    %2899 = vmatpush1.msra.mxu0 0.0
    %2900 = vmatprep.subr.mxu0 0.0
    %2901 = vmatpush1.msra.mxu0 0.0
    %2902 = vmatprep.subr.mxu0 0.0
    %2903 = vmatpush1.msra.mxu0 0.0
    %2904 = vmatprep.subr.mxu0 0.0
    %2905 = vmatpush1.msra.mxu0 0.0
    %2906 = vmatprep.subr.mxu0 0.0
    %2907 = vmatpush1.msra.mxu0 0.0
    %2908 = vmatprep.subr.mxu0 0.0
    %2909 = vmatpush1.msra.mxu0 0.0
    %2910 = vmatprep.subr.mxu0 0.0
    %2911 = vmatpush1.msra.mxu0 0.0
    %2912 = vmatprep.subr.mxu0 0.0
    %2913 = vmatpush1.msra.mxu0 0.0
    %2914 = vmatprep.subr.mxu0 0.0
    %2915 = vmatpush1.msra.mxu0 0.0
    %2916 = vmatprep.subr.mxu0 0.0
    %2917 = vmatpush1.msra.mxu0 0.0
    %2918 = vmatprep.subr.mxu0 0.0
    %2919 = vmatpush1.msra.mxu0 0.0
    %2920 = vmatprep.subr.mxu0 0.0
    %2921 = vmatpush1.msra.mxu0 0.0
    %2922 = vmatprep.subr.mxu0 0.0
    %2923 = vmatpush1.msra.mxu0 0.0
    %2924 = vmatprep.subr.mxu0 0.0
    %2925 = vmatpush1.msra.mxu0 0.0
    %2926 = vmatprep.subr.mxu0 0.0
    %2927 = vmatpush1.msra.mxu0 0.0
    %2928 = vmatprep.subr.mxu0 0.0
    %2929 = vmatpush1.msra.mxu0 0.0
    %2930 = vmatprep.mubr.f32.mxu0 0.0
    %2931 = vmatmul.mubr.f32.gmra.mrb[0].mxu0 %v2864
    %v2932 = vpop.f32.mrb[0].mxu0
    %v2933 = vadd.f32 0.0, %v2932
    %v2934 = vpop.f32.mrb[0].mxu0
    %2935 = vdwg.mxu0
    %v2936 = vadd.f32 %v2861, %v2933
    %v2937 = vld [vmem:[#allocation2 + $0x1e] sm:$0xff]
    %v2939 = vsel %vm42, %v2937, 0
    %2941 = vmatprep.subr.mxu0 0.0
    %2942 = vmatpush1.msra.mxu0 %v987
    %2943 = vmatprep.subr.mxu0 0.0
    %2944 = vmatpush1.msra.mxu0 0.0
    %2945 = vmatprep.subr.mxu0 0.0
    %2946 = vmatpush1.msra.mxu0 0.0
    %2947 = vmatprep.subr.mxu0 0.0
    %2948 = vmatpush1.msra.mxu0 0.0
    %2949 = vmatprep.subr.mxu0 0.0
    %2950 = vmatpush1.msra.mxu0 0.0
    %2951 = vmatprep.subr.mxu0 0.0
    %2952 = vmatpush1.msra.mxu0 0.0
    %2953 = vmatprep.subr.mxu0 0.0
    %2954 = vmatpush1.msra.mxu0 0.0
    %2955 = vmatprep.subr.mxu0 0.0
    %2956 = vmatpush1.msra.mxu0 0.0
    %2957 = vmatprep.subr.mxu0 0.0
    %2958 = vmatpush1.msra.mxu0 0.0
    %2959 = vmatprep.subr.mxu0 0.0
    %2960 = vmatpush1.msra.mxu0 0.0
    %2961 = vmatprep.subr.mxu0 0.0
    %2962 = vmatpush1.msra.mxu0 0.0
    %2963 = vmatprep.subr.mxu0 0.0
    %2964 = vmatpush1.msra.mxu0 0.0
    %2965 = vmatprep.subr.mxu0 0.0
    %2966 = vmatpush1.msra.mxu0 0.0
    %2967 = vmatprep.subr.mxu0 0.0
    %2968 = vmatpush1.msra.mxu0 0.0
    %2969 = vmatprep.subr.mxu0 0.0
    %2970 = vmatpush1.msra.mxu0 0.0
    %2971 = vmatprep.subr.mxu0 0.0
    %2972 = vmatpush1.msra.mxu0 0.0
    %2973 = vmatprep.subr.mxu0 0.0
    %2974 = vmatpush1.msra.mxu0 0.0
    %2975 = vmatprep.subr.mxu0 0.0
    %2976 = vmatpush1.msra.mxu0 0.0
    %2977 = vmatprep.subr.mxu0 0.0
    %2978 = vmatpush1.msra.mxu0 0.0
    %2979 = vmatprep.subr.mxu0 0.0
    %2980 = vmatpush1.msra.mxu0 0.0
    %2981 = vmatprep.subr.mxu0 0.0
    %2982 = vmatpush1.msra.mxu0 0.0
    %2983 = vmatprep.subr.mxu0 0.0
    %2984 = vmatpush1.msra.mxu0 0.0
    %2985 = vmatprep.subr.mxu0 0.0
    %2986 = vmatpush1.msra.mxu0 0.0
    %2987 = vmatprep.subr.mxu0 0.0
    %2988 = vmatpush1.msra.mxu0 0.0
    %2989 = vmatprep.subr.mxu0 0.0
    %2990 = vmatpush1.msra.mxu0 0.0
    %2991 = vmatprep.subr.mxu0 0.0
    %2992 = vmatpush1.msra.mxu0 0.0
    %2993 = vmatprep.subr.mxu0 0.0
    %2994 = vmatpush1.msra.mxu0 0.0
    %2995 = vmatprep.subr.mxu0 0.0
    %2996 = vmatpush1.msra.mxu0 0.0
    %2997 = vmatprep.subr.mxu0 0.0
    %2998 = vmatpush1.msra.mxu0 0.0
    %2999 = vmatprep.subr.mxu0 0.0
    %3000 = vmatpush1.msra.mxu0 0.0
    %3001 = vmatprep.subr.mxu0 0.0
    %3002 = vmatpush1.msra.mxu0 0.0
    %3003 = vmatprep.subr.mxu0 0.0
    %3004 = vmatpush1.msra.mxu0 0.0
    %3005 = vmatprep.mubr.f32.mxu0 0.0
    %3006 = vmatmul.mubr.f32.gmra.mrb[0].mxu0 %v2939
    %v3007 = vpop.f32.mrb[0].mxu0
    %v3008 = vadd.f32 0.0, %v3007
    %v3009 = vpop.f32.mrb[0].mxu0
    %3010 = vdwg.mxu0
    %v3011 = vadd.f32 %v2936, %v3008
    %v3012 = vld [vmem:[#allocation2 + $0x50] sm:$0xff]
    %v3014 = vsel %vm42, %v3012, 0
    %3016 = vmatprep.subr.mxu0 0.0
    %3017 = vmatpush1.msra.mxu0 %v1064
    %3018 = vmatprep.subr.mxu0 0.0
    %3019 = vmatpush1.msra.mxu0 0.0
    %3020 = vmatprep.subr.mxu0 0.0
    %3021 = vmatpush1.msra.mxu0 0.0
    %3022 = vmatprep.subr.mxu0 0.0
    %3023 = vmatpush1.msra.mxu0 0.0
    %3024 = vmatprep.subr.mxu0 0.0
    %3025 = vmatpush1.msra.mxu0 0.0
    %3026 = vmatprep.subr.mxu0 0.0
    %3027 = vmatpush1.msra.mxu0 0.0
    %3028 = vmatprep.subr.mxu0 0.0
    %3029 = vmatpush1.msra.mxu0 0.0
    %3030 = vmatprep.subr.mxu0 0.0
    %3031 = vmatpush1.msra.mxu0 0.0
    %3032 = vmatprep.subr.mxu0 0.0
    %3033 = vmatpush1.msra.mxu0 0.0
    %3034 = vmatprep.subr.mxu0 0.0
    %3035 = vmatpush1.msra.mxu0 0.0
    %3036 = vmatprep.subr.mxu0 0.0
    %3037 = vmatpush1.msra.mxu0 0.0
    %3038 = vmatprep.subr.mxu0 0.0
    %3039 = vmatpush1.msra.mxu0 0.0
    %3040 = vmatprep.subr.mxu0 0.0
    %3041 = vmatpush1.msra.mxu0 0.0
    %3042 = vmatprep.subr.mxu0 0.0
    %3043 = vmatpush1.msra.mxu0 0.0
    %3044 = vmatprep.subr.mxu0 0.0
    %3045 = vmatpush1.msra.mxu0 0.0
    %3046 = vmatprep.subr.mxu0 0.0
    %3047 = vmatpush1.msra.mxu0 0.0
    %3048 = vmatprep.subr.mxu0 0.0
    %3049 = vmatpush1.msra.mxu0 0.0
    %3050 = vmatprep.subr.mxu0 0.0
    %3051 = vmatpush1.msra.mxu0 0.0
    %3052 = vmatprep.subr.mxu0 0.0
    %3053 = vmatpush1.msra.mxu0 0.0
    %3054 = vmatprep.subr.mxu0 0.0
    %3055 = vmatpush1.msra.mxu0 0.0
    %3056 = vmatprep.subr.mxu0 0.0
    %3057 = vmatpush1.msra.mxu0 0.0
    %3058 = vmatprep.subr.mxu0 0.0
    %3059 = vmatpush1.msra.mxu0 0.0
    %3060 = vmatprep.subr.mxu0 0.0
    %3061 = vmatpush1.msra.mxu0 0.0
    %3062 = vmatprep.subr.mxu0 0.0
    %3063 = vmatpush1.msra.mxu0 0.0
    %3064 = vmatprep.subr.mxu0 0.0
    %3065 = vmatpush1.msra.mxu0 0.0
    %3066 = vmatprep.subr.mxu0 0.0
    %3067 = vmatpush1.msra.mxu0 0.0
    %3068 = vmatprep.subr.mxu0 0.0
    %3069 = vmatpush1.msra.mxu0 0.0
    %3070 = vmatprep.subr.mxu0 0.0
    %3071 = vmatpush1.msra.mxu0 0.0
    %3072 = vmatprep.subr.mxu0 0.0
    %3073 = vmatpush1.msra.mxu0 0.0
    %3074 = vmatprep.subr.mxu0 0.0
    %3075 = vmatpush1.msra.mxu0 0.0
    %3076 = vmatprep.subr.mxu0 0.0
    %3077 = vmatpush1.msra.mxu0 0.0
    %3078 = vmatprep.subr.mxu0 0.0
    %3079 = vmatpush1.msra.mxu0 0.0
    %3080 = vmatprep.mubr.f32.mxu0 0.0
    %3081 = vmatmul.mubr.f32.gmra.mrb[0].mxu0 %v3014
    %v3082 = vpop.f32.mrb[0].mxu0
    %v3083 = vadd.f32 0.0, %v3082
    %v3084 = vpop.f32.mrb[0].mxu0
    %3085 = vdwg.mxu0
    %v3086 = vadd.f32 %v3011, %v3083
    %v3087 = vld [vmem:[#allocation2 + $0x20] sm:$0xff]
    %v3089 = vsel %vm42, %v3087, 0
    %3091 = vmatprep.subr.mxu0 0.0
    %3092 = vmatpush1.msra.mxu0 %v1141
    %3093 = vmatprep.subr.mxu0 0.0
    %3094 = vmatpush1.msra.mxu0 0.0
    %3095 = vmatprep.subr.mxu0 0.0
    %3096 = vmatpush1.msra.mxu0 0.0
    %3097 = vmatprep.subr.mxu0 0.0
    %3098 = vmatpush1.msra.mxu0 0.0
    %3099 = vmatprep.subr.mxu0 0.0
    %3100 = vmatpush1.msra.mxu0 0.0
    %3101 = vmatprep.subr.mxu0 0.0
    %3102 = vmatpush1.msra.mxu0 0.0
    %3103 = vmatprep.subr.mxu0 0.0
    %3104 = vmatpush1.msra.mxu0 0.0
    %3105 = vmatprep.subr.mxu0 0.0
    %3106 = vmatpush1.msra.mxu0 0.0
    %3107 = vmatprep.subr.mxu0 0.0
    %3108 = vmatpush1.msra.mxu0 0.0
    %3109 = vmatprep.subr.mxu0 0.0
    %3110 = vmatpush1.msra.mxu0 0.0
    %3111 = vmatprep.subr.mxu0 0.0
    %3112 = vmatpush1.msra.mxu0 0.0
    %3113 = vmatprep.subr.mxu0 0.0
    %3114 = vmatpush1.msra.mxu0 0.0
    %3115 = vmatprep.subr.mxu0 0.0
    %3116 = vmatpush1.msra.mxu0 0.0
    %3117 = vmatprep.subr.mxu0 0.0
    %3118 = vmatpush1.msra.mxu0 0.0
    %3119 = vmatprep.subr.mxu0 0.0
    %3120 = vmatpush1.msra.mxu0 0.0
    %3121 = vmatprep.subr.mxu0 0.0
    %3122 = vmatpush1.msra.mxu0 0.0
    %3123 = vmatprep.subr.mxu0 0.0
    %3124 = vmatpush1.msra.mxu0 0.0
    %3125 = vmatprep.subr.mxu0 0.0
    %3126 = vmatpush1.msra.mxu0 0.0
    %3127 = vmatprep.subr.mxu0 0.0
    %3128 = vmatpush1.msra.mxu0 0.0
    %3129 = vmatprep.subr.mxu0 0.0
    %3130 = vmatpush1.msra.mxu0 0.0
    %3131 = vmatprep.subr.mxu0 0.0
    %3132 = vmatpush1.msra.mxu0 0.0
    %3133 = vmatprep.subr.mxu0 0.0
    %3134 = vmatpush1.msra.mxu0 0.0
    %3135 = vmatprep.subr.mxu0 0.0
    %3136 = vmatpush1.msra.mxu0 0.0
    %3137 = vmatprep.subr.mxu0 0.0
    %3138 = vmatpush1.msra.mxu0 0.0
    %3139 = vmatprep.subr.mxu0 0.0
    %3140 = vmatpush1.msra.mxu0 0.0
    %3141 = vmatprep.subr.mxu0 0.0
    %3142 = vmatpush1.msra.mxu0 0.0
    %3143 = vmatprep.subr.mxu0 0.0
    %3144 = vmatpush1.msra.mxu0 0.0
    %3145 = vmatprep.subr.mxu0 0.0
    %3146 = vmatpush1.msra.mxu0 0.0
    %3147 = vmatprep.subr.mxu0 0.0
    %3148 = vmatpush1.msra.mxu0 0.0
    %3149 = vmatprep.subr.mxu0 0.0
    %3150 = vmatpush1.msra.mxu0 0.0
    %3151 = vmatprep.subr.mxu0 0.0
    %3152 = vmatpush1.msra.mxu0 0.0
    %3153 = vmatprep.subr.mxu0 0.0
    %3154 = vmatpush1.msra.mxu0 0.0
    %3155 = vmatprep.mubr.f32.mxu0 0.0
    %3156 = vmatmul.mubr.f32.gmra.mrb[0].mxu0 %v3089
    %v3157 = vpop.f32.mrb[0].mxu0
    %v3158 = vadd.f32 0.0, %v3157
    %v3159 = vpop.f32.mrb[0].mxu0
    %3160 = vdwg.mxu0
    %v3161 = vadd.f32 %v3086, %v3158
    %v3162 = vadd.f32 %v3161, %v1220
    %v3163 = vmax.f32 %v3162, 0.0
    %s3164 = scalar_lea.vmem %s5, 128
    %v3165 = vld [vmem:[%s3164] sm:$0xff]
    %v3166 = vld [vmem:[%s3164 + $0x8] sm:$0xff]
    %v3168 = vsel %vm1231, %v3163, 0
    %3170 = vmatprep.subr.mxu0 0.0
    %3171 = vmatpush1.msra.mxu0 %v3165
    %3172 = vmatprep.subr.mxu0 0.0
    %3173 = vmatpush1.msra.mxu0 %v3166
    %3174 = vmatprep.subr.mxu0 0.0
    %3175 = vmatpush1.msra.mxu0 0.0
    %3176 = vmatprep.subr.mxu0 0.0
    %3177 = vmatpush1.msra.mxu0 0.0
    %3178 = vmatprep.subr.mxu0 0.0
    %3179 = vmatpush1.msra.mxu0 0.0
    %3180 = vmatprep.subr.mxu0 0.0
    %3181 = vmatpush1.msra.mxu0 0.0
    %3182 = vmatprep.subr.mxu0 0.0
    %3183 = vmatpush1.msra.mxu0 0.0
    %3184 = vmatprep.subr.mxu0 0.0
    %3185 = vmatpush1.msra.mxu0 0.0
    %3186 = vmatprep.subr.mxu0 0.0
    %3187 = vmatpush1.msra.mxu0 0.0
    %3188 = vmatprep.subr.mxu0 0.0
    %3189 = vmatpush1.msra.mxu0 0.0
    %3190 = vmatprep.subr.mxu0 0.0
    %3191 = vmatpush1.msra.mxu0 0.0
    %3192 = vmatprep.subr.mxu0 0.0
    %3193 = vmatpush1.msra.mxu0 0.0
    %3194 = vmatprep.subr.mxu0 0.0
    %3195 = vmatpush1.msra.mxu0 0.0
    %3196 = vmatprep.subr.mxu0 0.0
    %3197 = vmatpush1.msra.mxu0 0.0
    %3198 = vmatprep.subr.mxu0 0.0
    %3199 = vmatpush1.msra.mxu0 0.0
    %3200 = vmatprep.subr.mxu0 0.0
    %3201 = vmatpush1.msra.mxu0 0.0
    %3202 = vmatprep.subr.mxu0 0.0
    %3203 = vmatpush1.msra.mxu0 0.0
    %3204 = vmatprep.subr.mxu0 0.0
    %3205 = vmatpush1.msra.mxu0 0.0
    %3206 = vmatprep.subr.mxu0 0.0
    %3207 = vmatpush1.msra.mxu0 0.0
    %3208 = vmatprep.subr.mxu0 0.0
    %3209 = vmatpush1.msra.mxu0 0.0
    %3210 = vmatprep.subr.mxu0 0.0
    %3211 = vmatpush1.msra.mxu0 0.0
    %3212 = vmatprep.subr.mxu0 0.0
    %3213 = vmatpush1.msra.mxu0 0.0
    %3214 = vmatprep.subr.mxu0 0.0
    %3215 = vmatpush1.msra.mxu0 0.0
    %3216 = vmatprep.subr.mxu0 0.0
    %3217 = vmatpush1.msra.mxu0 0.0
    %3218 = vmatprep.subr.mxu0 0.0
    %3219 = vmatpush1.msra.mxu0 0.0
    %3220 = vmatprep.subr.mxu0 0.0
    %3221 = vmatpush1.msra.mxu0 0.0
    %3222 = vmatprep.subr.mxu0 0.0
    %3223 = vmatpush1.msra.mxu0 0.0
    %3224 = vmatprep.subr.mxu0 0.0
    %3225 = vmatpush1.msra.mxu0 0.0
    %3226 = vmatprep.subr.mxu0 0.0
    %3227 = vmatpush1.msra.mxu0 0.0
    %3228 = vmatprep.subr.mxu0 0.0
    %3229 = vmatpush1.msra.mxu0 0.0
    %3230 = vmatprep.subr.mxu0 0.0
    %3231 = vmatpush1.msra.mxu0 0.0
    %3232 = vmatprep.subr.mxu0 0.0
    %3233 = vmatpush1.msra.mxu0 0.0
    %3234 = vmatprep.mubr.f32.mxu0 0.0
    %3235 = vmatmul.mubr.f32.gmra.mrb[0].mxu0 %v3168
    %v3236 = vpop.f32.mrb[0].mxu0
    %v3237 = vadd.f32 0.0, %v3236
    %v3238 = vpop.f32.mrb[0].mxu0
    %3239 = vdwg.mxu0
    %v3240 = vadd.f32 %v2500, %v3237
    %s3241 = scalar_lea.vmem %s5, 144
    %v3242 = vld [vmem:[%s3241] sm:$0xff]
    %v3243 = vld [vmem:[%s3241 + $0x8] sm:$0xff]
    %v3244 = vrot.slane %v3163, 2
    %v3245 = vsel %vm1231, %v3244, 0
    %3247 = vmatprep.subr.mxu0 0.0
    %3248 = vmatpush1.msra.mxu0 %v3242
    %3249 = vmatprep.subr.mxu0 0.0
    %3250 = vmatpush1.msra.mxu0 %v3243
    %3251 = vmatprep.subr.mxu0 0.0
    %3252 = vmatpush1.msra.mxu0 0.0
    %3253 = vmatprep.subr.mxu0 0.0
    %3254 = vmatpush1.msra.mxu0 0.0
    %3255 = vmatprep.subr.mxu0 0.0
    %3256 = vmatpush1.msra.mxu0 0.0
    %3257 = vmatprep.subr.mxu0 0.0
    %3258 = vmatpush1.msra.mxu0 0.0
    %3259 = vmatprep.subr.mxu0 0.0
    %3260 = vmatpush1.msra.mxu0 0.0
    %3261 = vmatprep.subr.mxu0 0.0
    %3262 = vmatpush1.msra.mxu0 0.0
    %3263 = vmatprep.subr.mxu0 0.0
    %3264 = vmatpush1.msra.mxu0 0.0
    %3265 = vmatprep.subr.mxu0 0.0
    %3266 = vmatpush1.msra.mxu0 0.0
    %3267 = vmatprep.subr.mxu0 0.0
    %3268 = vmatpush1.msra.mxu0 0.0
    %3269 = vmatprep.subr.mxu0 0.0
    %3270 = vmatpush1.msra.mxu0 0.0
    %3271 = vmatprep.subr.mxu0 0.0
    %3272 = vmatpush1.msra.mxu0 0.0
    %3273 = vmatprep.subr.mxu0 0.0
    %3274 = vmatpush1.msra.mxu0 0.0
    %3275 = vmatprep.subr.mxu0 0.0
    %3276 = vmatpush1.msra.mxu0 0.0
    %3277 = vmatprep.subr.mxu0 0.0
    %3278 = vmatpush1.msra.mxu0 0.0
    %3279 = vmatprep.subr.mxu0 0.0
    %3280 = vmatpush1.msra.mxu0 0.0
    %3281 = vmatprep.subr.mxu0 0.0
    %3282 = vmatpush1.msra.mxu0 0.0
    %3283 = vmatprep.subr.mxu0 0.0
    %3284 = vmatpush1.msra.mxu0 0.0
    %3285 = vmatprep.subr.mxu0 0.0
    %3286 = vmatpush1.msra.mxu0 0.0
    %3287 = vmatprep.subr.mxu0 0.0
    %3288 = vmatpush1.msra.mxu0 0.0
    %3289 = vmatprep.subr.mxu0 0.0
    %3290 = vmatpush1.msra.mxu0 0.0
    %3291 = vmatprep.subr.mxu0 0.0
    %3292 = vmatpush1.msra.mxu0 0.0
    %3293 = vmatprep.subr.mxu0 0.0
    %3294 = vmatpush1.msra.mxu0 0.0
    %3295 = vmatprep.subr.mxu0 0.0
    %3296 = vmatpush1.msra.mxu0 0.0
    %3297 = vmatprep.subr.mxu0 0.0
    %3298 = vmatpush1.msra.mxu0 0.0
    %3299 = vmatprep.subr.mxu0 0.0
    %3300 = vmatpush1.msra.mxu0 0.0
    %3301 = vmatprep.subr.mxu0 0.0
    %3302 = vmatpush1.msra.mxu0 0.0
    %3303 = vmatprep.subr.mxu0 0.0
    %3304 = vmatpush1.msra.mxu0 0.0
    %3305 = vmatprep.subr.mxu0 0.0
    %3306 = vmatpush1.msra.mxu0 0.0
    %3307 = vmatprep.subr.mxu0 0.0
    %3308 = vmatpush1.msra.mxu0 0.0
    %3309 = vmatprep.subr.mxu0 0.0
    %3310 = vmatpush1.msra.mxu0 0.0
    %3311 = vmatprep.mubr.f32.mxu0 0.0
    %3312 = vmatmul.mubr.f32.gmra.mrb[0].mxu0 %v3245
    %v3313 = vpop.f32.mrb[0].mxu0
    %v3314 = vadd.f32 0.0, %v3313
    %v3315 = vpop.f32.mrb[0].mxu0
    %3316 = vdwg.mxu0
    %v3317 = vadd.f32 %v3240, %v3314
    %s3318 = scalar_lea.vmem %s5, 160
    %v3319 = vld [vmem:[%s3318] sm:$0xff]
    %v3320 = vld [vmem:[%s3318 + $0x8] sm:$0xff]
    %v3321 = vrot.slane %v3163, 4
    %v3322 = vsel %vm1231, %v3321, 0
    %3324 = vmatprep.subr.mxu0 0.0
    %3325 = vmatpush1.msra.mxu0 %v3319
    %3326 = vmatprep.subr.mxu0 0.0
    %3327 = vmatpush1.msra.mxu0 %v3320
    %3328 = vmatprep.subr.mxu0 0.0
    %3329 = vmatpush1.msra.mxu0 0.0
    %3330 = vmatprep.subr.mxu0 0.0
    %3331 = vmatpush1.msra.mxu0 0.0
    %3332 = vmatprep.subr.mxu0 0.0
    %3333 = vmatpush1.msra.mxu0 0.0
    %3334 = vmatprep.subr.mxu0 0.0
    %3335 = vmatpush1.msra.mxu0 0.0
    %3336 = vmatprep.subr.mxu0 0.0
    %3337 = vmatpush1.msra.mxu0 0.0
    %3338 = vmatprep.subr.mxu0 0.0
    %3339 = vmatpush1.msra.mxu0 0.0
    %3340 = vmatprep.subr.mxu0 0.0
    %3341 = vmatpush1.msra.mxu0 0.0
    %3342 = vmatprep.subr.mxu0 0.0
    %3343 = vmatpush1.msra.mxu0 0.0
    %3344 = vmatprep.subr.mxu0 0.0
    %3345 = vmatpush1.msra.mxu0 0.0
    %3346 = vmatprep.subr.mxu0 0.0
    %3347 = vmatpush1.msra.mxu0 0.0
    %3348 = vmatprep.subr.mxu0 0.0
    %3349 = vmatpush1.msra.mxu0 0.0
    %3350 = vmatprep.subr.mxu0 0.0
    %3351 = vmatpush1.msra.mxu0 0.0
    %3352 = vmatprep.subr.mxu0 0.0
    %3353 = vmatpush1.msra.mxu0 0.0
    %3354 = vmatprep.subr.mxu0 0.0
    %3355 = vmatpush1.msra.mxu0 0.0
    %3356 = vmatprep.subr.mxu0 0.0
    %3357 = vmatpush1.msra.mxu0 0.0
    %3358 = vmatprep.subr.mxu0 0.0
    %3359 = vmatpush1.msra.mxu0 0.0
    %3360 = vmatprep.subr.mxu0 0.0
    %3361 = vmatpush1.msra.mxu0 0.0
    %3362 = vmatprep.subr.mxu0 0.0
    %3363 = vmatpush1.msra.mxu0 0.0
    %3364 = vmatprep.subr.mxu0 0.0
    %3365 = vmatpush1.msra.mxu0 0.0
    %3366 = vmatprep.subr.mxu0 0.0
    %3367 = vmatpush1.msra.mxu0 0.0
    %3368 = vmatprep.subr.mxu0 0.0
    %3369 = vmatpush1.msra.mxu0 0.0
    %3370 = vmatprep.subr.mxu0 0.0
    %3371 = vmatpush1.msra.mxu0 0.0
    %3372 = vmatprep.subr.mxu0 0.0
    %3373 = vmatpush1.msra.mxu0 0.0
    %3374 = vmatprep.subr.mxu0 0.0
    %3375 = vmatpush1.msra.mxu0 0.0
    %3376 = vmatprep.subr.mxu0 0.0
    %3377 = vmatpush1.msra.mxu0 0.0
    %3378 = vmatprep.subr.mxu0 0.0
    %3379 = vmatpush1.msra.mxu0 0.0
    %3380 = vmatprep.subr.mxu0 0.0
    %3381 = vmatpush1.msra.mxu0 0.0
    %3382 = vmatprep.subr.mxu0 0.0
    %3383 = vmatpush1.msra.mxu0 0.0
    %3384 = vmatprep.subr.mxu0 0.0
    %3385 = vmatpush1.msra.mxu0 0.0
    %3386 = vmatprep.subr.mxu0 0.0
    %3387 = vmatpush1.msra.mxu0 0.0
    %3388 = vmatprep.mubr.f32.mxu0 0.0
    %3389 = vmatmul.mubr.f32.gmra.mrb[0].mxu0 %v3322
    %v3390 = vpop.f32.mrb[0].mxu0
    %v3391 = vadd.f32 0.0, %v3390
    %v3392 = vpop.f32.mrb[0].mxu0
    %3393 = vdwg.mxu0
    %v3394 = vadd.f32 %v3317, %v3391
    %s3395 = scalar_lea.vmem %s5, 176
    %v3396 = vld [vmem:[%s3395] sm:$0xff]
    %v3397 = vld [vmem:[%s3395 + $0x8] sm:$0xff]
    %v3398 = vrot.slane %v3163, 6
    %v3399 = vsel %vm1231, %v3398, 0
    %3401 = vmatprep.subr.mxu0 0.0
    %3402 = vmatpush1.msra.mxu0 %v3396
    %3403 = vmatprep.subr.mxu0 0.0
    %3404 = vmatpush1.msra.mxu0 %v3397
    %3405 = vmatprep.subr.mxu0 0.0
    %3406 = vmatpush1.msra.mxu0 0.0
    %3407 = vmatprep.subr.mxu0 0.0
    %3408 = vmatpush1.msra.mxu0 0.0
    %3409 = vmatprep.subr.mxu0 0.0
    %3410 = vmatpush1.msra.mxu0 0.0
    %3411 = vmatprep.subr.mxu0 0.0
    %3412 = vmatpush1.msra.mxu0 0.0
    %3413 = vmatprep.subr.mxu0 0.0
    %3414 = vmatpush1.msra.mxu0 0.0
    %3415 = vmatprep.subr.mxu0 0.0
    %3416 = vmatpush1.msra.mxu0 0.0
    %3417 = vmatprep.subr.mxu0 0.0
    %3418 = vmatpush1.msra.mxu0 0.0
    %3419 = vmatprep.subr.mxu0 0.0
    %3420 = vmatpush1.msra.mxu0 0.0
    %3421 = vmatprep.subr.mxu0 0.0
    %3422 = vmatpush1.msra.mxu0 0.0
    %3423 = vmatprep.subr.mxu0 0.0
    %3424 = vmatpush1.msra.mxu0 0.0
    %3425 = vmatprep.subr.mxu0 0.0
    %3426 = vmatpush1.msra.mxu0 0.0
    %3427 = vmatprep.subr.mxu0 0.0
    %3428 = vmatpush1.msra.mxu0 0.0
    %3429 = vmatprep.subr.mxu0 0.0
    %3430 = vmatpush1.msra.mxu0 0.0
    %3431 = vmatprep.subr.mxu0 0.0
    %3432 = vmatpush1.msra.mxu0 0.0
    %3433 = vmatprep.subr.mxu0 0.0
    %3434 = vmatpush1.msra.mxu0 0.0
    %3435 = vmatprep.subr.mxu0 0.0
    %3436 = vmatpush1.msra.mxu0 0.0
    %3437 = vmatprep.subr.mxu0 0.0
    %3438 = vmatpush1.msra.mxu0 0.0
    %3439 = vmatprep.subr.mxu0 0.0
    %3440 = vmatpush1.msra.mxu0 0.0
    %3441 = vmatprep.subr.mxu0 0.0
    %3442 = vmatpush1.msra.mxu0 0.0
    %3443 = vmatprep.subr.mxu0 0.0
    %3444 = vmatpush1.msra.mxu0 0.0
    %3445 = vmatprep.subr.mxu0 0.0
    %3446 = vmatpush1.msra.mxu0 0.0
    %3447 = vmatprep.subr.mxu0 0.0
    %3448 = vmatpush1.msra.mxu0 0.0
    %3449 = vmatprep.subr.mxu0 0.0
    %3450 = vmatpush1.msra.mxu0 0.0
    %3451 = vmatprep.subr.mxu0 0.0
    %3452 = vmatpush1.msra.mxu0 0.0
    %3453 = vmatprep.subr.mxu0 0.0
    %3454 = vmatpush1.msra.mxu0 0.0
    %3455 = vmatprep.subr.mxu0 0.0
    %3456 = vmatpush1.msra.mxu0 0.0
    %3457 = vmatprep.subr.mxu0 0.0
    %3458 = vmatpush1.msra.mxu0 0.0
    %3459 = vmatprep.subr.mxu0 0.0
    %3460 = vmatpush1.msra.mxu0 0.0
    %3461 = vmatprep.subr.mxu0 0.0
    %3462 = vmatpush1.msra.mxu0 0.0
    %3463 = vmatprep.subr.mxu0 0.0
    %3464 = vmatpush1.msra.mxu0 0.0
    %3465 = vmatprep.mubr.f32.mxu0 0.0
    %3466 = vmatmul.mubr.f32.gmra.mrb[0].mxu0 %v3399
    %v3467 = vpop.f32.mrb[0].mxu0
    %v3468 = vadd.f32 0.0, %v3467
    %v3469 = vpop.f32.mrb[0].mxu0
    %3470 = vdwg.mxu0
    %v3471 = vadd.f32 %v3394, %v3468
    %3472 = vmatprep.subr.mxu0 0.0
    %3473 = vmatpush1.msra.mxu0 %v530
    %3474 = vmatprep.subr.mxu0 0.0
    %3475 = vmatpush1.msra.mxu0 0.0
    %3476 = vmatprep.subr.mxu0 0.0
    %3477 = vmatpush1.msra.mxu0 0.0
    %3478 = vmatprep.subr.mxu0 0.0
    %3479 = vmatpush1.msra.mxu0 0.0
    %3480 = vmatprep.subr.mxu0 0.0
    %3481 = vmatpush1.msra.mxu0 0.0
    %3482 = vmatprep.subr.mxu0 0.0
    %3483 = vmatpush1.msra.mxu0 0.0
    %3484 = vmatprep.subr.mxu0 0.0
    %3485 = vmatpush1.msra.mxu0 0.0
    %3486 = vmatprep.subr.mxu0 0.0
    %3487 = vmatpush1.msra.mxu0 0.0
    %3488 = vmatprep.subr.mxu0 0.0
    %3489 = vmatpush1.msra.mxu0 0.0
    %3490 = vmatprep.subr.mxu0 0.0
    %3491 = vmatpush1.msra.mxu0 0.0
    %3492 = vmatprep.subr.mxu0 0.0
    %3493 = vmatpush1.msra.mxu0 0.0
    %3494 = vmatprep.subr.mxu0 0.0
    %3495 = vmatpush1.msra.mxu0 0.0
    %3496 = vmatprep.subr.mxu0 0.0
    %3497 = vmatpush1.msra.mxu0 0.0
    %3498 = vmatprep.subr.mxu0 0.0
    %3499 = vmatpush1.msra.mxu0 0.0
    %3500 = vmatprep.subr.mxu0 0.0
    %3501 = vmatpush1.msra.mxu0 0.0
    %3502 = vmatprep.subr.mxu0 0.0
    %3503 = vmatpush1.msra.mxu0 0.0
    %3504 = vmatprep.subr.mxu0 0.0
    %3505 = vmatpush1.msra.mxu0 0.0
    %3506 = vmatprep.subr.mxu0 0.0
    %3507 = vmatpush1.msra.mxu0 0.0
    %3508 = vmatprep.subr.mxu0 0.0
    %3509 = vmatpush1.msra.mxu0 0.0
    %3510 = vmatprep.subr.mxu0 0.0
    %3511 = vmatpush1.msra.mxu0 0.0
    %3512 = vmatprep.subr.mxu0 0.0
    %3513 = vmatpush1.msra.mxu0 0.0
    %3514 = vmatprep.subr.mxu0 0.0
    %3515 = vmatpush1.msra.mxu0 0.0
    %3516 = vmatprep.subr.mxu0 0.0
    %3517 = vmatpush1.msra.mxu0 0.0
    %3518 = vmatprep.subr.mxu0 0.0
    %3519 = vmatpush1.msra.mxu0 0.0
    %3520 = vmatprep.subr.mxu0 0.0
    %3521 = vmatpush1.msra.mxu0 0.0
    %3522 = vmatprep.subr.mxu0 0.0
    %3523 = vmatpush1.msra.mxu0 0.0
    %3524 = vmatprep.subr.mxu0 0.0
    %3525 = vmatpush1.msra.mxu0 0.0
    %3526 = vmatprep.subr.mxu0 0.0
    %3527 = vmatpush1.msra.mxu0 0.0
    %3528 = vmatprep.subr.mxu0 0.0
    %3529 = vmatpush1.msra.mxu0 0.0
    %3530 = vmatprep.subr.mxu0 0.0
    %3531 = vmatpush1.msra.mxu0 0.0
    %3532 = vmatprep.subr.mxu0 0.0
    %3533 = vmatpush1.msra.mxu0 0.0
    %3534 = vmatprep.subr.mxu0 0.0
    %3535 = vmatpush1.msra.mxu0 0.0
    %3536 = vmatprep.mubr.f32.mxu0 0.0
    %3537 = vmatmul.mubr.f32.gmra.mrb[0].mxu0 %v3014
    %v3538 = vpop.f32.mrb[0].mxu0
    %v3539 = vadd.f32 0.0, %v3538
    %v3540 = vpop.f32.mrb[0].mxu0
    %3541 = vdwg.mxu0
    %3542 = vmatprep.subr.mxu0 0.0
    %3543 = vmatpush1.msra.mxu0 %v527
    %3544 = vmatprep.subr.mxu0 0.0
    %3545 = vmatpush1.msra.mxu0 0.0
    %3546 = vmatprep.subr.mxu0 0.0
    %3547 = vmatpush1.msra.mxu0 0.0
    %3548 = vmatprep.subr.mxu0 0.0
    %3549 = vmatpush1.msra.mxu0 0.0
    %3550 = vmatprep.subr.mxu0 0.0
    %3551 = vmatpush1.msra.mxu0 0.0
    %3552 = vmatprep.subr.mxu0 0.0
    %3553 = vmatpush1.msra.mxu0 0.0
    %3554 = vmatprep.subr.mxu0 0.0
    %3555 = vmatpush1.msra.mxu0 0.0
    %3556 = vmatprep.subr.mxu0 0.0
    %3557 = vmatpush1.msra.mxu0 0.0
    %3558 = vmatprep.subr.mxu0 0.0
    %3559 = vmatpush1.msra.mxu0 0.0
    %3560 = vmatprep.subr.mxu0 0.0
    %3561 = vmatpush1.msra.mxu0 0.0
    %3562 = vmatprep.subr.mxu0 0.0
    %3563 = vmatpush1.msra.mxu0 0.0
    %3564 = vmatprep.subr.mxu0 0.0
    %3565 = vmatpush1.msra.mxu0 0.0
    %3566 = vmatprep.subr.mxu0 0.0
    %3567 = vmatpush1.msra.mxu0 0.0
    %3568 = vmatprep.subr.mxu0 0.0
    %3569 = vmatpush1.msra.mxu0 0.0
    %3570 = vmatprep.subr.mxu0 0.0
    %3571 = vmatpush1.msra.mxu0 0.0
    %3572 = vmatprep.subr.mxu0 0.0
    %3573 = vmatpush1.msra.mxu0 0.0
    %3574 = vmatprep.subr.mxu0 0.0
    %3575 = vmatpush1.msra.mxu0 0.0
    %3576 = vmatprep.subr.mxu0 0.0
    %3577 = vmatpush1.msra.mxu0 0.0
    %3578 = vmatprep.subr.mxu0 0.0
    %3579 = vmatpush1.msra.mxu0 0.0
    %3580 = vmatprep.subr.mxu0 0.0
    %3581 = vmatpush1.msra.mxu0 0.0
    %3582 = vmatprep.subr.mxu0 0.0
    %3583 = vmatpush1.msra.mxu0 0.0
    %3584 = vmatprep.subr.mxu0 0.0
    %3585 = vmatpush1.msra.mxu0 0.0
    %3586 = vmatprep.subr.mxu0 0.0
    %3587 = vmatpush1.msra.mxu0 0.0
    %3588 = vmatprep.subr.mxu0 0.0
    %3589 = vmatpush1.msra.mxu0 0.0
    %3590 = vmatprep.subr.mxu0 0.0
    %3591 = vmatpush1.msra.mxu0 0.0
    %3592 = vmatprep.subr.mxu0 0.0
    %3593 = vmatpush1.msra.mxu0 0.0
    %3594 = vmatprep.subr.mxu0 0.0
    %3595 = vmatpush1.msra.mxu0 0.0
    %3596 = vmatprep.subr.mxu0 0.0
    %3597 = vmatpush1.msra.mxu0 0.0
    %3598 = vmatprep.subr.mxu0 0.0
    %3599 = vmatpush1.msra.mxu0 0.0
    %3600 = vmatprep.subr.mxu0 0.0
    %3601 = vmatpush1.msra.mxu0 0.0
    %3602 = vmatprep.subr.mxu0 0.0
    %3603 = vmatpush1.msra.mxu0 0.0
    %3604 = vmatprep.subr.mxu0 0.0
    %3605 = vmatpush1.msra.mxu0 0.0
    %3606 = vmatprep.mubr.f32.mxu0 0.0
    %3607 = vmatmul.mubr.f32.gmra.mrb[0].mxu0 %v2939
    %v3608 = vpop.f32.mrb[0].mxu0
    %v3609 = vadd.f32 %v3539, %v3608
    %v3610 = vpop.f32.mrb[0].mxu0
    %3611 = vdwg.mxu0
    %3612 = vmatprep.subr.mxu0 0.0
    %3613 = vmatpush1.msra.mxu0 %v679
    %3614 = vmatprep.subr.mxu0 0.0
    %3615 = vmatpush1.msra.mxu0 0.0
    %3616 = vmatprep.subr.mxu0 0.0
    %3617 = vmatpush1.msra.mxu0 0.0
    %3618 = vmatprep.subr.mxu0 0.0
    %3619 = vmatpush1.msra.mxu0 0.0
    %3620 = vmatprep.subr.mxu0 0.0
    %3621 = vmatpush1.msra.mxu0 0.0
    %3622 = vmatprep.subr.mxu0 0.0
    %3623 = vmatpush1.msra.mxu0 0.0
    %3624 = vmatprep.subr.mxu0 0.0
    %3625 = vmatpush1.msra.mxu0 0.0
    %3626 = vmatprep.subr.mxu0 0.0
    %3627 = vmatpush1.msra.mxu0 0.0
    %3628 = vmatprep.subr.mxu0 0.0
    %3629 = vmatpush1.msra.mxu0 0.0
    %3630 = vmatprep.subr.mxu0 0.0
    %3631 = vmatpush1.msra.mxu0 0.0
    %3632 = vmatprep.subr.mxu0 0.0
    %3633 = vmatpush1.msra.mxu0 0.0
    %3634 = vmatprep.subr.mxu0 0.0
    %3635 = vmatpush1.msra.mxu0 0.0
    %3636 = vmatprep.subr.mxu0 0.0
    %3637 = vmatpush1.msra.mxu0 0.0
    %3638 = vmatprep.subr.mxu0 0.0
    %3639 = vmatpush1.msra.mxu0 0.0
    %3640 = vmatprep.subr.mxu0 0.0
    %3641 = vmatpush1.msra.mxu0 0.0
    %3642 = vmatprep.subr.mxu0 0.0
    %3643 = vmatpush1.msra.mxu0 0.0
    %3644 = vmatprep.subr.mxu0 0.0
    %3645 = vmatpush1.msra.mxu0 0.0
    %3646 = vmatprep.subr.mxu0 0.0
    %3647 = vmatpush1.msra.mxu0 0.0
    %3648 = vmatprep.subr.mxu0 0.0
    %3649 = vmatpush1.msra.mxu0 0.0
    %3650 = vmatprep.subr.mxu0 0.0
    %3651 = vmatpush1.msra.mxu0 0.0
    %3652 = vmatprep.subr.mxu0 0.0
    %3653 = vmatpush1.msra.mxu0 0.0
    %3654 = vmatprep.subr.mxu0 0.0
    %3655 = vmatpush1.msra.mxu0 0.0
    %3656 = vmatprep.subr.mxu0 0.0
    %3657 = vmatpush1.msra.mxu0 0.0
    %3658 = vmatprep.subr.mxu0 0.0
    %3659 = vmatpush1.msra.mxu0 0.0
    %3660 = vmatprep.subr.mxu0 0.0
    %3661 = vmatpush1.msra.mxu0 0.0
    %3662 = vmatprep.subr.mxu0 0.0
    %3663 = vmatpush1.msra.mxu0 0.0
    %3664 = vmatprep.subr.mxu0 0.0
    %3665 = vmatpush1.msra.mxu0 0.0
    %3666 = vmatprep.subr.mxu0 0.0
    %3667 = vmatpush1.msra.mxu0 0.0
    %3668 = vmatprep.subr.mxu0 0.0
    %3669 = vmatpush1.msra.mxu0 0.0
    %3670 = vmatprep.subr.mxu0 0.0
    %3671 = vmatpush1.msra.mxu0 0.0
    %3672 = vmatprep.subr.mxu0 0.0
    %3673 = vmatpush1.msra.mxu0 0.0
    %3674 = vmatprep.subr.mxu0 0.0
    %3675 = vmatpush1.msra.mxu0 0.0
    %3676 = vmatprep.mubr.f32.mxu0 0.0
    %3677 = vmatmul.mubr.f32.gmra.mrb[0].mxu0 %v3089
    %v3678 = vpop.f32.mrb[0].mxu0
    %v3679 = vadd.f32 0.0, %v3678
    %v3680 = vpop.f32.mrb[0].mxu0
    %3681 = vdwg.mxu0
    %v3682 = vadd.f32 %v3609, %v3679
    %v3683 = vld [vmem:[#allocation2 + $0x82] sm:$0xff]
    %v3685 = vsel %vm42, %v3683, 0
    %3687 = vmatprep.subr.mxu0 0.0
    %3688 = vmatpush1.msra.mxu0 %v756
    %3689 = vmatprep.subr.mxu0 0.0
    %3690 = vmatpush1.msra.mxu0 0.0
    %3691 = vmatprep.subr.mxu0 0.0
    %3692 = vmatpush1.msra.mxu0 0.0
    %3693 = vmatprep.subr.mxu0 0.0
    %3694 = vmatpush1.msra.mxu0 0.0
    %3695 = vmatprep.subr.mxu0 0.0
    %3696 = vmatpush1.msra.mxu0 0.0
    %3697 = vmatprep.subr.mxu0 0.0
    %3698 = vmatpush1.msra.mxu0 0.0
    %3699 = vmatprep.subr.mxu0 0.0
    %3700 = vmatpush1.msra.mxu0 0.0
    %3701 = vmatprep.subr.mxu0 0.0
    %3702 = vmatpush1.msra.mxu0 0.0
    %3703 = vmatprep.subr.mxu0 0.0
    %3704 = vmatpush1.msra.mxu0 0.0
    %3705 = vmatprep.subr.mxu0 0.0
    %3706 = vmatpush1.msra.mxu0 0.0
    %3707 = vmatprep.subr.mxu0 0.0
    %3708 = vmatpush1.msra.mxu0 0.0
    %3709 = vmatprep.subr.mxu0 0.0
    %3710 = vmatpush1.msra.mxu0 0.0
    %3711 = vmatprep.subr.mxu0 0.0
    %3712 = vmatpush1.msra.mxu0 0.0
    %3713 = vmatprep.subr.mxu0 0.0
    %3714 = vmatpush1.msra.mxu0 0.0
    %3715 = vmatprep.subr.mxu0 0.0
    %3716 = vmatpush1.msra.mxu0 0.0
    %3717 = vmatprep.subr.mxu0 0.0
    %3718 = vmatpush1.msra.mxu0 0.0
    %3719 = vmatprep.subr.mxu0 0.0
    %3720 = vmatpush1.msra.mxu0 0.0
    %3721 = vmatprep.subr.mxu0 0.0
    %3722 = vmatpush1.msra.mxu0 0.0
    %3723 = vmatprep.subr.mxu0 0.0
    %3724 = vmatpush1.msra.mxu0 0.0
    %3725 = vmatprep.subr.mxu0 0.0
    %3726 = vmatpush1.msra.mxu0 0.0
    %3727 = vmatprep.subr.mxu0 0.0
    %3728 = vmatpush1.msra.mxu0 0.0
    %3729 = vmatprep.subr.mxu0 0.0
    %3730 = vmatpush1.msra.mxu0 0.0
    %3731 = vmatprep.subr.mxu0 0.0
    %3732 = vmatpush1.msra.mxu0 0.0
    %3733 = vmatprep.subr.mxu0 0.0
    %3734 = vmatpush1.msra.mxu0 0.0
    %3735 = vmatprep.subr.mxu0 0.0
    %3736 = vmatpush1.msra.mxu0 0.0
    %3737 = vmatprep.subr.mxu0 0.0
    %3738 = vmatpush1.msra.mxu0 0.0
    %3739 = vmatprep.subr.mxu0 0.0
    %3740 = vmatpush1.msra.mxu0 0.0
    %3741 = vmatprep.subr.mxu0 0.0
    %3742 = vmatpush1.msra.mxu0 0.0
    %3743 = vmatprep.subr.mxu0 0.0
    %3744 = vmatpush1.msra.mxu0 0.0
    %3745 = vmatprep.subr.mxu0 0.0
    %3746 = vmatpush1.msra.mxu0 0.0
    %3747 = vmatprep.subr.mxu0 0.0
    %3748 = vmatpush1.msra.mxu0 0.0
    %3749 = vmatprep.subr.mxu0 0.0
    %3750 = vmatpush1.msra.mxu0 0.0
    %3751 = vmatprep.mubr.f32.mxu0 0.0
    %3752 = vmatmul.mubr.f32.gmra.mrb[0].mxu0 %v3685
    %v3753 = vpop.f32.mrb[0].mxu0
    %v3754 = vadd.f32 0.0, %v3753
    %v3755 = vpop.f32.mrb[0].mxu0
    %3756 = vdwg.mxu0
    %v3757 = vadd.f32 %v3682, %v3754
    %v3758 = vld [vmem:[#allocation2 + $0xb4] sm:$0xff]
    %v3760 = vsel %vm42, %v3758, 0
    %3762 = vmatprep.subr.mxu0 0.0
    %3763 = vmatpush1.msra.mxu0 %v833
    %3764 = vmatprep.subr.mxu0 0.0
    %3765 = vmatpush1.msra.mxu0 0.0
    %3766 = vmatprep.subr.mxu0 0.0
    %3767 = vmatpush1.msra.mxu0 0.0
    %3768 = vmatprep.subr.mxu0 0.0
    %3769 = vmatpush1.msra.mxu0 0.0
    %3770 = vmatprep.subr.mxu0 0.0
    %3771 = vmatpush1.msra.mxu0 0.0
    %3772 = vmatprep.subr.mxu0 0.0
    %3773 = vmatpush1.msra.mxu0 0.0
    %3774 = vmatprep.subr.mxu0 0.0
    %3775 = vmatpush1.msra.mxu0 0.0
    %3776 = vmatprep.subr.mxu0 0.0
    %3777 = vmatpush1.msra.mxu0 0.0
    %3778 = vmatprep.subr.mxu0 0.0
    %3779 = vmatpush1.msra.mxu0 0.0
    %3780 = vmatprep.subr.mxu0 0.0
    %3781 = vmatpush1.msra.mxu0 0.0
    %3782 = vmatprep.subr.mxu0 0.0
    %3783 = vmatpush1.msra.mxu0 0.0
    %3784 = vmatprep.subr.mxu0 0.0
    %3785 = vmatpush1.msra.mxu0 0.0
    %3786 = vmatprep.subr.mxu0 0.0
    %3787 = vmatpush1.msra.mxu0 0.0
    %3788 = vmatprep.subr.mxu0 0.0
    %3789 = vmatpush1.msra.mxu0 0.0
    %3790 = vmatprep.subr.mxu0 0.0
    %3791 = vmatpush1.msra.mxu0 0.0
    %3792 = vmatprep.subr.mxu0 0.0
    %3793 = vmatpush1.msra.mxu0 0.0
    %3794 = vmatprep.subr.mxu0 0.0
    %3795 = vmatpush1.msra.mxu0 0.0
    %3796 = vmatprep.subr.mxu0 0.0
    %3797 = vmatpush1.msra.mxu0 0.0
    %3798 = vmatprep.subr.mxu0 0.0
    %3799 = vmatpush1.msra.mxu0 0.0
    %3800 = vmatprep.subr.mxu0 0.0
    %3801 = vmatpush1.msra.mxu0 0.0
    %3802 = vmatprep.subr.mxu0 0.0
    %3803 = vmatpush1.msra.mxu0 0.0
    %3804 = vmatprep.subr.mxu0 0.0
    %3805 = vmatpush1.msra.mxu0 0.0
    %3806 = vmatprep.subr.mxu0 0.0
    %3807 = vmatpush1.msra.mxu0 0.0
    %3808 = vmatprep.subr.mxu0 0.0
    %3809 = vmatpush1.msra.mxu0 0.0
    %3810 = vmatprep.subr.mxu0 0.0
    %3811 = vmatpush1.msra.mxu0 0.0
    %3812 = vmatprep.subr.mxu0 0.0
    %3813 = vmatpush1.msra.mxu0 0.0
    %3814 = vmatprep.subr.mxu0 0.0
    %3815 = vmatpush1.msra.mxu0 0.0
    %3816 = vmatprep.subr.mxu0 0.0
    %3817 = vmatpush1.msra.mxu0 0.0
    %3818 = vmatprep.subr.mxu0 0.0
    %3819 = vmatpush1.msra.mxu0 0.0
    %3820 = vmatprep.subr.mxu0 0.0
    %3821 = vmatpush1.msra.mxu0 0.0
    %3822 = vmatprep.subr.mxu0 0.0
    %3823 = vmatpush1.msra.mxu0 0.0
    %3824 = vmatprep.subr.mxu0 0.0
    %3825 = vmatpush1.msra.mxu0 0.0
    %3826 = vmatprep.mubr.f32.mxu0 0.0
    %3827 = vmatmul.mubr.f32.gmra.mrb[0].mxu0 %v3760
    %v3828 = vpop.f32.mrb[0].mxu0
    %v3829 = vadd.f32 0.0, %v3828
    %v3830 = vpop.f32.mrb[0].mxu0
    %3831 = vdwg.mxu0
    %v3832 = vadd.f32 %v3757, %v3829
    %v3833 = vld [vmem:[#allocation2 + $0x84] sm:$0xff]
    %v3835 = vsel %vm42, %v3833, 0
    %3837 = vmatprep.subr.mxu0 0.0
    %3838 = vmatpush1.msra.mxu0 %v910
    %3839 = vmatprep.subr.mxu0 0.0
    %3840 = vmatpush1.msra.mxu0 0.0
    %3841 = vmatprep.subr.mxu0 0.0
    %3842 = vmatpush1.msra.mxu0 0.0
    %3843 = vmatprep.subr.mxu0 0.0
    %3844 = vmatpush1.msra.mxu0 0.0
    %3845 = vmatprep.subr.mxu0 0.0
    %3846 = vmatpush1.msra.mxu0 0.0
    %3847 = vmatprep.subr.mxu0 0.0
    %3848 = vmatpush1.msra.mxu0 0.0
    %3849 = vmatprep.subr.mxu0 0.0
    %3850 = vmatpush1.msra.mxu0 0.0
    %3851 = vmatprep.subr.mxu0 0.0
    %3852 = vmatpush1.msra.mxu0 0.0
    %3853 = vmatprep.subr.mxu0 0.0
    %3854 = vmatpush1.msra.mxu0 0.0
    %3855 = vmatprep.subr.mxu0 0.0
    %3856 = vmatpush1.msra.mxu0 0.0
    %3857 = vmatprep.subr.mxu0 0.0
    %3858 = vmatpush1.msra.mxu0 0.0
    %3859 = vmatprep.subr.mxu0 0.0
    %3860 = vmatpush1.msra.mxu0 0.0
    %3861 = vmatprep.subr.mxu0 0.0
    %3862 = vmatpush1.msra.mxu0 0.0
    %3863 = vmatprep.subr.mxu0 0.0
    %3864 = vmatpush1.msra.mxu0 0.0
    %3865 = vmatprep.subr.mxu0 0.0
    %3866 = vmatpush1.msra.mxu0 0.0
    %3867 = vmatprep.subr.mxu0 0.0
    %3868 = vmatpush1.msra.mxu0 0.0
    %3869 = vmatprep.subr.mxu0 0.0
    %3870 = vmatpush1.msra.mxu0 0.0
    %3871 = vmatprep.subr.mxu0 0.0
    %3872 = vmatpush1.msra.mxu0 0.0
    %3873 = vmatprep.subr.mxu0 0.0
    %3874 = vmatpush1.msra.mxu0 0.0
    %3875 = vmatprep.subr.mxu0 0.0
    %3876 = vmatpush1.msra.mxu0 0.0
    %3877 = vmatprep.subr.mxu0 0.0
    %3878 = vmatpush1.msra.mxu0 0.0
    %3879 = vmatprep.subr.mxu0 0.0
    %3880 = vmatpush1.msra.mxu0 0.0
    %3881 = vmatprep.subr.mxu0 0.0
    %3882 = vmatpush1.msra.mxu0 0.0
    %3883 = vmatprep.subr.mxu0 0.0
    %3884 = vmatpush1.msra.mxu0 0.0
    %3885 = vmatprep.subr.mxu0 0.0
    %3886 = vmatpush1.msra.mxu0 0.0
    %3887 = vmatprep.subr.mxu0 0.0
    %3888 = vmatpush1.msra.mxu0 0.0
    %3889 = vmatprep.subr.mxu0 0.0
    %3890 = vmatpush1.msra.mxu0 0.0
    %3891 = vmatprep.subr.mxu0 0.0
    %3892 = vmatpush1.msra.mxu0 0.0
    %3893 = vmatprep.subr.mxu0 0.0
    %3894 = vmatpush1.msra.mxu0 0.0
    %3895 = vmatprep.subr.mxu0 0.0
    %3896 = vmatpush1.msra.mxu0 0.0
    %3897 = vmatprep.subr.mxu0 0.0
    %3898 = vmatpush1.msra.mxu0 0.0
    %3899 = vmatprep.subr.mxu0 0.0
    %3900 = vmatpush1.msra.mxu0 0.0
    %3901 = vmatprep.mubr.f32.mxu0 0.0
    %3902 = vmatmul.mubr.f32.gmra.mrb[0].mxu0 %v3835
    %v3903 = vpop.f32.mrb[0].mxu0
    %v3904 = vadd.f32 0.0, %v3903
    %v3905 = vpop.f32.mrb[0].mxu0
    %3906 = vdwg.mxu0
    %v3907 = vadd.f32 %v3832, %v3904
    %v3908 = vld [vmem:[#allocation2 + $0x28] sm:$0xff]
    %v3910 = vsel %vm42, %v3908, 0
    %3912 = vmatprep.subr.mxu0 0.0
    %3913 = vmatpush1.msra.mxu0 %v987
    %3914 = vmatprep.subr.mxu0 0.0
    %3915 = vmatpush1.msra.mxu0 0.0
    %3916 = vmatprep.subr.mxu0 0.0
    %3917 = vmatpush1.msra.mxu0 0.0
    %3918 = vmatprep.subr.mxu0 0.0
    %3919 = vmatpush1.msra.mxu0 0.0
    %3920 = vmatprep.subr.mxu0 0.0
    %3921 = vmatpush1.msra.mxu0 0.0
    %3922 = vmatprep.subr.mxu0 0.0
    %3923 = vmatpush1.msra.mxu0 0.0
    %3924 = vmatprep.subr.mxu0 0.0
    %3925 = vmatpush1.msra.mxu0 0.0
    %3926 = vmatprep.subr.mxu0 0.0
    %3927 = vmatpush1.msra.mxu0 0.0
    %3928 = vmatprep.subr.mxu0 0.0
    %3929 = vmatpush1.msra.mxu0 0.0
    %3930 = vmatprep.subr.mxu0 0.0
    %3931 = vmatpush1.msra.mxu0 0.0
    %3932 = vmatprep.subr.mxu0 0.0
    %3933 = vmatpush1.msra.mxu0 0.0
    %3934 = vmatprep.subr.mxu0 0.0
    %3935 = vmatpush1.msra.mxu0 0.0
    %3936 = vmatprep.subr.mxu0 0.0
    %3937 = vmatpush1.msra.mxu0 0.0
    %3938 = vmatprep.subr.mxu0 0.0
    %3939 = vmatpush1.msra.mxu0 0.0
    %3940 = vmatprep.subr.mxu0 0.0
    %3941 = vmatpush1.msra.mxu0 0.0
    %3942 = vmatprep.subr.mxu0 0.0
    %3943 = vmatpush1.msra.mxu0 0.0
    %3944 = vmatprep.subr.mxu0 0.0
    %3945 = vmatpush1.msra.mxu0 0.0
    %3946 = vmatprep.subr.mxu0 0.0
    %3947 = vmatpush1.msra.mxu0 0.0
    %3948 = vmatprep.subr.mxu0 0.0
    %3949 = vmatpush1.msra.mxu0 0.0
    %3950 = vmatprep.subr.mxu0 0.0
    %3951 = vmatpush1.msra.mxu0 0.0
    %3952 = vmatprep.subr.mxu0 0.0
    %3953 = vmatpush1.msra.mxu0 0.0
    %3954 = vmatprep.subr.mxu0 0.0
    %3955 = vmatpush1.msra.mxu0 0.0
    %3956 = vmatprep.subr.mxu0 0.0
    %3957 = vmatpush1.msra.mxu0 0.0
    %3958 = vmatprep.subr.mxu0 0.0
    %3959 = vmatpush1.msra.mxu0 0.0
    %3960 = vmatprep.subr.mxu0 0.0
    %3961 = vmatpush1.msra.mxu0 0.0
    %3962 = vmatprep.subr.mxu0 0.0
    %3963 = vmatpush1.msra.mxu0 0.0
    %3964 = vmatprep.subr.mxu0 0.0
    %3965 = vmatpush1.msra.mxu0 0.0
    %3966 = vmatprep.subr.mxu0 0.0
    %3967 = vmatpush1.msra.mxu0 0.0
    %3968 = vmatprep.subr.mxu0 0.0
    %3969 = vmatpush1.msra.mxu0 0.0
    %3970 = vmatprep.subr.mxu0 0.0
    %3971 = vmatpush1.msra.mxu0 0.0
    %3972 = vmatprep.subr.mxu0 0.0
    %3973 = vmatpush1.msra.mxu0 0.0
    %3974 = vmatprep.subr.mxu0 0.0
    %3975 = vmatpush1.msra.mxu0 0.0
    %3976 = vmatprep.mubr.f32.mxu0 0.0
    %3977 = vmatmul.mubr.f32.gmra.mrb[0].mxu0 %v3910
    %v3978 = vpop.f32.mrb[0].mxu0
    %v3979 = vadd.f32 0.0, %v3978
    %v3980 = vpop.f32.mrb[0].mxu0
    %3981 = vdwg.mxu0
    %v3982 = vadd.f32 %v3907, %v3979
    %v3983 = vld [vmem:[#allocation2 + $0x5a] sm:$0xff]
    %v3985 = vsel %vm42, %v3983, 0
    %3987 = vmatprep.subr.mxu0 0.0
    %3988 = vmatpush1.msra.mxu0 %v1064
    %3989 = vmatprep.subr.mxu0 0.0
    %3990 = vmatpush1.msra.mxu0 0.0
    %3991 = vmatprep.subr.mxu0 0.0
    %3992 = vmatpush1.msra.mxu0 0.0
    %3993 = vmatprep.subr.mxu0 0.0
    %3994 = vmatpush1.msra.mxu0 0.0
    %3995 = vmatprep.subr.mxu0 0.0
    %3996 = vmatpush1.msra.mxu0 0.0
    %3997 = vmatprep.subr.mxu0 0.0
    %3998 = vmatpush1.msra.mxu0 0.0
    %3999 = vmatprep.subr.mxu0 0.0
    %4000 = vmatpush1.msra.mxu0 0.0
    %4001 = vmatprep.subr.mxu0 0.0
    %4002 = vmatpush1.msra.mxu0 0.0
    %4003 = vmatprep.subr.mxu0 0.0
    %4004 = vmatpush1.msra.mxu0 0.0
    %4005 = vmatprep.subr.mxu0 0.0
    %4006 = vmatpush1.msra.mxu0 0.0
    %4007 = vmatprep.subr.mxu0 0.0
    %4008 = vmatpush1.msra.mxu0 0.0
    %4009 = vmatprep.subr.mxu0 0.0
    %4010 = vmatpush1.msra.mxu0 0.0
    %4011 = vmatprep.subr.mxu0 0.0
    %4012 = vmatpush1.msra.mxu0 0.0
    %4013 = vmatprep.subr.mxu0 0.0
    %4014 = vmatpush1.msra.mxu0 0.0
    %4015 = vmatprep.subr.mxu0 0.0
    %4016 = vmatpush1.msra.mxu0 0.0
    %4017 = vmatprep.subr.mxu0 0.0
    %4018 = vmatpush1.msra.mxu0 0.0
    %4019 = vmatprep.subr.mxu0 0.0
    %4020 = vmatpush1.msra.mxu0 0.0
    %4021 = vmatprep.subr.mxu0 0.0
    %4022 = vmatpush1.msra.mxu0 0.0
    %4023 = vmatprep.subr.mxu0 0.0
    %4024 = vmatpush1.msra.mxu0 0.0
    %4025 = vmatprep.subr.mxu0 0.0
    %4026 = vmatpush1.msra.mxu0 0.0
    %4027 = vmatprep.subr.mxu0 0.0
    %4028 = vmatpush1.msra.mxu0 0.0
    %4029 = vmatprep.subr.mxu0 0.0
    %4030 = vmatpush1.msra.mxu0 0.0
    %4031 = vmatprep.subr.mxu0 0.0
    %4032 = vmatpush1.msra.mxu0 0.0
    %4033 = vmatprep.subr.mxu0 0.0
    %4034 = vmatpush1.msra.mxu0 0.0
    %4035 = vmatprep.subr.mxu0 0.0
    %4036 = vmatpush1.msra.mxu0 0.0
    %4037 = vmatprep.subr.mxu0 0.0
    %4038 = vmatpush1.msra.mxu0 0.0
    %4039 = vmatprep.subr.mxu0 0.0
    %4040 = vmatpush1.msra.mxu0 0.0
    %4041 = vmatprep.subr.mxu0 0.0
    %4042 = vmatpush1.msra.mxu0 0.0
    %4043 = vmatprep.subr.mxu0 0.0
    %4044 = vmatpush1.msra.mxu0 0.0
    %4045 = vmatprep.subr.mxu0 0.0
    %4046 = vmatpush1.msra.mxu0 0.0
    %4047 = vmatprep.subr.mxu0 0.0
    %4048 = vmatpush1.msra.mxu0 0.0
    %4049 = vmatprep.subr.mxu0 0.0
    %4050 = vmatpush1.msra.mxu0 0.0
    %4051 = vmatprep.mubr.f32.mxu0 0.0
    %4052 = vmatmul.mubr.f32.gmra.mrb[0].mxu0 %v3985
    %v4053 = vpop.f32.mrb[0].mxu0
    %v4054 = vadd.f32 0.0, %v4053
    %v4055 = vpop.f32.mrb[0].mxu0
    %4056 = vdwg.mxu0
    %v4057 = vadd.f32 %v3982, %v4054
    %v4058 = vld [vmem:[#allocation2 + $0x2a] sm:$0xff]
    %v4060 = vsel %vm42, %v4058, 0
    %4062 = vmatprep.subr.mxu0 0.0
    %4063 = vmatpush1.msra.mxu0 %v1141
    %4064 = vmatprep.subr.mxu0 0.0
    %4065 = vmatpush1.msra.mxu0 0.0
    %4066 = vmatprep.subr.mxu0 0.0
    %4067 = vmatpush1.msra.mxu0 0.0
    %4068 = vmatprep.subr.mxu0 0.0
    %4069 = vmatpush1.msra.mxu0 0.0
    %4070 = vmatprep.subr.mxu0 0.0
    %4071 = vmatpush1.msra.mxu0 0.0
    %4072 = vmatprep.subr.mxu0 0.0
    %4073 = vmatpush1.msra.mxu0 0.0
    %4074 = vmatprep.subr.mxu0 0.0
    %4075 = vmatpush1.msra.mxu0 0.0
    %4076 = vmatprep.subr.mxu0 0.0
    %4077 = vmatpush1.msra.mxu0 0.0
    %4078 = vmatprep.subr.mxu0 0.0
    %4079 = vmatpush1.msra.mxu0 0.0
    %4080 = vmatprep.subr.mxu0 0.0
    %4081 = vmatpush1.msra.mxu0 0.0
    %4082 = vmatprep.subr.mxu0 0.0
    %4083 = vmatpush1.msra.mxu0 0.0
    %4084 = vmatprep.subr.mxu0 0.0
    %4085 = vmatpush1.msra.mxu0 0.0
    %4086 = vmatprep.subr.mxu0 0.0
    %4087 = vmatpush1.msra.mxu0 0.0
    %4088 = vmatprep.subr.mxu0 0.0
    %4089 = vmatpush1.msra.mxu0 0.0
    %4090 = vmatprep.subr.mxu0 0.0
    %4091 = vmatpush1.msra.mxu0 0.0
    %4092 = vmatprep.subr.mxu0 0.0
    %4093 = vmatpush1.msra.mxu0 0.0
    %4094 = vmatprep.subr.mxu0 0.0
    %4095 = vmatpush1.msra.mxu0 0.0
    %4096 = vmatprep.subr.mxu0 0.0
    %4097 = vmatpush1.msra.mxu0 0.0
    %4098 = vmatprep.subr.mxu0 0.0
    %4099 = vmatpush1.msra.mxu0 0.0
    %4100 = vmatprep.subr.mxu0 0.0
    %4101 = vmatpush1.msra.mxu0 0.0
    %4102 = vmatprep.subr.mxu0 0.0
    %4103 = vmatpush1.msra.mxu0 0.0
    %4104 = vmatprep.subr.mxu0 0.0
    %4105 = vmatpush1.msra.mxu0 0.0
    %4106 = vmatprep.subr.mxu0 0.0
    %4107 = vmatpush1.msra.mxu0 0.0
    %4108 = vmatprep.subr.mxu0 0.0
    %4109 = vmatpush1.msra.mxu0 0.0
    %4110 = vmatprep.subr.mxu0 0.0
    %4111 = vmatpush1.msra.mxu0 0.0
    %4112 = vmatprep.subr.mxu0 0.0
    %4113 = vmatpush1.msra.mxu0 0.0
    %4114 = vmatprep.subr.mxu0 0.0
    %4115 = vmatpush1.msra.mxu0 0.0
    %4116 = vmatprep.subr.mxu0 0.0
    %4117 = vmatpush1.msra.mxu0 0.0
    %4118 = vmatprep.subr.mxu0 0.0
    %4119 = vmatpush1.msra.mxu0 0.0
    %4120 = vmatprep.subr.mxu0 0.0
    %4121 = vmatpush1.msra.mxu0 0.0
    %4122 = vmatprep.subr.mxu0 0.0
    %4123 = vmatpush1.msra.mxu0 0.0
    %4124 = vmatprep.subr.mxu0 0.0
    %4125 = vmatpush1.msra.mxu0 0.0
    %4126 = vmatprep.mubr.f32.mxu0 0.0
    %4127 = vmatmul.mubr.f32.gmra.mrb[0].mxu0 %v4060
    %v4128 = vpop.f32.mrb[0].mxu0
    %v4129 = vadd.f32 0.0, %v4128
    %v4130 = vpop.f32.mrb[0].mxu0
    %4131 = vdwg.mxu0
    %v4132 = vadd.f32 %v4057, %v4129
    %v4133 = vadd.f32 %v4132, %v1220
    %v4134 = vmax.f32 %v4133, 0.0
    %s4135 = scalar_lea.vmem %s5, 192
    %v4136 = vld [vmem:[%s4135] sm:$0xff]
    %v4137 = vld [vmem:[%s4135 + $0x8] sm:$0xff]
    %v4139 = vsel %vm1231, %v4134, 0
    %4141 = vmatprep.subr.mxu0 0.0
    %4142 = vmatpush1.msra.mxu0 %v4136
    %4143 = vmatprep.subr.mxu0 0.0
    %4144 = vmatpush1.msra.mxu0 %v4137
    %4145 = vmatprep.subr.mxu0 0.0
    %4146 = vmatpush1.msra.mxu0 0.0
    %4147 = vmatprep.subr.mxu0 0.0
    %4148 = vmatpush1.msra.mxu0 0.0
    %4149 = vmatprep.subr.mxu0 0.0
    %4150 = vmatpush1.msra.mxu0 0.0
    %4151 = vmatprep.subr.mxu0 0.0
    %4152 = vmatpush1.msra.mxu0 0.0
    %4153 = vmatprep.subr.mxu0 0.0
    %4154 = vmatpush1.msra.mxu0 0.0
    %4155 = vmatprep.subr.mxu0 0.0
    %4156 = vmatpush1.msra.mxu0 0.0
    %4157 = vmatprep.subr.mxu0 0.0
    %4158 = vmatpush1.msra.mxu0 0.0
    %4159 = vmatprep.subr.mxu0 0.0
    %4160 = vmatpush1.msra.mxu0 0.0
    %4161 = vmatprep.subr.mxu0 0.0
    %4162 = vmatpush1.msra.mxu0 0.0
    %4163 = vmatprep.subr.mxu0 0.0
    %4164 = vmatpush1.msra.mxu0 0.0
    %4165 = vmatprep.subr.mxu0 0.0
    %4166 = vmatpush1.msra.mxu0 0.0
    %4167 = vmatprep.subr.mxu0 0.0
    %4168 = vmatpush1.msra.mxu0 0.0
    %4169 = vmatprep.subr.mxu0 0.0
    %4170 = vmatpush1.msra.mxu0 0.0
    %4171 = vmatprep.subr.mxu0 0.0
    %4172 = vmatpush1.msra.mxu0 0.0
    %4173 = vmatprep.subr.mxu0 0.0
    %4174 = vmatpush1.msra.mxu0 0.0
    %4175 = vmatprep.subr.mxu0 0.0
    %4176 = vmatpush1.msra.mxu0 0.0
    %4177 = vmatprep.subr.mxu0 0.0
    %4178 = vmatpush1.msra.mxu0 0.0
    %4179 = vmatprep.subr.mxu0 0.0
    %4180 = vmatpush1.msra.mxu0 0.0
    %4181 = vmatprep.subr.mxu0 0.0
    %4182 = vmatpush1.msra.mxu0 0.0
    %4183 = vmatprep.subr.mxu0 0.0
    %4184 = vmatpush1.msra.mxu0 0.0
    %4185 = vmatprep.subr.mxu0 0.0
    %4186 = vmatpush1.msra.mxu0 0.0
    %4187 = vmatprep.subr.mxu0 0.0
    %4188 = vmatpush1.msra.mxu0 0.0
    %4189 = vmatprep.subr.mxu0 0.0
    %4190 = vmatpush1.msra.mxu0 0.0
    %4191 = vmatprep.subr.mxu0 0.0
    %4192 = vmatpush1.msra.mxu0 0.0
    %4193 = vmatprep.subr.mxu0 0.0
    %4194 = vmatpush1.msra.mxu0 0.0
    %4195 = vmatprep.subr.mxu0 0.0
    %4196 = vmatpush1.msra.mxu0 0.0
    %4197 = vmatprep.subr.mxu0 0.0
    %4198 = vmatpush1.msra.mxu0 0.0
    %4199 = vmatprep.subr.mxu0 0.0
    %4200 = vmatpush1.msra.mxu0 0.0
    %4201 = vmatprep.subr.mxu0 0.0
    %4202 = vmatpush1.msra.mxu0 0.0
    %4203 = vmatprep.subr.mxu0 0.0
    %4204 = vmatpush1.msra.mxu0 0.0
    %4205 = vmatprep.mubr.f32.mxu0 0.0
    %4206 = vmatmul.mubr.f32.gmra.mrb[0].mxu0 %v4139
    %v4207 = vpop.f32.mrb[0].mxu0
    %v4208 = vadd.f32 0.0, %v4207
    %v4209 = vpop.f32.mrb[0].mxu0
    %4210 = vdwg.mxu0
    %v4211 = vadd.f32 %v3471, %v4208
    %s4212 = scalar_lea.vmem %s5, 208
    %v4213 = vld [vmem:[%s4212] sm:$0xff]
    %v4214 = vld [vmem:[%s4212 + $0x8] sm:$0xff]
    %v4215 = vrot.slane %v4134, 2
    %v4216 = vsel %vm1231, %v4215, 0
    %4218 = vmatprep.subr.mxu0 0.0
    %4219 = vmatpush1.msra.mxu0 %v4213
    %4220 = vmatprep.subr.mxu0 0.0
    %4221 = vmatpush1.msra.mxu0 %v4214
    %4222 = vmatprep.subr.mxu0 0.0
    %4223 = vmatpush1.msra.mxu0 0.0
    %4224 = vmatprep.subr.mxu0 0.0
    %4225 = vmatpush1.msra.mxu0 0.0
    %4226 = vmatprep.subr.mxu0 0.0
    %4227 = vmatpush1.msra.mxu0 0.0
    %4228 = vmatprep.subr.mxu0 0.0
    %4229 = vmatpush1.msra.mxu0 0.0
    %4230 = vmatprep.subr.mxu0 0.0
    %4231 = vmatpush1.msra.mxu0 0.0
    %4232 = vmatprep.subr.mxu0 0.0
    %4233 = vmatpush1.msra.mxu0 0.0
    %4234 = vmatprep.subr.mxu0 0.0
    %4235 = vmatpush1.msra.mxu0 0.0
    %4236 = vmatprep.subr.mxu0 0.0
    %4237 = vmatpush1.msra.mxu0 0.0
    %4238 = vmatprep.subr.mxu0 0.0
    %4239 = vmatpush1.msra.mxu0 0.0
    %4240 = vmatprep.subr.mxu0 0.0
    %4241 = vmatpush1.msra.mxu0 0.0
    %4242 = vmatprep.subr.mxu0 0.0
    %4243 = vmatpush1.msra.mxu0 0.0
    %4244 = vmatprep.subr.mxu0 0.0
    %4245 = vmatpush1.msra.mxu0 0.0
    %4246 = vmatprep.subr.mxu0 0.0
    %4247 = vmatpush1.msra.mxu0 0.0
    %4248 = vmatprep.subr.mxu0 0.0
    %4249 = vmatpush1.msra.mxu0 0.0
    %4250 = vmatprep.subr.mxu0 0.0
    %4251 = vmatpush1.msra.mxu0 0.0
    %4252 = vmatprep.subr.mxu0 0.0
    %4253 = vmatpush1.msra.mxu0 0.0
    %4254 = vmatprep.subr.mxu0 0.0
    %4255 = vmatpush1.msra.mxu0 0.0
    %4256 = vmatprep.subr.mxu0 0.0
    %4257 = vmatpush1.msra.mxu0 0.0
    %4258 = vmatprep.subr.mxu0 0.0
    %4259 = vmatpush1.msra.mxu0 0.0
    %4260 = vmatprep.subr.mxu0 0.0
    %4261 = vmatpush1.msra.mxu0 0.0
    %4262 = vmatprep.subr.mxu0 0.0
    %4263 = vmatpush1.msra.mxu0 0.0
    %4264 = vmatprep.subr.mxu0 0.0
    %4265 = vmatpush1.msra.mxu0 0.0
    %4266 = vmatprep.subr.mxu0 0.0
    %4267 = vmatpush1.msra.mxu0 0.0
    %4268 = vmatprep.subr.mxu0 0.0
    %4269 = vmatpush1.msra.mxu0 0.0
    %4270 = vmatprep.subr.mxu0 0.0
    %4271 = vmatpush1.msra.mxu0 0.0
    %4272 = vmatprep.subr.mxu0 0.0
    %4273 = vmatpush1.msra.mxu0 0.0
    %4274 = vmatprep.subr.mxu0 0.0
    %4275 = vmatpush1.msra.mxu0 0.0
    %4276 = vmatprep.subr.mxu0 0.0
    %4277 = vmatpush1.msra.mxu0 0.0
    %4278 = vmatprep.subr.mxu0 0.0
    %4279 = vmatpush1.msra.mxu0 0.0
    %4280 = vmatprep.subr.mxu0 0.0
    %4281 = vmatpush1.msra.mxu0 0.0
    %4282 = vmatprep.mubr.f32.mxu0 0.0
    %4283 = vmatmul.mubr.f32.gmra.mrb[0].mxu0 %v4216
    %v4284 = vpop.f32.mrb[0].mxu0
    %v4285 = vadd.f32 0.0, %v4284
    %v4286 = vpop.f32.mrb[0].mxu0
    %4287 = vdwg.mxu0
    %v4288 = vadd.f32 %v4211, %v4285
    %s4289 = scalar_lea.vmem %s5, 224
    %v4290 = vld [vmem:[%s4289] sm:$0xff]
    %v4291 = vld [vmem:[%s4289 + $0x8] sm:$0xff]
    %v4292 = vrot.slane %v4134, 4
    %v4293 = vsel %vm1231, %v4292, 0
    %4295 = vmatprep.subr.mxu0 0.0
    %4296 = vmatpush1.msra.mxu0 %v4290
    %4297 = vmatprep.subr.mxu0 0.0
    %4298 = vmatpush1.msra.mxu0 %v4291
    %4299 = vmatprep.subr.mxu0 0.0
    %4300 = vmatpush1.msra.mxu0 0.0
    %4301 = vmatprep.subr.mxu0 0.0
    %4302 = vmatpush1.msra.mxu0 0.0
    %4303 = vmatprep.subr.mxu0 0.0
    %4304 = vmatpush1.msra.mxu0 0.0
    %4305 = vmatprep.subr.mxu0 0.0
    %4306 = vmatpush1.msra.mxu0 0.0
    %4307 = vmatprep.subr.mxu0 0.0
    %4308 = vmatpush1.msra.mxu0 0.0
    %4309 = vmatprep.subr.mxu0 0.0
    %4310 = vmatpush1.msra.mxu0 0.0
    %4311 = vmatprep.subr.mxu0 0.0
    %4312 = vmatpush1.msra.mxu0 0.0
    %4313 = vmatprep.subr.mxu0 0.0
    %4314 = vmatpush1.msra.mxu0 0.0
    %4315 = vmatprep.subr.mxu0 0.0
    %4316 = vmatpush1.msra.mxu0 0.0
    %4317 = vmatprep.subr.mxu0 0.0
    %4318 = vmatpush1.msra.mxu0 0.0
    %4319 = vmatprep.subr.mxu0 0.0
    %4320 = vmatpush1.msra.mxu0 0.0
    %4321 = vmatprep.subr.mxu0 0.0
    %4322 = vmatpush1.msra.mxu0 0.0
    %4323 = vmatprep.subr.mxu0 0.0
    %4324 = vmatpush1.msra.mxu0 0.0
    %4325 = vmatprep.subr.mxu0 0.0
    %4326 = vmatpush1.msra.mxu0 0.0
    %4327 = vmatprep.subr.mxu0 0.0
    %4328 = vmatpush1.msra.mxu0 0.0
    %4329 = vmatprep.subr.mxu0 0.0
    %4330 = vmatpush1.msra.mxu0 0.0
    %4331 = vmatprep.subr.mxu0 0.0
    %4332 = vmatpush1.msra.mxu0 0.0
    %4333 = vmatprep.subr.mxu0 0.0
    %4334 = vmatpush1.msra.mxu0 0.0
    %4335 = vmatprep.subr.mxu0 0.0
    %4336 = vmatpush1.msra.mxu0 0.0
    %4337 = vmatprep.subr.mxu0 0.0
    %4338 = vmatpush1.msra.mxu0 0.0
    %4339 = vmatprep.subr.mxu0 0.0
    %4340 = vmatpush1.msra.mxu0 0.0
    %4341 = vmatprep.subr.mxu0 0.0
    %4342 = vmatpush1.msra.mxu0 0.0
    %4343 = vmatprep.subr.mxu0 0.0
    %4344 = vmatpush1.msra.mxu0 0.0
    %4345 = vmatprep.subr.mxu0 0.0
    %4346 = vmatpush1.msra.mxu0 0.0
    %4347 = vmatprep.subr.mxu0 0.0
    %4348 = vmatpush1.msra.mxu0 0.0
    %4349 = vmatprep.subr.mxu0 0.0
    %4350 = vmatpush1.msra.mxu0 0.0
    %4351 = vmatprep.subr.mxu0 0.0
    %4352 = vmatpush1.msra.mxu0 0.0
    %4353 = vmatprep.subr.mxu0 0.0
    %4354 = vmatpush1.msra.mxu0 0.0
    %4355 = vmatprep.subr.mxu0 0.0
    %4356 = vmatpush1.msra.mxu0 0.0
    %4357 = vmatprep.subr.mxu0 0.0
    %4358 = vmatpush1.msra.mxu0 0.0
    %4359 = vmatprep.mubr.f32.mxu0 0.0
    %4360 = vmatmul.mubr.f32.gmra.mrb[0].mxu0 %v4293
    %v4361 = vpop.f32.mrb[0].mxu0
    %v4362 = vadd.f32 0.0, %v4361
    %v4363 = vpop.f32.mrb[0].mxu0
    %4364 = vdwg.mxu0
    %v4365 = vadd.f32 %v4288, %v4362
    %s4366 = scalar_lea.vmem %s5, 240
    %v4367 = vld [vmem:[%s4366] sm:$0xff]
    %v4368 = vld [vmem:[%s4366 + $0x8] sm:$0xff]
    %v4369 = vrot.slane %v4134, 6
    %v4370 = vsel %vm1231, %v4369, 0
    %4372 = vmatprep.subr.mxu0 0.0
    %4373 = vmatpush1.msra.mxu0 %v4367
    %4374 = vmatprep.subr.mxu0 0.0
    %4375 = vmatpush1.msra.mxu0 %v4368
    %4376 = vmatprep.subr.mxu0 0.0
    %4377 = vmatpush1.msra.mxu0 0.0
    %4378 = vmatprep.subr.mxu0 0.0
    %4379 = vmatpush1.msra.mxu0 0.0
    %4380 = vmatprep.subr.mxu0 0.0
    %4381 = vmatpush1.msra.mxu0 0.0
    %4382 = vmatprep.subr.mxu0 0.0
    %4383 = vmatpush1.msra.mxu0 0.0
    %4384 = vmatprep.subr.mxu0 0.0
    %4385 = vmatpush1.msra.mxu0 0.0
    %4386 = vmatprep.subr.mxu0 0.0
    %4387 = vmatpush1.msra.mxu0 0.0
    %4388 = vmatprep.subr.mxu0 0.0
    %4389 = vmatpush1.msra.mxu0 0.0
    %4390 = vmatprep.subr.mxu0 0.0
    %4391 = vmatpush1.msra.mxu0 0.0
    %4392 = vmatprep.subr.mxu0 0.0
    %4393 = vmatpush1.msra.mxu0 0.0
    %4394 = vmatprep.subr.mxu0 0.0
    %4395 = vmatpush1.msra.mxu0 0.0
    %4396 = vmatprep.subr.mxu0 0.0
    %4397 = vmatpush1.msra.mxu0 0.0
    %4398 = vmatprep.subr.mxu0 0.0
    %4399 = vmatpush1.msra.mxu0 0.0
    %4400 = vmatprep.subr.mxu0 0.0
    %4401 = vmatpush1.msra.mxu0 0.0
    %4402 = vmatprep.subr.mxu0 0.0
    %4403 = vmatpush1.msra.mxu0 0.0
    %4404 = vmatprep.subr.mxu0 0.0
    %4405 = vmatpush1.msra.mxu0 0.0
    %4406 = vmatprep.subr.mxu0 0.0
    %4407 = vmatpush1.msra.mxu0 0.0
    %4408 = vmatprep.subr.mxu0 0.0
    %4409 = vmatpush1.msra.mxu0 0.0
    %4410 = vmatprep.subr.mxu0 0.0
    %4411 = vmatpush1.msra.mxu0 0.0
    %4412 = vmatprep.subr.mxu0 0.0
    %4413 = vmatpush1.msra.mxu0 0.0
    %4414 = vmatprep.subr.mxu0 0.0
    %4415 = vmatpush1.msra.mxu0 0.0
    %4416 = vmatprep.subr.mxu0 0.0
    %4417 = vmatpush1.msra.mxu0 0.0
    %4418 = vmatprep.subr.mxu0 0.0
    %4419 = vmatpush1.msra.mxu0 0.0
    %4420 = vmatprep.subr.mxu0 0.0
    %4421 = vmatpush1.msra.mxu0 0.0
    %4422 = vmatprep.subr.mxu0 0.0
    %4423 = vmatpush1.msra.mxu0 0.0
    %4424 = vmatprep.subr.mxu0 0.0
    %4425 = vmatpush1.msra.mxu0 0.0
    %4426 = vmatprep.subr.mxu0 0.0
    %4427 = vmatpush1.msra.mxu0 0.0
    %4428 = vmatprep.subr.mxu0 0.0
    %4429 = vmatpush1.msra.mxu0 0.0
    %4430 = vmatprep.subr.mxu0 0.0
    %4431 = vmatpush1.msra.mxu0 0.0
    %4432 = vmatprep.subr.mxu0 0.0
    %4433 = vmatpush1.msra.mxu0 0.0
    %4434 = vmatprep.subr.mxu0 0.0
    %4435 = vmatpush1.msra.mxu0 0.0
    %4436 = vmatprep.mubr.f32.mxu0 0.0
    %4437 = vmatmul.mubr.f32.gmra.mrb[0].mxu0 %v4370
    %v4438 = vpop.f32.mrb[0].mxu0
    %v4439 = vadd.f32 0.0, %v4438
    %v4440 = vpop.f32.mrb[0].mxu0
    %4441 = vdwg.mxu0
    %v4442 = vadd.f32 %v4365, %v4439
    %v4444 = vlaneseq
    %v4445 = vshrl.u32 %v4444, 7
    %v4446 = vsub.s32 0, %v4445
    %v4447 = vrot.slane %v525, %v4446
    %v4449 = vadd.f32 %v4442, %v4447
    %v4450 = vmax.f32 %v4449, 0.0
    %v4451 = vld [vmem:[%s7] sm:$0xff]
    %v4452 = vld [vmem:[%s7 + $0x8] sm:$0xff]
    %v4453 = vld [vmem:[%s7 + $0x10] sm:$0xff]
    %v4454 = vld [vmem:[%s7 + $0x18] sm:$0xff]
    %v4455 = vld [vmem:[%s8] sm:$0x1]
    %v4457 = vlaneseq
    %v4458 = vshrl.u32 %v4457, 7
    %v4459 = vsub.s32 0, %v4458
    %v4460 = vrot.slane %v4455, %v4459
    %vm4462 = vcmask 261120
    %v4464 = vsel %vm4462, %v4450, 0
    %4466 = vmatprep.subr.mxu0 0.0
    %4467 = vmatpush1.msra.mxu0 %v4451
    %4468 = vmatprep.subr.mxu0 0.0
    %4469 = vmatpush1.msra.mxu0 %v4452
    %4470 = vmatprep.subr.mxu0 0.0
    %4471 = vmatpush1.msra.mxu0 %v4453
    %4472 = vmatprep.subr.mxu0 0.0
    %4473 = vmatpush1.msra.mxu0 %v4454
    %4474 = vmatprep.subr.mxu0 0.0
    %4475 = vmatpush1.msra.mxu0 0.0
    %4476 = vmatprep.subr.mxu0 0.0
    %4477 = vmatpush1.msra.mxu0 0.0
    %4478 = vmatprep.subr.mxu0 0.0
    %4479 = vmatpush1.msra.mxu0 0.0
    %4480 = vmatprep.subr.mxu0 0.0
    %4481 = vmatpush1.msra.mxu0 0.0
    %4482 = vmatprep.subr.mxu0 0.0
    %4483 = vmatpush1.msra.mxu0 0.0
    %4484 = vmatprep.subr.mxu0 0.0
    %4485 = vmatpush1.msra.mxu0 0.0
    %4486 = vmatprep.subr.mxu0 0.0
    %4487 = vmatpush1.msra.mxu0 0.0
    %4488 = vmatprep.subr.mxu0 0.0
    %4489 = vmatpush1.msra.mxu0 0.0
    %4490 = vmatprep.subr.mxu0 0.0
    %4491 = vmatpush1.msra.mxu0 0.0
    %4492 = vmatprep.subr.mxu0 0.0
    %4493 = vmatpush1.msra.mxu0 0.0
    %4494 = vmatprep.subr.mxu0 0.0
    %4495 = vmatpush1.msra.mxu0 0.0
    %4496 = vmatprep.subr.mxu0 0.0
    %4497 = vmatpush1.msra.mxu0 0.0
    %4498 = vmatprep.subr.mxu0 0.0
    %4499 = vmatpush1.msra.mxu0 0.0
    %4500 = vmatprep.subr.mxu0 0.0
    %4501 = vmatpush1.msra.mxu0 0.0
    %4502 = vmatprep.subr.mxu0 0.0
    %4503 = vmatpush1.msra.mxu0 0.0
    %4504 = vmatprep.subr.mxu0 0.0
    %4505 = vmatpush1.msra.mxu0 0.0
    %4506 = vmatprep.subr.mxu0 0.0
    %4507 = vmatpush1.msra.mxu0 0.0
    %4508 = vmatprep.subr.mxu0 0.0
    %4509 = vmatpush1.msra.mxu0 0.0
    %4510 = vmatprep.subr.mxu0 0.0
    %4511 = vmatpush1.msra.mxu0 0.0
    %4512 = vmatprep.subr.mxu0 0.0
    %4513 = vmatpush1.msra.mxu0 0.0
    %4514 = vmatprep.subr.mxu0 0.0
    %4515 = vmatpush1.msra.mxu0 0.0
    %4516 = vmatprep.subr.mxu0 0.0
    %4517 = vmatpush1.msra.mxu0 0.0
    %4518 = vmatprep.subr.mxu0 0.0
    %4519 = vmatpush1.msra.mxu0 0.0
    %4520 = vmatprep.subr.mxu0 0.0
    %4521 = vmatpush1.msra.mxu0 0.0
    %4522 = vmatprep.subr.mxu0 0.0
    %4523 = vmatpush1.msra.mxu0 0.0
    %4524 = vmatprep.subr.mxu0 0.0
    %4525 = vmatpush1.msra.mxu0 0.0
    %4526 = vmatprep.subr.mxu0 0.0
    %4527 = vmatpush1.msra.mxu0 0.0
    %4528 = vmatprep.subr.mxu0 0.0
    %4529 = vmatpush1.msra.mxu0 0.0
    %4530 = vmatprep.mubr.f32.mxu0 0.0
    %4531 = vmatmul.mubr.f32.gmra.mrb[0].mxu0 %v4464
    %v4532 = vpop.f32.mrb[0].mxu0
    %v4533 = vadd.f32 %v4460, %v4532
    %v4534 = vpop.f32.mrb[0].mxu0
    %4535 = vdwg.mxu0
    %v4536 = vld [vmem:[%s9] sm:$0xff]
    %v4537 = vld [vmem:[%s9 + $0x8] sm:$0xff]
    %v4538 = vld [vmem:[%s9 + $0x10] sm:$0xff]
    %v4539 = vld [vmem:[%s9 + $0x18] sm:$0xff]
    %v4540 = vld [vmem:[%s10] sm:$0x1]
    %v4542 = vlaneseq
    %v4543 = vshrl.u32 %v4542, 7
    %v4544 = vsub.s32 0, %v4543
    %v4545 = vrot.slane %v4540, %v4544
    %4547 = vmatprep.subr.mxu0 0.0
    %4548 = vmatpush1.msra.mxu0 %v4536
    %4549 = vmatprep.subr.mxu0 0.0
    %4550 = vmatpush1.msra.mxu0 %v4537
    %4551 = vmatprep.subr.mxu0 0.0
    %4552 = vmatpush1.msra.mxu0 %v4538
    %4553 = vmatprep.subr.mxu0 0.0
    %4554 = vmatpush1.msra.mxu0 %v4539
    %4555 = vmatprep.subr.mxu0 0.0
    %4556 = vmatpush1.msra.mxu0 0.0
    %4557 = vmatprep.subr.mxu0 0.0
    %4558 = vmatpush1.msra.mxu0 0.0
    %4559 = vmatprep.subr.mxu0 0.0
    %4560 = vmatpush1.msra.mxu0 0.0
    %4561 = vmatprep.subr.mxu0 0.0
    %4562 = vmatpush1.msra.mxu0 0.0
    %4563 = vmatprep.subr.mxu0 0.0
    %4564 = vmatpush1.msra.mxu0 0.0
    %4565 = vmatprep.subr.mxu0 0.0
    %4566 = vmatpush1.msra.mxu0 0.0
    %4567 = vmatprep.subr.mxu0 0.0
    %4568 = vmatpush1.msra.mxu0 0.0
    %4569 = vmatprep.subr.mxu0 0.0
    %4570 = vmatpush1.msra.mxu0 0.0
    %4571 = vmatprep.subr.mxu0 0.0
    %4572 = vmatpush1.msra.mxu0 0.0
    %4573 = vmatprep.subr.mxu0 0.0
    %4574 = vmatpush1.msra.mxu0 0.0
    %4575 = vmatprep.subr.mxu0 0.0
    %4576 = vmatpush1.msra.mxu0 0.0
    %4577 = vmatprep.subr.mxu0 0.0
    %4578 = vmatpush1.msra.mxu0 0.0
    %4579 = vmatprep.subr.mxu0 0.0
    %4580 = vmatpush1.msra.mxu0 0.0
    %4581 = vmatprep.subr.mxu0 0.0
    %4582 = vmatpush1.msra.mxu0 0.0
    %4583 = vmatprep.subr.mxu0 0.0
    %4584 = vmatpush1.msra.mxu0 0.0
    %4585 = vmatprep.subr.mxu0 0.0
    %4586 = vmatpush1.msra.mxu0 0.0
    %4587 = vmatprep.subr.mxu0 0.0
    %4588 = vmatpush1.msra.mxu0 0.0
    %4589 = vmatprep.subr.mxu0 0.0
    %4590 = vmatpush1.msra.mxu0 0.0
    %4591 = vmatprep.subr.mxu0 0.0
    %4592 = vmatpush1.msra.mxu0 0.0
    %4593 = vmatprep.subr.mxu0 0.0
    %4594 = vmatpush1.msra.mxu0 0.0
    %4595 = vmatprep.subr.mxu0 0.0
    %4596 = vmatpush1.msra.mxu0 0.0
    %4597 = vmatprep.subr.mxu0 0.0
    %4598 = vmatpush1.msra.mxu0 0.0
    %4599 = vmatprep.subr.mxu0 0.0
    %4600 = vmatpush1.msra.mxu0 0.0
    %4601 = vmatprep.subr.mxu0 0.0
    %4602 = vmatpush1.msra.mxu0 0.0
    %4603 = vmatprep.subr.mxu0 0.0
    %4604 = vmatpush1.msra.mxu0 0.0
    %4605 = vmatprep.subr.mxu0 0.0
    %4606 = vmatpush1.msra.mxu0 0.0
    %4607 = vmatprep.subr.mxu0 0.0
    %4608 = vmatpush1.msra.mxu0 0.0
    %4609 = vmatprep.subr.mxu0 0.0
    %4610 = vmatpush1.msra.mxu0 0.0
    %4611 = vmatprep.mubr.f32.mxu0 0.0
    %4612 = vmatmul.mubr.f32.gmra.mrb[0].mxu0 %v4464
    %v4613 = vpop.f32.mrb[0].mxu0
    %v4614 = vadd.f32 %v4545, %v4613
    %v4615 = vpop.f32.mrb[0].mxu0
    %4616 = vdwg.mxu0
    %v4617 = vmax.f32 %v4614, -20.0
    %v4618 = vmin.f32 %v4617, 2.0
    %v4619 = vmul.f32 %v4618, 1.442695
    %v4620 = vpow.pop %v4619
    %v4621 = vld [vmem:[%s11] sm:$0x3]
    %v4622 = vmul.f32 %v4620, %v4621
    %v4623 = vadd.f32 %v4533, %v4622
    %v4624 = vtanh.pop %v4623
    %v4625 = vmul.f32 %v4624, 2.0
    %vm4626 = vcmask 41984
    %4627 = vst.msk [vmem:[#allocation3] sm:$0x3] %vm4626, %v4625
    // Predicated region
    $region50: #{gaussian_actor_forward.1} parent=1 // pred_check
      _
    $region51: #{gaussian_actor_forward.1} parent=1 // pred_check_branch
      %4629 = sbr.rel (0) target = $region53
    $region52: #{gaussian_actor_forward.1} parent=1 // pred_region
      %s4631 = ssub.s32 32, 32
      %4632 = vsyncadd [#allocation4], %s4631
      %s4634 = sshll.u32 [#allocation3], 4
      %s4635 = int_to_ptr.vmem [resolvable:$true] %s4634
      %4637 = dma.vmem_to_hbm [thread:$0]  %s4635, 32, %s12, [#allocation4]
    $region53: #{gaussian_actor_forward.1} parent=1 // pred_fallthru
      _
    // Predicated region
    $region54: #{gaussian_actor_forward.1} parent=1 // pred_check
      _
    $region55: #{gaussian_actor_forward.1} parent=1 // pred_check_branch
      %4639 = sbr.rel (0) target = $region57
    $region56: #{gaussian_actor_forward.1} parent=1 // pred_region
      %4640 = dma.done [#allocation4], 32
    $region57: #{gaussian_actor_forward.1} parent=1 // pred_fallthru
      _
    %4641 = vsyncpa [#allocation4], 1

</llo_original>
